<compile_context>
chip_gen: v5e
topology: v5e:2x2
jax: 0.10.0
libtpu: 0.0.40
codegen_flags: <defaults>
</compile_context>

<pallas_src>
import jax
import jax.numpy as jnp
from jax.experimental import pallas as pl
from jax.experimental.pallas import tpu as pltpu


LATENT_DIM = 128
IN_DIM = 784          # 1 * 28 * 28
IN_DIM_PAD = 896      # 7 * 128, lane-dense padding of 784


def _leaky_relu(v, slope=0.2):
    return jnp.where(v > 0, v, slope * v)


def _batchnorm_train(v, gamma, beta, eps=1e-5):
    # Training-mode BatchNorm1d: biased batch statistics over the batch axis.
    # Affine folded into one scale/shift FMA.
    mean = jnp.mean(v, axis=0, keepdims=True)
    var = jnp.mean((v - mean) ** 2, axis=0, keepdims=True)
    scale = gamma * jax.lax.rsqrt(var + eps)
    shift = beta - mean * scale
    return v * scale + shift


def vae_kernel(
    x_ref, eps_ref,
    # encoder (weights bf16, biases f32)
    ew1_ref, eb1_ref, ew2_ref, eb2_ref,
    wml_ref, bml_ref,            # fused [256, 2*latent] mu||logvar projection
    # decoder
    dw1_ref, db1_ref, g1_ref, bt1_ref,
    dw2_ref, db2_ref, g2_ref, bt2_ref,
    dw3_ref, db3_ref,
    # outputs
    xrec_ref, mu_ref, logvar_ref,
):
    f32 = jnp.float32
    bf16 = jnp.bfloat16
    x = x_ref[...]                                   # (B, 896) f32, zero-padded

    # ---- encoder: Linear(784->512) + LeakyReLU, Linear(512->256) + LeakyReLU ----
    h = jnp.dot(x.astype(bf16), ew1_ref[...], preferred_element_type=f32) + eb1_ref[...]
    h = _leaky_relu(h)
    h = jnp.dot(h.astype(bf16), ew2_ref[...], preferred_element_type=f32) + eb2_ref[...]
    h = _leaky_relu(h)

    # ---- fused mu / logvar projection: one (256 -> 2*latent) matmul ----
    ml = jnp.dot(h.astype(bf16), wml_ref[...], preferred_element_type=f32) + bml_ref[...]
    latent = mu_ref.shape[1]
    mu = ml[:, :latent]
    logvar = ml[:, latent:]
    mu_ref[...] = mu
    logvar_ref[...] = logvar

    # ---- reparameterize: z = mu + eps * exp(0.5 * logvar) ----
    z = mu + eps_ref[...] * jnp.exp(0.5 * logvar)

    # ---- decoder: Linear + BN + LeakyReLU, Linear + BN + LeakyReLU, Linear + Sigmoid ----
    d = jnp.dot(z.astype(bf16), dw1_ref[...], preferred_element_type=f32) + db1_ref[...]
    d = _leaky_relu(_batchnorm_train(d, g1_ref[...], bt1_ref[...]))
    d = jnp.dot(d.astype(bf16), dw2_ref[...], preferred_element_type=f32) + db2_ref[...]
    d = _leaky_relu(_batchnorm_train(d, g2_ref[...], bt2_ref[...]))
    d = jnp.dot(d.astype(bf16), dw3_ref[...], preferred_element_type=f32) + db3_ref[...]
    xrec_ref[...] = jax.nn.sigmoid(d)                # (B, 896), lane-dense store


def init_params(key, latent_dim=LATENT_DIM):
    """PyTorch-style uniform(-1/sqrt(fan_in), 1/sqrt(fan_in)) init, deterministic."""
    dims = [
        ("ew1", IN_DIM, 512), ("ew2", 512, 256),
        ("wmu", 256, latent_dim), ("wlv", 256, latent_dim),
        ("dw1", latent_dim, 256), ("dw2", 256, 512), ("dw3", 512, IN_DIM),
    ]
    params = {}
    for name, fan_in, fan_out in dims:
        key, kw, kb = jax.random.split(key, 3)
        bound = 1.0 / (fan_in ** 0.5)
        # weights stored already transposed: [in, out]
        params[name] = jax.random.uniform(kw, (fan_in, fan_out), jnp.float32, -bound, bound)
        params[name.replace("w", "b", 1)] = jax.random.uniform(
            kb, (1, fan_out), jnp.float32, -bound, bound)
    # BatchNorm affine params (gamma=1, beta=0 at init)
    params["g1"] = jnp.ones((1, 256), jnp.float32)
    params["bt1"] = jnp.zeros((1, 256), jnp.float32)
    params["g2"] = jnp.ones((1, 512), jnp.float32)
    params["bt2"] = jnp.zeros((1, 512), jnp.float32)
    return params


def prepare_params(params):
    """One-time weight prep: pad to lane-dense dims, cast to bf16, fuse mu/logvar.

    Run this ONCE (outside the hot path); the jitted forward consumes the result
    directly so no per-call pad/cast/concat traffic is incurred.
    """
    bf16 = jnp.bfloat16
    prep = {
        "ew1": jnp.pad(params["ew1"], ((0, IN_DIM_PAD - IN_DIM), (0, 0))).astype(bf16),
        "eb1": params["eb1"],
        "ew2": params["ew2"].astype(bf16),
        "eb2": params["eb2"],
        "wml": jnp.concatenate([params["wmu"], params["wlv"]], axis=1).astype(bf16),
        "bml": jnp.concatenate([params["bmu"], params["blv"]], axis=1),
        "dw1": params["dw1"].astype(bf16),
        "db1": params["db1"],
        "g1": params["g1"], "bt1": params["bt1"],
        "dw2": params["dw2"].astype(bf16),
        "db2": params["db2"],
        "g2": params["g2"], "bt2": params["bt2"],
        "dw3": jnp.pad(params["dw3"], ((0, 0), (0, IN_DIM_PAD - IN_DIM))).astype(bf16),
        "db3": jnp.pad(params["db3"], ((0, 0), (0, IN_DIM_PAD - IN_DIM))),
    }
    return jax.tree_util.tree_map(jax.device_put, prep)


def _cost_estimate(B, latent):
    # 2*M*K*N flops over the five (fused: six logical) matmuls.
    mm = (IN_DIM_PAD * 512 + 512 * 256 + 256 * (2 * latent)
          + latent * 256 + 256 * 512 + 512 * IN_DIM_PAD)
    flops = 2 * B * mm
    # exp(0.5*logvar), sigmoid exp, BN rsqrt (rough).
    transcendentals = B * (latent + IN_DIM_PAD) + 256 + 512
    # bf16 weights + f32 biases/BN params + activations in/out.
    w_bytes = 2 * mm
    b_bytes = 4 * (512 + 256 + 2 * latent + 256 + 512 + IN_DIM_PAD + 2 * (256 + 512))
    act_bytes = 4 * B * (IN_DIM_PAD + latent + IN_DIM_PAD + 2 * latent)
    return pl.CostEstimate(flops=flops, transcendentals=transcendentals,
                           bytes_accessed=w_bytes + b_bytes + act_bytes)


@jax.jit
def vae_forward(x, eps, prep):
    """Jitted forward; `prep` must come from prepare_params (bf16/padded already)."""
    B = x.shape[0]
    latent = eps.shape[1]

    # Flatten and zero-pad the input to a lane-dense 896 columns.
    x_flat = x.reshape(B, IN_DIM).astype(jnp.float32)
    x_pad = jnp.pad(x_flat, ((0, 0), (0, IN_DIM_PAD - IN_DIM)))

    inputs = [
        x_pad, eps,
        prep["ew1"], prep["eb1"], prep["ew2"], prep["eb2"],
        prep["wml"], prep["bml"],
        prep["dw1"], prep["db1"], prep["g1"], prep["bt1"],
        prep["dw2"], prep["db2"], prep["g2"], prep["bt2"],
        prep["dw3"], prep["db3"],
    ]

    vmem_spec = pl.BlockSpec(memory_space=pltpu.MemorySpace.VMEM)

    xrec_pad, mu, logvar = pl.pallas_call(
        vae_kernel,
        out_shape=(
            jax.ShapeDtypeStruct((B, IN_DIM_PAD), jnp.float32),
            jax.ShapeDtypeStruct((B, latent), jnp.float32),
            jax.ShapeDtypeStruct((B, latent), jnp.float32),
        ),
        in_specs=[vmem_spec] * len(inputs),
        out_specs=(vmem_spec, vmem_spec, vmem_spec),
        cost_estimate=_cost_estimate(B, latent),
        compiler_params=pltpu.CompilerParams(vmem_limit_bytes=32 * 1024 * 1024),
    )(*inputs)

    # decode() reshapes to [B, 1, 28, 28]; drop the lane padding first.
    x_recon = xrec_pad[:, :IN_DIM].reshape(B, 1, 28, 28)
    return x_recon, mu, logvar


def vae_forward_ref(x, eps, params):
    """Pure-JAX reference with the same bf16-weight / f32-accumulate arithmetic."""
    bf16 = jnp.bfloat16
    f32 = jnp.float32

    def dot(a, w):
        return jnp.dot(a.astype(bf16), w.astype(bf16), preferred_element_type=f32)

    B = x.shape[0]
    h = x.reshape(B, IN_DIM).astype(f32)
    h = _leaky_relu(dot(h, params["ew1"]) + params["eb1"])
    h = _leaky_relu(dot(h, params["ew2"]) + params["eb2"])
    mu = dot(h, params["wmu"]) + params["bmu"]
    logvar = dot(h, params["wlv"]) + params["blv"]
    z = mu + eps * jnp.exp(0.5 * logvar)
    d = _leaky_relu(_batchnorm_train(dot(z, params["dw1"]) + params["db1"],
                                     params["g1"], params["bt1"]))
    d = _leaky_relu(_batchnorm_train(dot(d, params["dw2"]) + params["db2"],
                                     params["g2"], params["bt2"]))
    d = jax.nn.sigmoid(dot(d, params["dw3"]) + params["db3"])
    return d.reshape(B, 1, 28, 28), mu, logvar


if __name__ == "__main__":
    key = jax.random.PRNGKey(0)
    k_param, k_x, k_eps = jax.random.split(key, 3)

    B = 8
    params = init_params(k_param)
    prep = prepare_params(params)          # one-time pad/cast/concat, NOT per call

    # MNIST-like input in [0, 1), NCHW
    x = jax.random.uniform(k_x, (B, 1, 28, 28), jnp.float32)
    # reparameterization noise (torch.randn_like equivalent, deterministic here)
    eps = jax.random.normal(k_eps, (B, LATENT_DIM), jnp.float32)

    x_recon, mu, logvar = vae_forward(x, eps, prep)
    jax.block_until_ready((x_recon, mu, logvar))

    # sanity check vs. pure-JAX reference (same bf16-weight arithmetic)
    xr_ref, mu_ref, lv_ref = vae_forward_ref(x, eps, params)
    assert x_recon.shape == (B, 1, 28, 28)
    assert mu.shape == (B, LATENT_DIM) and logvar.shape == (B, LATENT_DIM)
    assert jnp.allclose(x_recon, xr_ref, atol=2e-4, rtol=2e-4)
    assert jnp.allclose(mu, mu_ref, atol=2e-4, rtol=2e-4)
    assert jnp.allclose(logvar, lv_ref, atol=2e-4, rtol=2e-4)

    print("KERNEL_OK")
</pallas_src>

<mosaic_0001>
module attributes {stable_mosaic.version = 11 : i64} {
  func.func @vae_kernel(%arg0: memref<8x896xf32, #tpu.memory_space<vmem>>, %arg1: memref<8x128xf32, #tpu.memory_space<vmem>>, %arg2: memref<896x512xbf16, #tpu.memory_space<vmem>>, %arg3: memref<1x512xf32, #tpu.memory_space<vmem>>, %arg4: memref<512x256xbf16, #tpu.memory_space<vmem>>, %arg5: memref<1x256xf32, #tpu.memory_space<vmem>>, %arg6: memref<256x256xbf16, #tpu.memory_space<vmem>>, %arg7: memref<1x256xf32, #tpu.memory_space<vmem>>, %arg8: memref<128x256xbf16, #tpu.memory_space<vmem>>, %arg9: memref<1x256xf32, #tpu.memory_space<vmem>>, %arg10: memref<1x256xf32, #tpu.memory_space<vmem>>, %arg11: memref<1x256xf32, #tpu.memory_space<vmem>>, %arg12: memref<256x512xbf16, #tpu.memory_space<vmem>>, %arg13: memref<1x512xf32, #tpu.memory_space<vmem>>, %arg14: memref<1x512xf32, #tpu.memory_space<vmem>>, %arg15: memref<1x512xf32, #tpu.memory_space<vmem>>, %arg16: memref<512x896xbf16, #tpu.memory_space<vmem>>, %arg17: memref<1x896xf32, #tpu.memory_space<vmem>>, %arg18: memref<8x896xf32, #tpu.memory_space<vmem>>, %arg19: memref<8x128xf32, #tpu.memory_space<vmem>>, %arg20: memref<8x128xf32, #tpu.memory_space<vmem>>) attributes {dimension_semantics = [], scalar_prefetch = 0 : i64, scratch_operands = 0 : i64, tpu.core_type = #tpu.core_type<tc>} {
    %c0 = arith.constant 0 : index
    %c0_0 = arith.constant 0 : index
    %0 = vector.load %arg0[%c0, %c0_0] : memref<8x896xf32, #tpu.memory_space<vmem>>, vector<8x896xf32>
    %1 = arith.truncf %0 : vector<8x896xf32> to vector<8x896xbf16>
    %c0_1 = arith.constant 0 : index
    %c0_2 = arith.constant 0 : index
    %2 = vector.load %arg2[%c0_1, %c0_2] : memref<896x512xbf16, #tpu.memory_space<vmem>>, vector<896x512xbf16>
    %cst = arith.constant dense<0.000000e+00> : vector<8x512xf32>
    %3 = tpu.matmul %1, %2, %cst {dimension_numbers = #tpu.dot_dimension_numbers<[1], [0], [0], [1], [0, 0, 1, 1], [], []>} : vector<8x896xbf16>, vector<896x512xbf16>, vector<8x512xf32> -> vector<8x512xf32>
    %c0_3 = arith.constant 0 : index
    %c0_4 = arith.constant 0 : index
    %4 = vector.load %arg3[%c0_3, %c0_4] : memref<1x512xf32, #tpu.memory_space<vmem>>, vector<1x512xf32>
    %5 = vector.broadcast %4 : vector<1x512xf32> to vector<8x512xf32>
    %6 = arith.addf %3, %5 : vector<8x512xf32>
    %cst_5 = arith.constant 0.000000e+00 : f32
    %7 = vector.broadcast %cst_5 : f32 to vector<8x512xf32>
    %8 = arith.cmpf ogt, %6, %7 : vector<8x512xf32>
    %cst_6 = arith.constant 2.000000e-01 : f32
    %9 = vector.broadcast %cst_6 : f32 to vector<8x512xf32>
    %10 = arith.mulf %9, %6 : vector<8x512xf32>
    %11 = arith.select %8, %6, %10 : vector<8x512xi1>, vector<8x512xf32>
    %12 = arith.truncf %11 : vector<8x512xf32> to vector<8x512xbf16>
    %c0_7 = arith.constant 0 : index
    %c0_8 = arith.constant 0 : index
    %13 = vector.load %arg4[%c0_7, %c0_8] : memref<512x256xbf16, #tpu.memory_space<vmem>>, vector<512x256xbf16>
    %cst_9 = arith.constant dense<0.000000e+00> : vector<8x256xf32>
    %14 = tpu.matmul %12, %13, %cst_9 {dimension_numbers = #tpu.dot_dimension_numbers<[1], [0], [0], [1], [0, 0, 1, 1], [], []>} : vector<8x512xbf16>, vector<512x256xbf16>, vector<8x256xf32> -> vector<8x256xf32>
    %c0_10 = arith.constant 0 : index
    %c0_11 = arith.constant 0 : index
    %15 = vector.load %arg5[%c0_10, %c0_11] : memref<1x256xf32, #tpu.memory_space<vmem>>, vector<1x256xf32>
    %16 = vector.broadcast %15 : vector<1x256xf32> to vector<8x256xf32>
    %17 = arith.addf %14, %16 : vector<8x256xf32>
    %cst_12 = arith.constant 0.000000e+00 : f32
    %18 = vector.broadcast %cst_12 : f32 to vector<8x256xf32>
    %19 = arith.cmpf ogt, %17, %18 : vector<8x256xf32>
    %cst_13 = arith.constant 2.000000e-01 : f32
    %20 = vector.broadcast %cst_13 : f32 to vector<8x256xf32>
    %21 = arith.mulf %20, %17 : vector<8x256xf32>
    %22 = arith.select %19, %17, %21 : vector<8x256xi1>, vector<8x256xf32>
    %23 = arith.truncf %22 : vector<8x256xf32> to vector<8x256xbf16>
    %c0_14 = arith.constant 0 : index
    %c0_15 = arith.constant 0 : index
    %24 = vector.load %arg6[%c0_14, %c0_15] : memref<256x256xbf16, #tpu.memory_space<vmem>>, vector<256x256xbf16>
    %cst_16 = arith.constant dense<0.000000e+00> : vector<8x256xf32>
    %25 = tpu.matmul %23, %24, %cst_16 {dimension_numbers = #tpu.dot_dimension_numbers<[1], [0], [0], [1], [0, 0, 1, 1], [], []>} : vector<8x256xbf16>, vector<256x256xbf16>, vector<8x256xf32> -> vector<8x256xf32>
    %c0_17 = arith.constant 0 : index
    %c0_18 = arith.constant 0 : index
    %26 = vector.load %arg7[%c0_17, %c0_18] : memref<1x256xf32, #tpu.memory_space<vmem>>, vector<1x256xf32>
    %27 = vector.broadcast %26 : vector<1x256xf32> to vector<8x256xf32>
    %28 = arith.addf %25, %27 : vector<8x256xf32>
    %29 = vector.extract_strided_slice %28 {offsets = [0, 0], sizes = [8, 128], strides = [1, 1]} : vector<8x256xf32> to vector<8x128xf32>
    %30 = vector.extract_strided_slice %28 {offsets = [0, 128], sizes = [8, 128], strides = [1, 1]} : vector<8x256xf32> to vector<8x128xf32>
    %c0_19 = arith.constant 0 : index
    %c0_20 = arith.constant 0 : index
    %31 = vector.load %arg19[%c0_19, %c0_20] : memref<8x128xf32, #tpu.memory_space<vmem>>, vector<8x128xf32>
    tpu.vector_store %arg19[%c0_19, %c0_20], %29 {strides = array<i32>} : memref<8x128xf32, #tpu.memory_space<vmem>>, vector<8x128xf32>,
    %c0_21 = arith.constant 0 : index
    %c0_22 = arith.constant 0 : index
    %32 = vector.load %arg20[%c0_21, %c0_22] : memref<8x128xf32, #tpu.memory_space<vmem>>, vector<8x128xf32>
    tpu.vector_store %arg20[%c0_21, %c0_22], %30 {strides = array<i32>} : memref<8x128xf32, #tpu.memory_space<vmem>>, vector<8x128xf32>,
    %c0_23 = arith.constant 0 : index
    %c0_24 = arith.constant 0 : index
    %33 = vector.load %arg1[%c0_23, %c0_24] : memref<8x128xf32, #tpu.memory_space<vmem>>, vector<8x128xf32>
    %cst_25 = arith.constant 5.000000e-01 : f32
    %34 = vector.broadcast %cst_25 : f32 to vector<8x128xf32>
    %35 = arith.mulf %34, %30 : vector<8x128xf32>
    %36 = math.exp %35 : vector<8x128xf32>
    %37 = arith.mulf %33, %36 : vector<8x128xf32>
    %38 = arith.addf %29, %37 : vector<8x128xf32>
    %39 = arith.truncf %38 : vector<8x128xf32> to vector<8x128xbf16>
    %c0_26 = arith.constant 0 : index
    %c0_27 = arith.constant 0 : index
    %40 = vector.load %arg8[%c0_26, %c0_27] : memref<128x256xbf16, #tpu.memory_space<vmem>>, vector<128x256xbf16>
    %cst_28 = arith.constant dense<0.000000e+00> : vector<8x256xf32>
    %41 = tpu.matmul %39, %40, %cst_28 {dimension_numbers = #tpu.dot_dimension_numbers<[1], [0], [0], [1], [0, 0, 1, 1], [], []>} : vector<8x128xbf16>, vector<128x256xbf16>, vector<8x256xf32> -> vector<8x256xf32>
    %c0_29 = arith.constant 0 : index
    %c0_30 = arith.constant 0 : index
    %42 = vector.load %arg9[%c0_29, %c0_30] : memref<1x256xf32, #tpu.memory_space<vmem>>, vector<1x256xf32>
    %43 = vector.broadcast %42 : vector<1x256xf32> to vector<8x256xf32>
    %44 = arith.addf %41, %43 : vector<8x256xf32>
    %c0_31 = arith.constant 0 : index
    %c0_32 = arith.constant 0 : index
    %45 = vector.load %arg10[%c0_31, %c0_32] : memref<1x256xf32, #tpu.memory_space<vmem>>, vector<1x256xf32>
    %c0_33 = arith.constant 0 : index
    %c0_34 = arith.constant 0 : index
    %46 = vector.load %arg11[%c0_33, %c0_34] : memref<1x256xf32, #tpu.memory_space<vmem>>, vector<1x256xf32>
    %cst_35 = arith.constant dense<0.000000e+00> : vector<256xf32>
    %47 = vector.multi_reduction <add>, %44, %cst_35 [0] : vector<8x256xf32> to vector<256xf32>
    %48 = vector.shape_cast %47 : vector<256xf32> to vector<1x256xf32>
    %cst_36 = arith.constant 8.000000e+00 : f32
    %49 = vector.broadcast %cst_36 : f32 to vector<1x256xf32>
    %50 = arith.divf %48, %49 : vector<1x256xf32>
    %51 = vector.broadcast %50 : vector<1x256xf32> to vector<8x256xf32>
    %52 = arith.subf %44, %51 : vector<8x256xf32>
    %53 = arith.mulf %52, %52 : vector<8x256xf32>
    %cst_37 = arith.constant dense<0.000000e+00> : vector<256xf32>
    %54 = vector.multi_reduction <add>, %53, %cst_37 [0] : vector<8x256xf32> to vector<256xf32>
    %55 = vector.shape_cast %54 : vector<256xf32> to vector<1x256xf32>
    %cst_38 = arith.constant 8.000000e+00 : f32
    %56 = vector.broadcast %cst_38 : f32 to vector<1x256xf32>
    %57 = arith.divf %55, %56 : vector<1x256xf32>
    %cst_39 = arith.constant 9.99999974E-6 : f32
    %58 = vector.broadcast %cst_39 : f32 to vector<1x256xf32>
    %59 = arith.addf %57, %58 : vector<1x256xf32>
    %60 = math.rsqrt %59 : vector<1x256xf32>
    %61 = arith.mulf %45, %60 : vector<1x256xf32>
    %62 = arith.mulf %50, %61 : vector<1x256xf32>
    %63 = arith.subf %46, %62 : vector<1x256xf32>
    %64 = vector.broadcast %61 : vector<1x256xf32> to vector<8x256xf32>
    %65 = arith.mulf %44, %64 : vector<8x256xf32>
    %66 = vector.broadcast %63 : vector<1x256xf32> to vector<8x256xf32>
    %67 = arith.addf %65, %66 : vector<8x256xf32>
    %cst_40 = arith.constant 0.000000e+00 : f32
    %68 = vector.broadcast %cst_40 : f32 to vector<8x256xf32>
    %69 = arith.cmpf ogt, %67, %68 : vector<8x256xf32>
    %cst_41 = arith.constant 2.000000e-01 : f32
    %70 = vector.broadcast %cst_41 : f32 to vector<8x256xf32>
    %71 = arith.mulf %70, %67 : vector<8x256xf32>
    %72 = arith.select %69, %67, %71 : vector<8x256xi1>, vector<8x256xf32>
    %73 = arith.truncf %72 : vector<8x256xf32> to vector<8x256xbf16>
    %c0_42 = arith.constant 0 : index
    %c0_43 = arith.constant 0 : index
    %74 = vector.load %arg12[%c0_42, %c0_43] : memref<256x512xbf16, #tpu.memory_space<vmem>>, vector<256x512xbf16>
    %cst_44 = arith.constant dense<0.000000e+00> : vector<8x512xf32>
    %75 = tpu.matmul %73, %74, %cst_44 {dimension_numbers = #tpu.dot_dimension_numbers<[1], [0], [0], [1], [0, 0, 1, 1], [], []>} : vector<8x256xbf16>, vector<256x512xbf16>, vector<8x512xf32> -> vector<8x512xf32>
    %c0_45 = arith.constant 0 : index
    %c0_46 = arith.constant 0 : index
    %76 = vector.load %arg13[%c0_45, %c0_46] : memref<1x512xf32, #tpu.memory_space<vmem>>, vector<1x512xf32>
    %77 = vector.broadcast %76 : vector<1x512xf32> to vector<8x512xf32>
    %78 = arith.addf %75, %77 : vector<8x512xf32>
    %c0_47 = arith.constant 0 : index
    %c0_48 = arith.constant 0 : index
    %79 = vector.load %arg14[%c0_47, %c0_48] : memref<1x512xf32, #tpu.memory_space<vmem>>, vector<1x512xf32>
    %c0_49 = arith.constant 0 : index
    %c0_50 = arith.constant 0 : index
    %80 = vector.load %arg15[%c0_49, %c0_50] : memref<1x512xf32, #tpu.memory_space<vmem>>, vector<1x512xf32>
    %cst_51 = arith.constant dense<0.000000e+00> : vector<512xf32>
    %81 = vector.multi_reduction <add>, %78, %cst_51 [0] : vector<8x512xf32> to vector<512xf32>
    %82 = vector.shape_cast %81 : vector<512xf32> to vector<1x512xf32>
    %cst_52 = arith.constant 8.000000e+00 : f32
    %83 = vector.broadcast %cst_52 : f32 to vector<1x512xf32>
    %84 = arith.divf %82, %83 : vector<1x512xf32>
    %85 = vector.broadcast %84 : vector<1x512xf32> to vector<8x512xf32>
    %86 = arith.subf %78, %85 : vector<8x512xf32>
    %87 = arith.mulf %86, %86 : vector<8x512xf32>
    %cst_53 = arith.constant dense<0.000000e+00> : vector<512xf32>
    %88 = vector.multi_reduction <add>, %87, %cst_53 [0] : vector<8x512xf32> to vector<512xf32>
    %89 = vector.shape_cast %88 : vector<512xf32> to vector<1x512xf32>
    %cst_54 = arith.constant 8.000000e+00 : f32
    %90 = vector.broadcast %cst_54 : f32 to vector<1x512xf32>
    %91 = arith.divf %89, %90 : vector<1x512xf32>
    %cst_55 = arith.constant 9.99999974E-6 : f32
    %92 = vector.broadcast %cst_55 : f32 to vector<1x512xf32>
    %93 = arith.addf %91, %92 : vector<1x512xf32>
    %94 = math.rsqrt %93 : vector<1x512xf32>
    %95 = arith.mulf %79, %94 : vector<1x512xf32>
    %96 = arith.mulf %84, %95 : vector<1x512xf32>
    %97 = arith.subf %80, %96 : vector<1x512xf32>
    %98 = vector.broadcast %95 : vector<1x512xf32> to vector<8x512xf32>
    %99 = arith.mulf %78, %98 : vector<8x512xf32>
    %100 = vector.broadcast %97 : vector<1x512xf32> to vector<8x512xf32>
    %101 = arith.addf %99, %100 : vector<8x512xf32>
    %cst_56 = arith.constant 0.000000e+00 : f32
    %102 = vector.broadcast %cst_56 : f32 to vector<8x512xf32>
    %103 = arith.cmpf ogt, %101, %102 : vector<8x512xf32>
    %cst_57 = arith.constant 2.000000e-01 : f32
    %104 = vector.broadcast %cst_57 : f32 to vector<8x512xf32>
    %105 = arith.mulf %104, %101 : vector<8x512xf32>
    %106 = arith.select %103, %101, %105 : vector<8x512xi1>, vector<8x512xf32>
    %107 = arith.truncf %106 : vector<8x512xf32> to vector<8x512xbf16>
    %c0_58 = arith.constant 0 : index
    %c0_59 = arith.constant 0 : index
    %108 = vector.load %arg16[%c0_58, %c0_59] : memref<512x896xbf16, #tpu.memory_space<vmem>>, vector<512x896xbf16>
    %cst_60 = arith.constant dense<0.000000e+00> : vector<8x896xf32>
    %109 = tpu.matmul %107, %108, %cst_60 {dimension_numbers = #tpu.dot_dimension_numbers<[1], [0], [0], [1], [0, 0, 1, 1], [], []>} : vector<8x512xbf16>, vector<512x896xbf16>, vector<8x896xf32> -> vector<8x896xf32>
    %c0_61 = arith.constant 0 : index
    %c0_62 = arith.constant 0 : index
    %110 = vector.load %arg17[%c0_61, %c0_62] : memref<1x896xf32, #tpu.memory_space<vmem>>, vector<1x896xf32>
    %111 = vector.broadcast %110 : vector<1x896xf32> to vector<8x896xf32>
    %112 = arith.addf %109, %111 : vector<8x896xf32>
    %113 = arith.negf %112 : vector<8x896xf32>
    %114 = math.exp %113 : vector<8x896xf32>
    %cst_63 = arith.constant 1.000000e+00 : f32
    %115 = vector.broadcast %cst_63 : f32 to vector<8x896xf32>
    %116 = arith.addf %115, %114 : vector<8x896xf32>
    %117 = arith.divf %115, %116 : vector<8x896xf32>
    %c0_64 = arith.constant 0 : index
    %c0_65 = arith.constant 0 : index
    %118 = vector.load %arg18[%c0_64, %c0_65] : memref<8x896xf32, #tpu.memory_space<vmem>>, vector<8x896xf32>
    tpu.vector_store %arg18[%c0_64, %c0_65], %117 {strides = array<i32>} : memref<8x896xf32, #tpu.memory_space<vmem>>, vector<8x896xf32>,
    return
  }
}

</mosaic_0001>

<llo_original>
// kernel: vae_forward.1
$region0: #{vae_forward.1}
  #allocation0 [shape = 'u32[]', space=smem, size = 0x4, offset = 0x4, fixed_abs, tag = 'smem constant byte address 0x4 - core index']
  #allocation1 [shape = 'u32[72,128]{1,0:T(1,128)}', space=vmem, size = 0x9000, scoped, tag = 'internal scratch']
  %s0 = inlined_call_operand.vmem [shape: f32[8,896], index: 0, kind: input, shape index: {}]
  %s1 = inlined_call_operand.vmem [shape: f32[8,128], index: 1, kind: input, shape index: {}]
  %s2 = inlined_call_operand.hbm [shape: bf16[896,512], index: 2, kind: input, shape index: {}]
  %s3 = inlined_call_operand.vmem [shape: f32[1,512], index: 3, kind: input, shape index: {}]
  %s4 = inlined_call_operand.vmem [shape: bf16[512,256], index: 4, kind: input, shape index: {}]
  %s5 = inlined_call_operand.hbm [shape: f32[1,256], index: 5, kind: input, shape index: {}]
  %s6 = inlined_call_operand.vmem [shape: bf16[256,256], index: 6, kind: input, shape index: {}]
  %s7 = inlined_call_operand.hbm [shape: f32[1,256], index: 7, kind: input, shape index: {}]
  %s8 = inlined_call_operand.vmem [shape: bf16[128,256], index: 8, kind: input, shape index: {}]
  %s9 = inlined_call_operand.hbm [shape: f32[1,256], index: 9, kind: input, shape index: {}]
  %s10 = inlined_call_operand.hbm [shape: f32[1,256], index: 10, kind: input, shape index: {}]
  %s11 = inlined_call_operand.hbm [shape: f32[1,256], index: 11, kind: input, shape index: {}]
  %s12 = inlined_call_operand.hbm [shape: bf16[256,512], index: 12, kind: input, shape index: {}]
  %s13 = inlined_call_operand.vmem [shape: f32[1,512], index: 13, kind: input, shape index: {}]
  %s14 = inlined_call_operand.hbm [shape: f32[1,512], index: 14, kind: input, shape index: {}]
  %s15 = inlined_call_operand.hbm [shape: f32[1,512], index: 15, kind: input, shape index: {}]
  %s16 = inlined_call_operand.hbm [shape: bf16[512,896], index: 16, kind: input, shape index: {}]
  %s17 = inlined_call_operand.vmem [shape: f32[1,896], index: 17, kind: input, shape index: {}]
  %s18 = inlined_call_operand.vmem [shape: f32[8,896], index: 18, kind: output, shape index: {0}]
  %s19 = inlined_call_operand.hbm [shape: f32[8,128], index: 19, kind: output, shape index: {1}]
  %s20 = inlined_call_operand.hbm [shape: f32[8,128], index: 20, kind: output, shape index: {2}]
  %21 = xla_tuple %s18, %s19, %s20
  %s22 = sld [smem:[#allocation0]]
  $region138: #{vae_forward.1} parent=0
    _
  %s24 = ssub.s32 1, %s22
  %s25 = scalar_select 0, %s24, %s22
  $region1: #{vae_forward.1} parent=0
    #allocation2 [shape = 'u8[917504]{0}', space=vmem, size = 0xe0000, scoped, tag = 'input window, operand 2, single buffered']
    #allocation3 [shape = 's32[1]{0}', space=sflag, size = 0x4, scoped, tag = 'scoped memory for vae_forward.1']
    #allocation4 [shape = 's32[1]{0}', space=sflag, size = 0x4, scoped, tag = 'scoped memory for vae_forward.1']
    #allocation5 [shape = 'u8[1024]{0}', space=vmem, size = 0x400, scoped, tag = 'input window, operand 5, single buffered']
    #allocation6 [shape = 's32[1]{0}', space=sflag, size = 0x4, scoped, tag = 'scoped memory for vae_forward.1']
    #allocation7 [shape = 'u8[1024]{0}', space=vmem, size = 0x400, scoped, tag = 'input window, operand 7, single buffered']
    #allocation8 [shape = 'u8[1024]{0}', space=vmem, size = 0x400, scoped, tag = 'input window, operand 9, single buffered']
    #allocation9 [shape = 's32[1]{0}', space=sflag, size = 0x4, scoped, tag = 'scoped memory for vae_forward.1']
    #allocation10 [shape = 'u8[1024]{0}', space=vmem, size = 0x400, scoped, tag = 'input window, operand 10, single buffered']
    #allocation11 [shape = 'u8[1024]{0}', space=vmem, size = 0x400, scoped, tag = 'input window, operand 11, single buffered']
    #allocation12 [shape = 's32[1]{0}', space=sflag, size = 0x4, scoped, tag = 'scoped memory for vae_forward.1']
    #allocation13 [shape = 'u8[262144]{0}', space=vmem, size = 0x40000, scoped, tag = 'input window, operand 12, single buffered']
    #allocation14 [shape = 'u8[2048]{0}', space=vmem, size = 0x800, scoped, tag = 'input window, operand 14, single buffered']
    #allocation15 [shape = 's32[1]{0}', space=sflag, size = 0x4, scoped, tag = 'scoped memory for vae_forward.1']
    #allocation16 [shape = 'u8[2048]{0}', space=vmem, size = 0x800, scoped, tag = 'input window, operand 15, single buffered']
    #allocation17 [shape = 'u8[917504]{0}', space=vmem, size = 0xe0000, scoped, tag = 'input window, operand 16, single buffered']
    #allocation18 [shape = 's32[1]{0}', space=sflag, size = 0x4, scoped, tag = 'scoped memory for vae_forward.1']
    #allocation19 [shape = 'u8[4096]{0}', space=vmem, size = 0x1000, scoped, tag = 'output window, operand 1, single buffered']
    #allocation20 [shape = 'u8[4096]{0}', space=vmem, size = 0x1000, scoped, tag = 'output window, operand 2, single buffered']
    #allocation21 [shape = 's32[1]{0}', space=sflag, size = 0x4, scoped, tag = 'scoped memory for vae_forward.1']
    %26 = vsyncpa [#allocation3], 0
    %27 = vsyncpa [#allocation6], 0
    %28 = vsyncpa [#allocation9], 0
    %29 = vsyncpa [#allocation12], 0
    %30 = vsyncpa [#allocation15], 0
    %31 = vsyncpa [#allocation18], 0
    %32 = vsyncpa [#allocation4], 0
    %33 = vsyncpa [#allocation21], 0
    // Predicated region
    $region2: #{vae_forward.1} parent=1 // pred_check
      _
    $region3: #{vae_forward.1} parent=1 // pred_check_branch
      %35 = sbr.rel (0) target = $region5
    $region4: #{vae_forward.1} parent=1 // pred_region
      _
    $region5: #{vae_forward.1} parent=1 // pred_fallthru
      _
    // Predicated region
    $region6: #{vae_forward.1} parent=1 // pred_check
      _
    $region7: #{vae_forward.1} parent=1 // pred_check_branch
      %37 = sbr.rel (0) target = $region9
    $region8: #{vae_forward.1} parent=1 // pred_region
      _
    $region9: #{vae_forward.1} parent=1 // pred_fallthru
      _
    // Predicated region
    $region10: #{vae_forward.1} parent=1 // pred_check
      _
    $region11: #{vae_forward.1} parent=1 // pred_check_branch
      %39 = sbr.rel (0) target = $region13
    $region12: #{vae_forward.1} parent=1 // pred_region
      %41 = vsyncadd [#allocation3], 0
      %s42 = sshll.u32 %s2, 4
      %s43 = int_to_ptr.hbm [resolvable:$true] %s42
      %s44 = sshll.u32 [#allocation2], 4
      %s45 = int_to_ptr.vmem [resolvable:$true] %s44
      %50 = dma.hbm_to_vmem [thread:$0]  %s43, 28672, %s45, [#allocation3], 256, 256, 16
    $region13: #{vae_forward.1} parent=1 // pred_fallthru
      _
    // Predicated region
    $region14: #{vae_forward.1} parent=1 // pred_check
      _
    $region15: #{vae_forward.1} parent=1 // pred_check_branch
      %52 = sbr.rel (0) target = $region17
    $region16: #{vae_forward.1} parent=1 // pred_region
      _
    $region17: #{vae_forward.1} parent=1 // pred_fallthru
      _
    // Predicated region
    $region18: #{vae_forward.1} parent=1 // pred_check
      _
    $region19: #{vae_forward.1} parent=1 // pred_check_branch
      %54 = sbr.rel (0) target = $region21
    $region20: #{vae_forward.1} parent=1 // pred_region
      _
    $region21: #{vae_forward.1} parent=1 // pred_fallthru
      _
    // Predicated region
    $region22: #{vae_forward.1} parent=1 // pred_check
      _
    $region23: #{vae_forward.1} parent=1 // pred_check_branch
      %56 = sbr.rel (0) target = $region25
    $region24: #{vae_forward.1} parent=1 // pred_region
      %58 = vsyncadd [#allocation6], 0
      %s60 = sshll.u32 %s5, 4
      %s61 = int_to_ptr.hbm [resolvable:$true] %s60
      %s62 = sshll.u32 [#allocation5], 4
      %s63 = int_to_ptr.vmem [resolvable:$true] %s62
      %65 = dma.hbm_to_vmem [thread:$0]  %s61, 32, %s63, [#allocation6]
    $region25: #{vae_forward.1} parent=1 // pred_fallthru
      _
    // Predicated region
    $region26: #{vae_forward.1} parent=1 // pred_check
      _
    $region27: #{vae_forward.1} parent=1 // pred_check_branch
      %67 = sbr.rel (0) target = $region29
    $region28: #{vae_forward.1} parent=1 // pred_region
      _
    $region29: #{vae_forward.1} parent=1 // pred_fallthru
      _
    // Predicated region
    $region30: #{vae_forward.1} parent=1 // pred_check
      _
    $region31: #{vae_forward.1} parent=1 // pred_check_branch
      %69 = sbr.rel (0) target = $region33
    $region32: #{vae_forward.1} parent=1 // pred_region
      %71 = vsyncadd [#allocation6], 0
      %s73 = sshll.u32 %s7, 4
      %s74 = int_to_ptr.hbm [resolvable:$true] %s73
      %s75 = sshll.u32 [#allocation7], 4
      %s76 = int_to_ptr.vmem [resolvable:$true] %s75
      %78 = dma.hbm_to_vmem [thread:$0]  %s74, 32, %s76, [#allocation6]
    $region33: #{vae_forward.1} parent=1 // pred_fallthru
      _
    // Predicated region
    $region34: #{vae_forward.1} parent=1 // pred_check
      _
    $region35: #{vae_forward.1} parent=1 // pred_check_branch
      %80 = sbr.rel (0) target = $region37
    $region36: #{vae_forward.1} parent=1 // pred_region
      _
    $region37: #{vae_forward.1} parent=1 // pred_fallthru
      _
    // Predicated region
    $region38: #{vae_forward.1} parent=1 // pred_check
      _
    $region39: #{vae_forward.1} parent=1 // pred_check_branch
      %82 = sbr.rel (0) target = $region41
    $region40: #{vae_forward.1} parent=1 // pred_region
      %84 = vsyncadd [#allocation9], 0
      %s86 = sshll.u32 %s9, 4
      %s87 = int_to_ptr.hbm [resolvable:$true] %s86
      %s88 = sshll.u32 [#allocation8], 4
      %s89 = int_to_ptr.vmem [resolvable:$true] %s88
      %91 = dma.hbm_to_vmem [thread:$0]  %s87, 32, %s89, [#allocation9]
    $region41: #{vae_forward.1} parent=1 // pred_fallthru
      _
    // Predicated region
    $region42: #{vae_forward.1} parent=1 // pred_check
      _
    $region43: #{vae_forward.1} parent=1 // pred_check_branch
      %93 = sbr.rel (0) target = $region45
    $region44: #{vae_forward.1} parent=1 // pred_region
      %95 = vsyncadd [#allocation9], 0
      %s97 = sshll.u32 %s10, 4
      %s98 = int_to_ptr.hbm [resolvable:$true] %s97
      %s99 = sshll.u32 [#allocation10], 4
      %s100 = int_to_ptr.vmem [resolvable:$true] %s99
      %102 = dma.hbm_to_vmem [thread:$0]  %s98, 32, %s100, [#allocation9]
    $region45: #{vae_forward.1} parent=1 // pred_fallthru
      _
    // Predicated region
    $region46: #{vae_forward.1} parent=1 // pred_check
      _
    $region47: #{vae_forward.1} parent=1 // pred_check_branch
      %104 = sbr.rel (0) target = $region49
    $region48: #{vae_forward.1} parent=1 // pred_region
      %106 = vsyncadd [#allocation12], 0
      %s108 = sshll.u32 %s11, 4
      %s109 = int_to_ptr.hbm [resolvable:$true] %s108
      %s110 = sshll.u32 [#allocation11], 4
      %s111 = int_to_ptr.vmem [resolvable:$true] %s110
      %113 = dma.hbm_to_vmem [thread:$0]  %s109, 32, %s111, [#allocation12]
    $region49: #{vae_forward.1} parent=1 // pred_fallthru
      _
    // Predicated region
    $region50: #{vae_forward.1} parent=1 // pred_check
      _
    $region51: #{vae_forward.1} parent=1 // pred_check_branch
      %115 = sbr.rel (0) target = $region53
    $region52: #{vae_forward.1} parent=1 // pred_region
      %117 = vsyncadd [#allocation12], 0
      %s118 = sshll.u32 %s12, 4
      %s119 = int_to_ptr.hbm [resolvable:$true] %s118
      %s120 = sshll.u32 [#allocation13], 4
      %s121 = int_to_ptr.vmem [resolvable:$true] %s120
      %126 = dma.hbm_to_vmem [thread:$0]  %s119, 8192, %s121, [#allocation12], 256, 256, 16
    $region53: #{vae_forward.1} parent=1 // pred_fallthru
      _
    // Predicated region
    $region54: #{vae_forward.1} parent=1 // pred_check
      _
    $region55: #{vae_forward.1} parent=1 // pred_check_branch
      %128 = sbr.rel (0) target = $region57
    $region56: #{vae_forward.1} parent=1 // pred_region
      _
    $region57: #{vae_forward.1} parent=1 // pred_fallthru
      _
    // Predicated region
    $region58: #{vae_forward.1} parent=1 // pred_check
      _
    $region59: #{vae_forward.1} parent=1 // pred_check_branch
      %130 = sbr.rel (0) target = $region61
    $region60: #{vae_forward.1} parent=1 // pred_region
      %132 = vsyncadd [#allocation15], 0
      %s134 = sshll.u32 %s14, 4
      %s135 = int_to_ptr.hbm [resolvable:$true] %s134
      %s136 = sshll.u32 [#allocation14], 4
      %s137 = int_to_ptr.vmem [resolvable:$true] %s136
      %139 = dma.hbm_to_vmem [thread:$0]  %s135, 64, %s137, [#allocation15]
    $region61: #{vae_forward.1} parent=1 // pred_fallthru
      _
    // Predicated region
    $region62: #{vae_forward.1} parent=1 // pred_check
      _
    $region63: #{vae_forward.1} parent=1 // pred_check_branch
      %141 = sbr.rel (0) target = $region65
    $region64: #{vae_forward.1} parent=1 // pred_region
      %143 = vsyncadd [#allocation15], 0
      %s145 = sshll.u32 %s15, 4
      %s146 = int_to_ptr.hbm [resolvable:$true] %s145
      %s147 = sshll.u32 [#allocation16], 4
      %s148 = int_to_ptr.vmem [resolvable:$true] %s147
      %150 = dma.hbm_to_vmem [thread:$0]  %s146, 64, %s148, [#allocation15]
    $region65: #{vae_forward.1} parent=1 // pred_fallthru
      _
    // Predicated region
    $region66: #{vae_forward.1} parent=1 // pred_check
      _
    $region67: #{vae_forward.1} parent=1 // pred_check_branch
      %152 = sbr.rel (0) target = $region69
    $region68: #{vae_forward.1} parent=1 // pred_region
      %154 = vsyncadd [#allocation18], 0
      %s155 = sshll.u32 %s16, 4
      %s156 = int_to_ptr.hbm [resolvable:$true] %s155
      %s157 = sshll.u32 [#allocation17], 4
      %s158 = int_to_ptr.vmem [resolvable:$true] %s157
      %163 = dma.hbm_to_vmem [thread:$0]  %s156, 28672, %s158, [#allocation18], 448, 448, 28
    $region69: #{vae_forward.1} parent=1 // pred_fallthru
      _
    // Predicated region
    $region70: #{vae_forward.1} parent=1 // pred_check
      _
    $region71: #{vae_forward.1} parent=1 // pred_check_branch
      %165 = sbr.rel (0) target = $region73
    $region72: #{vae_forward.1} parent=1 // pred_region
      _
    $region73: #{vae_forward.1} parent=1 // pred_fallthru
      _
    // Predicated region
    $region74: #{vae_forward.1} parent=1 // pred_check
      _
    $region75: #{vae_forward.1} parent=1 // pred_check_branch
      %167 = sbr.rel (0) target = $region77
    $region76: #{vae_forward.1} parent=1 // pred_region
      %169 = dma.done [#allocation3], 28672
    $region77: #{vae_forward.1} parent=1 // pred_fallthru
      _
    // Predicated region
    $region78: #{vae_forward.1} parent=1 // pred_check
      _
    $region79: #{vae_forward.1} parent=1 // pred_check_branch
      %171 = sbr.rel (0) target = $region81
    $region80: #{vae_forward.1} parent=1 // pred_region
      %173 = dma.done [#allocation6], 32
    $region81: #{vae_forward.1} parent=1 // pred_fallthru
      _
    // Predicated region
    $region82: #{vae_forward.1} parent=1 // pred_check
      _
    $region83: #{vae_forward.1} parent=1 // pred_check_branch
      %175 = sbr.rel (0) target = $region85
    $region84: #{vae_forward.1} parent=1 // pred_region
      %177 = dma.done [#allocation6], 32
    $region85: #{vae_forward.1} parent=1 // pred_fallthru
      _
    // Predicated region
    $region86: #{vae_forward.1} parent=1 // pred_check
      _
    $region87: #{vae_forward.1} parent=1 // pred_check_branch
      %179 = sbr.rel (0) target = $region89
    $region88: #{vae_forward.1} parent=1 // pred_region
      %181 = dma.done [#allocation9], 32
    $region89: #{vae_forward.1} parent=1 // pred_fallthru
      _
    // Predicated region
    $region90: #{vae_forward.1} parent=1 // pred_check
      _
    $region91: #{vae_forward.1} parent=1 // pred_check_branch
      %183 = sbr.rel (0) target = $region93
    $region92: #{vae_forward.1} parent=1 // pred_region
      %185 = dma.done [#allocation9], 32
    $region93: #{vae_forward.1} parent=1 // pred_fallthru
      _
    // Predicated region
    $region94: #{vae_forward.1} parent=1 // pred_check
      _
    $region95: #{vae_forward.1} parent=1 // pred_check_branch
      %187 = sbr.rel (0) target = $region97
    $region96: #{vae_forward.1} parent=1 // pred_region
      %189 = dma.done [#allocation12], 32
    $region97: #{vae_forward.1} parent=1 // pred_fallthru
      _
    // Predicated region
    $region98: #{vae_forward.1} parent=1 // pred_check
      _
    $region99: #{vae_forward.1} parent=1 // pred_check_branch
      %191 = sbr.rel (0) target = $region101
    $region100: #{vae_forward.1} parent=1 // pred_region
      %193 = dma.done [#allocation12], 8192
    $region101: #{vae_forward.1} parent=1 // pred_fallthru
      _
    // Predicated region
    $region102: #{vae_forward.1} parent=1 // pred_check
      _
    $region103: #{vae_forward.1} parent=1 // pred_check_branch
      %195 = sbr.rel (0) target = $region105
    $region104: #{vae_forward.1} parent=1 // pred_region
      %197 = dma.done [#allocation15], 64
    $region105: #{vae_forward.1} parent=1 // pred_fallthru
      _
    // Predicated region
    $region106: #{vae_forward.1} parent=1 // pred_check
      _
    $region107: #{vae_forward.1} parent=1 // pred_check_branch
      %199 = sbr.rel (0) target = $region109
    $region108: #{vae_forward.1} parent=1 // pred_region
      %201 = dma.done [#allocation15], 64
    $region109: #{vae_forward.1} parent=1 // pred_fallthru
      _
    // Predicated region
    $region110: #{vae_forward.1} parent=1 // pred_check
      _
    $region111: #{vae_forward.1} parent=1 // pred_check_branch
      %203 = sbr.rel (0) target = $region113
    $region112: #{vae_forward.1} parent=1 // pred_region
      %205 = dma.done [#allocation18], 28672
    $region113: #{vae_forward.1} parent=1 // pred_fallthru
      _
    %v206 = vld [vmem:[%s0] sm:$0xff]
    %v207 = vld [vmem:[%s0 + $0x8] sm:$0xff]
    %v208 = vld [vmem:[%s0 + $0x10] sm:$0xff]
    %v209 = vld [vmem:[%s0 + $0x18] sm:$0xff]
    %v210 = vld [vmem:[%s0 + $0x20] sm:$0xff]
    %v211 = vld [vmem:[%s0 + $0x28] sm:$0xff]
    %v212 = vld [vmem:[%s0 + $0x30] sm:$0xff]
    %v213 = vpack.c.bf16 %v206, %v206
    %v214 = vpack.c.bf16 %v207, %v207
    %v215 = vpack.c.bf16 %v208, %v208
    %v216 = vpack.c.bf16 %v209, %v209
    %v217 = vpack.c.bf16 %v210, %v210
    %v218 = vpack.c.bf16 %v211, %v211
    %v219 = vpack.c.bf16 %v212, %v212
    %v220 = vld [vmem:[#allocation2] sm:$0xff]
    %v221 = vld [vmem:[#allocation2 + $0x8] sm:$0xff]
    %v222 = vld [vmem:[#allocation2 + $0x10] sm:$0xff]
    %v223 = vld [vmem:[#allocation2 + $0x18] sm:$0xff]
    %v224 = vld [vmem:[#allocation2 + $0x20] sm:$0xff]
    %v225 = vld [vmem:[#allocation2 + $0x28] sm:$0xff]
    %v226 = vld [vmem:[#allocation2 + $0x30] sm:$0xff]
    %v227 = vld [vmem:[#allocation2 + $0x38] sm:$0xff]
    %v228 = vld [vmem:[#allocation2 + $0x40] sm:$0xff]
    %v229 = vld [vmem:[#allocation2 + $0x48] sm:$0xff]
    %v230 = vld [vmem:[#allocation2 + $0x50] sm:$0xff]
    %v231 = vld [vmem:[#allocation2 + $0x58] sm:$0xff]
    %v232 = vld [vmem:[#allocation2 + $0x60] sm:$0xff]
    %v233 = vld [vmem:[#allocation2 + $0x68] sm:$0xff]
    %v234 = vld [vmem:[#allocation2 + $0x70] sm:$0xff]
    %v235 = vld [vmem:[#allocation2 + $0x78] sm:$0xff]
    %v236 = vld [vmem:[#allocation2 + $0x80] sm:$0xff]
    %v237 = vld [vmem:[#allocation2 + $0x88] sm:$0xff]
    %v238 = vld [vmem:[#allocation2 + $0x90] sm:$0xff]
    %v239 = vld [vmem:[#allocation2 + $0x98] sm:$0xff]
    %v240 = vld [vmem:[#allocation2 + $0xa0] sm:$0xff]
    %v241 = vld [vmem:[#allocation2 + $0xa8] sm:$0xff]
    %v242 = vld [vmem:[#allocation2 + $0xb0] sm:$0xff]
    %v243 = vld [vmem:[#allocation2 + $0xb8] sm:$0xff]
    %v244 = vld [vmem:[#allocation2 + $0xc0] sm:$0xff]
    %v245 = vld [vmem:[#allocation2 + $0xc8] sm:$0xff]
    %v246 = vld [vmem:[#allocation2 + $0xd0] sm:$0xff]
    %v247 = vld [vmem:[#allocation2 + $0xd8] sm:$0xff]
    %v248 = vld [vmem:[#allocation2 + $0xe0] sm:$0xff]
    %v249 = vld [vmem:[#allocation2 + $0xe8] sm:$0xff]
    %v250 = vld [vmem:[#allocation2 + $0xf0] sm:$0xff]
    %v251 = vld [vmem:[#allocation2 + $0xf8] sm:$0xff]
    %v252 = vld [vmem:[#allocation2 + $0x100] sm:$0xff]
    %v253 = vld [vmem:[#allocation2 + $0x108] sm:$0xff]
    %v254 = vld [vmem:[#allocation2 + $0x110] sm:$0xff]
    %v255 = vld [vmem:[#allocation2 + $0x118] sm:$0xff]
    %v256 = vld [vmem:[#allocation2 + $0x120] sm:$0xff]
    %v257 = vld [vmem:[#allocation2 + $0x128] sm:$0xff]
    %v258 = vld [vmem:[#allocation2 + $0x130] sm:$0xff]
    %v259 = vld [vmem:[#allocation2 + $0x138] sm:$0xff]
    %v260 = vld [vmem:[#allocation2 + $0x140] sm:$0xff]
    %v261 = vld [vmem:[#allocation2 + $0x148] sm:$0xff]
    %v262 = vld [vmem:[#allocation2 + $0x150] sm:$0xff]
    %v263 = vld [vmem:[#allocation2 + $0x158] sm:$0xff]
    %v264 = vld [vmem:[#allocation2 + $0x160] sm:$0xff]
    %v265 = vld [vmem:[#allocation2 + $0x168] sm:$0xff]
    %v266 = vld [vmem:[#allocation2 + $0x170] sm:$0xff]
    %v267 = vld [vmem:[#allocation2 + $0x178] sm:$0xff]
    %v268 = vld [vmem:[#allocation2 + $0x180] sm:$0xff]
    %v269 = vld [vmem:[#allocation2 + $0x188] sm:$0xff]
    %v270 = vld [vmem:[#allocation2 + $0x190] sm:$0xff]
    %v271 = vld [vmem:[#allocation2 + $0x198] sm:$0xff]
    %v272 = vld [vmem:[#allocation2 + $0x1a0] sm:$0xff]
    %v273 = vld [vmem:[#allocation2 + $0x1a8] sm:$0xff]
    %v274 = vld [vmem:[#allocation2 + $0x1b0] sm:$0xff]
    %v275 = vld [vmem:[#allocation2 + $0x1b8] sm:$0xff]
    %v276 = vld [vmem:[#allocation2 + $0x1c0] sm:$0xff]
    %v277 = vld [vmem:[#allocation2 + $0x1c8] sm:$0xff]
    %v278 = vld [vmem:[#allocation2 + $0x1d0] sm:$0xff]
    %v279 = vld [vmem:[#allocation2 + $0x1d8] sm:$0xff]
    %v280 = vld [vmem:[#allocation2 + $0x1e0] sm:$0xff]
    %v281 = vld [vmem:[#allocation2 + $0x1e8] sm:$0xff]
    %v282 = vld [vmem:[#allocation2 + $0x1f0] sm:$0xff]
    %v283 = vld [vmem:[#allocation2 + $0x1f8] sm:$0xff]
    %v284 = vld [vmem:[#allocation2 + $0x200] sm:$0xff]
    %v285 = vld [vmem:[#allocation2 + $0x208] sm:$0xff]
    %v286 = vld [vmem:[#allocation2 + $0x210] sm:$0xff]
    %v287 = vld [vmem:[#allocation2 + $0x218] sm:$0xff]
    %v288 = vld [vmem:[#allocation2 + $0x220] sm:$0xff]
    %v289 = vld [vmem:[#allocation2 + $0x228] sm:$0xff]
    %v290 = vld [vmem:[#allocation2 + $0x230] sm:$0xff]
    %v291 = vld [vmem:[#allocation2 + $0x238] sm:$0xff]
    %v292 = vld [vmem:[#allocation2 + $0x240] sm:$0xff]
    %v293 = vld [vmem:[#allocation2 + $0x248] sm:$0xff]
    %v294 = vld [vmem:[#allocation2 + $0x250] sm:$0xff]
    %v295 = vld [vmem:[#allocation2 + $0x258] sm:$0xff]
    %v296 = vld [vmem:[#allocation2 + $0x260] sm:$0xff]
    %v297 = vld [vmem:[#allocation2 + $0x268] sm:$0xff]
    %v298 = vld [vmem:[#allocation2 + $0x270] sm:$0xff]
    %v299 = vld [vmem:[#allocation2 + $0x278] sm:$0xff]
    %v300 = vld [vmem:[#allocation2 + $0x280] sm:$0xff]
    %v301 = vld [vmem:[#allocation2 + $0x288] sm:$0xff]
    %v302 = vld [vmem:[#allocation2 + $0x290] sm:$0xff]
    %v303 = vld [vmem:[#allocation2 + $0x298] sm:$0xff]
    %v304 = vld [vmem:[#allocation2 + $0x2a0] sm:$0xff]
    %v305 = vld [vmem:[#allocation2 + $0x2a8] sm:$0xff]
    %v306 = vld [vmem:[#allocation2 + $0x2b0] sm:$0xff]
    %v307 = vld [vmem:[#allocation2 + $0x2b8] sm:$0xff]
    %v308 = vld [vmem:[#allocation2 + $0x2c0] sm:$0xff]
    %v309 = vld [vmem:[#allocation2 + $0x2c8] sm:$0xff]
    %v310 = vld [vmem:[#allocation2 + $0x2d0] sm:$0xff]
    %v311 = vld [vmem:[#allocation2 + $0x2d8] sm:$0xff]
    %v312 = vld [vmem:[#allocation2 + $0x2e0] sm:$0xff]
    %v313 = vld [vmem:[#allocation2 + $0x2e8] sm:$0xff]
    %v314 = vld [vmem:[#allocation2 + $0x2f0] sm:$0xff]
    %v315 = vld [vmem:[#allocation2 + $0x2f8] sm:$0xff]
    %v316 = vld [vmem:[#allocation2 + $0x300] sm:$0xff]
    %v317 = vld [vmem:[#allocation2 + $0x308] sm:$0xff]
    %v318 = vld [vmem:[#allocation2 + $0x310] sm:$0xff]
    %v319 = vld [vmem:[#allocation2 + $0x318] sm:$0xff]
    %v320 = vld [vmem:[#allocation2 + $0x320] sm:$0xff]
    %v321 = vld [vmem:[#allocation2 + $0x328] sm:$0xff]
    %v322 = vld [vmem:[#allocation2 + $0x330] sm:$0xff]
    %v323 = vld [vmem:[#allocation2 + $0x338] sm:$0xff]
    %v324 = vld [vmem:[#allocation2 + $0x340] sm:$0xff]
    %v325 = vld [vmem:[#allocation2 + $0x348] sm:$0xff]
    %v326 = vld [vmem:[#allocation2 + $0x350] sm:$0xff]
    %v327 = vld [vmem:[#allocation2 + $0x358] sm:$0xff]
    %v328 = vld [vmem:[#allocation2 + $0x360] sm:$0xff]
    %v329 = vld [vmem:[#allocation2 + $0x368] sm:$0xff]
    %v330 = vld [vmem:[#allocation2 + $0x370] sm:$0xff]
    %v331 = vld [vmem:[#allocation2 + $0x378] sm:$0xff]
    %v332 = vld [vmem:[#allocation2 + $0x380] sm:$0xff]
    %v333 = vld [vmem:[#allocation2 + $0x388] sm:$0xff]
    %v334 = vld [vmem:[#allocation2 + $0x390] sm:$0xff]
    %v335 = vld [vmem:[#allocation2 + $0x398] sm:$0xff]
    %v336 = vld [vmem:[#allocation2 + $0x3a0] sm:$0xff]
    %v337 = vld [vmem:[#allocation2 + $0x3a8] sm:$0xff]
    %v338 = vld [vmem:[#allocation2 + $0x3b0] sm:$0xff]
    %v339 = vld [vmem:[#allocation2 + $0x3b8] sm:$0xff]
    %v340 = vld [vmem:[#allocation2 + $0x3c0] sm:$0xff]
    %v341 = vld [vmem:[#allocation2 + $0x3c8] sm:$0xff]
    %v342 = vld [vmem:[#allocation2 + $0x3d0] sm:$0xff]
    %v343 = vld [vmem:[#allocation2 + $0x3d8] sm:$0xff]
    %v344 = vld [vmem:[#allocation2 + $0x3e0] sm:$0xff]
    %v345 = vld [vmem:[#allocation2 + $0x3e8] sm:$0xff]
    %v346 = vld [vmem:[#allocation2 + $0x3f0] sm:$0xff]
    %v347 = vld [vmem:[#allocation2 + $0x3f8] sm:$0xff]
    %v348 = vld [vmem:[#allocation2 + $0x400] sm:$0xff]
    %v349 = vld [vmem:[#allocation2 + $0x408] sm:$0xff]
    %v350 = vld [vmem:[#allocation2 + $0x410] sm:$0xff]
    %v351 = vld [vmem:[#allocation2 + $0x418] sm:$0xff]
    %v352 = vld [vmem:[#allocation2 + $0x420] sm:$0xff]
    %v353 = vld [vmem:[#allocation2 + $0x428] sm:$0xff]
    %v354 = vld [vmem:[#allocation2 + $0x430] sm:$0xff]
    %v355 = vld [vmem:[#allocation2 + $0x438] sm:$0xff]
    %v356 = vld [vmem:[#allocation2 + $0x440] sm:$0xff]
    %v357 = vld [vmem:[#allocation2 + $0x448] sm:$0xff]
    %v358 = vld [vmem:[#allocation2 + $0x450] sm:$0xff]
    %v359 = vld [vmem:[#allocation2 + $0x458] sm:$0xff]
    %v360 = vld [vmem:[#allocation2 + $0x460] sm:$0xff]
    %v361 = vld [vmem:[#allocation2 + $0x468] sm:$0xff]
    %v362 = vld [vmem:[#allocation2 + $0x470] sm:$0xff]
    %v363 = vld [vmem:[#allocation2 + $0x478] sm:$0xff]
    %v364 = vld [vmem:[#allocation2 + $0x480] sm:$0xff]
    %v365 = vld [vmem:[#allocation2 + $0x488] sm:$0xff]
    %v366 = vld [vmem:[#allocation2 + $0x490] sm:$0xff]
    %v367 = vld [vmem:[#allocation2 + $0x498] sm:$0xff]
    %v368 = vld [vmem:[#allocation2 + $0x4a0] sm:$0xff]
    %v369 = vld [vmem:[#allocation2 + $0x4a8] sm:$0xff]
    %v370 = vld [vmem:[#allocation2 + $0x4b0] sm:$0xff]
    %v371 = vld [vmem:[#allocation2 + $0x4b8] sm:$0xff]
    %v372 = vld [vmem:[#allocation2 + $0x4c0] sm:$0xff]
    %v373 = vld [vmem:[#allocation2 + $0x4c8] sm:$0xff]
    %v374 = vld [vmem:[#allocation2 + $0x4d0] sm:$0xff]
    %v375 = vld [vmem:[#allocation2 + $0x4d8] sm:$0xff]
    %v376 = vld [vmem:[#allocation2 + $0x4e0] sm:$0xff]
    %v377 = vld [vmem:[#allocation2 + $0x4e8] sm:$0xff]
    %v378 = vld [vmem:[#allocation2 + $0x4f0] sm:$0xff]
    %v379 = vld [vmem:[#allocation2 + $0x4f8] sm:$0xff]
    %v380 = vld [vmem:[#allocation2 + $0x500] sm:$0xff]
    %v381 = vld [vmem:[#allocation2 + $0x508] sm:$0xff]
    %v382 = vld [vmem:[#allocation2 + $0x510] sm:$0xff]
    %v383 = vld [vmem:[#allocation2 + $0x518] sm:$0xff]
    %v384 = vld [vmem:[#allocation2 + $0x520] sm:$0xff]
    %v385 = vld [vmem:[#allocation2 + $0x528] sm:$0xff]
    %v386 = vld [vmem:[#allocation2 + $0x530] sm:$0xff]
    %v387 = vld [vmem:[#allocation2 + $0x538] sm:$0xff]
    %v388 = vld [vmem:[#allocation2 + $0x540] sm:$0xff]
    %v389 = vld [vmem:[#allocation2 + $0x548] sm:$0xff]
    %v390 = vld [vmem:[#allocation2 + $0x550] sm:$0xff]
    %v391 = vld [vmem:[#allocation2 + $0x558] sm:$0xff]
    %v392 = vld [vmem:[#allocation2 + $0x560] sm:$0xff]
    %v393 = vld [vmem:[#allocation2 + $0x568] sm:$0xff]
    %v394 = vld [vmem:[#allocation2 + $0x570] sm:$0xff]
    %v395 = vld [vmem:[#allocation2 + $0x578] sm:$0xff]
    %v396 = vld [vmem:[#allocation2 + $0x580] sm:$0xff]
    %v397 = vld [vmem:[#allocation2 + $0x588] sm:$0xff]
    %v398 = vld [vmem:[#allocation2 + $0x590] sm:$0xff]
    %v399 = vld [vmem:[#allocation2 + $0x598] sm:$0xff]
    %v400 = vld [vmem:[#allocation2 + $0x5a0] sm:$0xff]
    %v401 = vld [vmem:[#allocation2 + $0x5a8] sm:$0xff]
    %v402 = vld [vmem:[#allocation2 + $0x5b0] sm:$0xff]
    %v403 = vld [vmem:[#allocation2 + $0x5b8] sm:$0xff]
    %v404 = vld [vmem:[#allocation2 + $0x5c0] sm:$0xff]
    %v405 = vld [vmem:[#allocation2 + $0x5c8] sm:$0xff]
    %v406 = vld [vmem:[#allocation2 + $0x5d0] sm:$0xff]
    %v407 = vld [vmem:[#allocation2 + $0x5d8] sm:$0xff]
    %v408 = vld [vmem:[#allocation2 + $0x5e0] sm:$0xff]
    %v409 = vld [vmem:[#allocation2 + $0x5e8] sm:$0xff]
    %v410 = vld [vmem:[#allocation2 + $0x5f0] sm:$0xff]
    %v411 = vld [vmem:[#allocation2 + $0x5f8] sm:$0xff]
    %v412 = vld [vmem:[#allocation2 + $0x600] sm:$0xff]
    %v413 = vld [vmem:[#allocation2 + $0x608] sm:$0xff]
    %v414 = vld [vmem:[#allocation2 + $0x610] sm:$0xff]
    %v415 = vld [vmem:[#allocation2 + $0x618] sm:$0xff]
    %v416 = vld [vmem:[#allocation2 + $0x620] sm:$0xff]
    %v417 = vld [vmem:[#allocation2 + $0x628] sm:$0xff]
    %v418 = vld [vmem:[#allocation2 + $0x630] sm:$0xff]
    %v419 = vld [vmem:[#allocation2 + $0x638] sm:$0xff]
    %v420 = vld [vmem:[#allocation2 + $0x640] sm:$0xff]
    %v421 = vld [vmem:[#allocation2 + $0x648] sm:$0xff]
    %v422 = vld [vmem:[#allocation2 + $0x650] sm:$0xff]
    %v423 = vld [vmem:[#allocation2 + $0x658] sm:$0xff]
    %v424 = vld [vmem:[#allocation2 + $0x660] sm:$0xff]
    %v425 = vld [vmem:[#allocation2 + $0x668] sm:$0xff]
    %v426 = vld [vmem:[#allocation2 + $0x670] sm:$0xff]
    %v427 = vld [vmem:[#allocation2 + $0x678] sm:$0xff]
    %v428 = vld [vmem:[#allocation2 + $0x680] sm:$0xff]
    %v429 = vld [vmem:[#allocation2 + $0x688] sm:$0xff]
    %v430 = vld [vmem:[#allocation2 + $0x690] sm:$0xff]
    %v431 = vld [vmem:[#allocation2 + $0x698] sm:$0xff]
    %v432 = vld [vmem:[#allocation2 + $0x6a0] sm:$0xff]
    %v433 = vld [vmem:[#allocation2 + $0x6a8] sm:$0xff]
    %v434 = vld [vmem:[#allocation2 + $0x6b0] sm:$0xff]
    %v435 = vld [vmem:[#allocation2 + $0x6b8] sm:$0xff]
    %v436 = vld [vmem:[#allocation2 + $0x6c0] sm:$0xff]
    %v437 = vld [vmem:[#allocation2 + $0x6c8] sm:$0xff]
    %v438 = vld [vmem:[#allocation2 + $0x6d0] sm:$0xff]
    %v439 = vld [vmem:[#allocation2 + $0x6d8] sm:$0xff]
    %v440 = vld [vmem:[#allocation2 + $0x6e0] sm:$0xff]
    %v441 = vld [vmem:[#allocation2 + $0x6e8] sm:$0xff]
    %v442 = vld [vmem:[#allocation2 + $0x6f0] sm:$0xff]
    %v443 = vld [vmem:[#allocation2 + $0x6f8] sm:$0xff]
    %v444 = vld [vmem:[%s3] sm:$0xf]
    %v446 = vperm.slane %v444, 0
    %v447 = vperm.slane %v444, 1
    %v448 = vperm.slane %v444, 2
    %v449 = vperm.slane %v444, 3
    %v678 = vunpack.c.l.b16 %v220
    %v679 = vunpack.c.h.b16 %v220
    %v680 = vunpack.c.l.b16 %v221
    %v681 = vunpack.c.h.b16 %v221
    %v682 = vunpack.c.l.b16 %v222
    %v683 = vunpack.c.h.b16 %v222
    %v684 = vunpack.c.l.b16 %v223
    %v685 = vunpack.c.h.b16 %v223
    %v686 = vunpack.c.l.b16 %v224
    %v687 = vunpack.c.h.b16 %v224
    %v688 = vunpack.c.l.b16 %v225
    %v689 = vunpack.c.h.b16 %v225
    %v690 = vunpack.c.l.b16 %v226
    %v691 = vunpack.c.h.b16 %v226
    %v692 = vunpack.c.l.b16 %v227
    %v693 = vunpack.c.h.b16 %v227
    %v694 = vunpack.c.l.b16 %v228
    %v695 = vunpack.c.h.b16 %v228
    %v696 = vunpack.c.l.b16 %v229
    %v697 = vunpack.c.h.b16 %v229
    %v698 = vunpack.c.l.b16 %v230
    %v699 = vunpack.c.h.b16 %v230
    %v700 = vunpack.c.l.b16 %v231
    %v701 = vunpack.c.h.b16 %v231
    %v702 = vunpack.c.l.b16 %v232
    %v703 = vunpack.c.h.b16 %v232
    %v704 = vunpack.c.l.b16 %v233
    %v705 = vunpack.c.h.b16 %v233
    %v706 = vunpack.c.l.b16 %v234
    %v707 = vunpack.c.h.b16 %v234
    %v708 = vunpack.c.l.b16 %v235
    %v709 = vunpack.c.h.b16 %v235
    %v710 = vunpack.c.l.b16 %v236
    %v711 = vunpack.c.h.b16 %v236
    %v712 = vunpack.c.l.b16 %v237
    %v713 = vunpack.c.h.b16 %v237
    %v714 = vunpack.c.l.b16 %v238
    %v715 = vunpack.c.h.b16 %v238
    %v716 = vunpack.c.l.b16 %v239
    %v717 = vunpack.c.h.b16 %v239
    %v718 = vunpack.c.l.b16 %v240
    %v719 = vunpack.c.h.b16 %v240
    %v720 = vunpack.c.l.b16 %v241
    %v721 = vunpack.c.h.b16 %v241
    %v722 = vunpack.c.l.b16 %v242
    %v723 = vunpack.c.h.b16 %v242
    %v724 = vunpack.c.l.b16 %v243
    %v725 = vunpack.c.h.b16 %v243
    %v726 = vunpack.c.l.b16 %v244
    %v727 = vunpack.c.h.b16 %v244
    %v728 = vunpack.c.l.b16 %v245
    %v729 = vunpack.c.h.b16 %v245
    %v730 = vunpack.c.l.b16 %v246
    %v731 = vunpack.c.h.b16 %v246
    %v732 = vunpack.c.l.b16 %v247
    %v733 = vunpack.c.h.b16 %v247
    %v734 = vunpack.c.l.b16 %v248
    %v735 = vunpack.c.h.b16 %v248
    %v736 = vunpack.c.l.b16 %v249
    %v737 = vunpack.c.h.b16 %v249
    %v738 = vunpack.c.l.b16 %v250
    %v739 = vunpack.c.h.b16 %v250
    %v740 = vunpack.c.l.b16 %v251
    %v741 = vunpack.c.h.b16 %v251
    %v742 = vunpack.c.l.b16 %v252
    %v743 = vunpack.c.h.b16 %v252
    %v744 = vunpack.c.l.b16 %v253
    %v745 = vunpack.c.h.b16 %v253
    %v746 = vunpack.c.l.b16 %v254
    %v747 = vunpack.c.h.b16 %v254
    %v748 = vunpack.c.l.b16 %v255
    %v749 = vunpack.c.h.b16 %v255
    %v750 = vunpack.c.l.b16 %v256
    %v751 = vunpack.c.h.b16 %v256
    %v752 = vunpack.c.l.b16 %v257
    %v753 = vunpack.c.h.b16 %v257
    %v754 = vunpack.c.l.b16 %v258
    %v755 = vunpack.c.h.b16 %v258
    %v756 = vunpack.c.l.b16 %v259
    %v757 = vunpack.c.h.b16 %v259
    %v758 = vunpack.c.l.b16 %v260
    %v759 = vunpack.c.h.b16 %v260
    %v760 = vunpack.c.l.b16 %v261
    %v761 = vunpack.c.h.b16 %v261
    %v762 = vunpack.c.l.b16 %v262
    %v763 = vunpack.c.h.b16 %v262
    %v764 = vunpack.c.l.b16 %v263
    %v765 = vunpack.c.h.b16 %v263
    %v766 = vunpack.c.l.b16 %v264
    %v767 = vunpack.c.h.b16 %v264
    %v768 = vunpack.c.l.b16 %v265
    %v769 = vunpack.c.h.b16 %v265
    %v770 = vunpack.c.l.b16 %v266
    %v771 = vunpack.c.h.b16 %v266
    %v772 = vunpack.c.l.b16 %v267
    %v773 = vunpack.c.h.b16 %v267
    %v774 = vunpack.c.l.b16 %v268
    %v775 = vunpack.c.h.b16 %v268
    %v776 = vunpack.c.l.b16 %v269
    %v777 = vunpack.c.h.b16 %v269
    %v778 = vunpack.c.l.b16 %v270
    %v779 = vunpack.c.h.b16 %v270
    %v780 = vunpack.c.l.b16 %v271
    %v781 = vunpack.c.h.b16 %v271
    %v782 = vunpack.c.l.b16 %v272
    %v783 = vunpack.c.h.b16 %v272
    %v784 = vunpack.c.l.b16 %v273
    %v785 = vunpack.c.h.b16 %v273
    %v786 = vunpack.c.l.b16 %v274
    %v787 = vunpack.c.h.b16 %v274
    %v788 = vunpack.c.l.b16 %v275
    %v789 = vunpack.c.h.b16 %v275
    %v790 = vunpack.c.l.b16 %v276
    %v791 = vunpack.c.h.b16 %v276
    %v792 = vunpack.c.l.b16 %v277
    %v793 = vunpack.c.h.b16 %v277
    %v794 = vunpack.c.l.b16 %v278
    %v795 = vunpack.c.h.b16 %v278
    %v796 = vunpack.c.l.b16 %v279
    %v797 = vunpack.c.h.b16 %v279
    %v798 = vunpack.c.l.b16 %v280
    %v799 = vunpack.c.h.b16 %v280
    %v800 = vunpack.c.l.b16 %v281
    %v801 = vunpack.c.h.b16 %v281
    %v802 = vunpack.c.l.b16 %v282
    %v803 = vunpack.c.h.b16 %v282
    %v804 = vunpack.c.l.b16 %v283
    %v805 = vunpack.c.h.b16 %v283
    %v806 = vunpack.c.l.b16 %v284
    %v807 = vunpack.c.h.b16 %v284
    %v808 = vunpack.c.l.b16 %v285
    %v809 = vunpack.c.h.b16 %v285
    %v810 = vunpack.c.l.b16 %v286
    %v811 = vunpack.c.h.b16 %v286
    %v812 = vunpack.c.l.b16 %v287
    %v813 = vunpack.c.h.b16 %v287
    %v814 = vunpack.c.l.b16 %v288
    %v815 = vunpack.c.h.b16 %v288
    %v816 = vunpack.c.l.b16 %v289
    %v817 = vunpack.c.h.b16 %v289
    %v818 = vunpack.c.l.b16 %v290
    %v819 = vunpack.c.h.b16 %v290
    %v820 = vunpack.c.l.b16 %v291
    %v821 = vunpack.c.h.b16 %v291
    %v822 = vunpack.c.l.b16 %v292
    %v823 = vunpack.c.h.b16 %v292
    %v824 = vunpack.c.l.b16 %v293
    %v825 = vunpack.c.h.b16 %v293
    %v826 = vunpack.c.l.b16 %v294
    %v827 = vunpack.c.h.b16 %v294
    %v828 = vunpack.c.l.b16 %v295
    %v829 = vunpack.c.h.b16 %v295
    %v830 = vunpack.c.l.b16 %v296
    %v831 = vunpack.c.h.b16 %v296
    %v832 = vunpack.c.l.b16 %v297
    %v833 = vunpack.c.h.b16 %v297
    %v834 = vunpack.c.l.b16 %v298
    %v835 = vunpack.c.h.b16 %v298
    %v836 = vunpack.c.l.b16 %v299
    %v837 = vunpack.c.h.b16 %v299
    %v838 = vunpack.c.l.b16 %v300
    %v839 = vunpack.c.h.b16 %v300
    %v840 = vunpack.c.l.b16 %v301
    %v841 = vunpack.c.h.b16 %v301
    %v842 = vunpack.c.l.b16 %v302
    %v843 = vunpack.c.h.b16 %v302
    %v844 = vunpack.c.l.b16 %v303
    %v845 = vunpack.c.h.b16 %v303
    %v846 = vunpack.c.l.b16 %v304
    %v847 = vunpack.c.h.b16 %v304
    %v848 = vunpack.c.l.b16 %v305
    %v849 = vunpack.c.h.b16 %v305
    %v850 = vunpack.c.l.b16 %v306
    %v851 = vunpack.c.h.b16 %v306
    %v852 = vunpack.c.l.b16 %v307
    %v853 = vunpack.c.h.b16 %v307
    %v854 = vunpack.c.l.b16 %v308
    %v855 = vunpack.c.h.b16 %v308
    %v856 = vunpack.c.l.b16 %v309
    %v857 = vunpack.c.h.b16 %v309
    %v858 = vunpack.c.l.b16 %v310
    %v859 = vunpack.c.h.b16 %v310
    %v860 = vunpack.c.l.b16 %v311
    %v861 = vunpack.c.h.b16 %v311
    %v862 = vunpack.c.l.b16 %v312
    %v863 = vunpack.c.h.b16 %v312
    %v864 = vunpack.c.l.b16 %v313
    %v865 = vunpack.c.h.b16 %v313
    %v866 = vunpack.c.l.b16 %v314
    %v867 = vunpack.c.h.b16 %v314
    %v868 = vunpack.c.l.b16 %v315
    %v869 = vunpack.c.h.b16 %v315
    %v870 = vunpack.c.l.b16 %v316
    %v871 = vunpack.c.h.b16 %v316
    %v872 = vunpack.c.l.b16 %v317
    %v873 = vunpack.c.h.b16 %v317
    %v874 = vunpack.c.l.b16 %v318
    %v875 = vunpack.c.h.b16 %v318
    %v876 = vunpack.c.l.b16 %v319
    %v877 = vunpack.c.h.b16 %v319
    %v878 = vunpack.c.l.b16 %v320
    %v879 = vunpack.c.h.b16 %v320
    %v880 = vunpack.c.l.b16 %v321
    %v881 = vunpack.c.h.b16 %v321
    %v882 = vunpack.c.l.b16 %v322
    %v883 = vunpack.c.h.b16 %v322
    %v884 = vunpack.c.l.b16 %v323
    %v885 = vunpack.c.h.b16 %v323
    %v886 = vunpack.c.l.b16 %v324
    %v887 = vunpack.c.h.b16 %v324
    %v888 = vunpack.c.l.b16 %v325
    %v889 = vunpack.c.h.b16 %v325
    %v890 = vunpack.c.l.b16 %v326
    %v891 = vunpack.c.h.b16 %v326
    %v892 = vunpack.c.l.b16 %v327
    %v893 = vunpack.c.h.b16 %v327
    %v894 = vunpack.c.l.b16 %v328
    %v895 = vunpack.c.h.b16 %v328
    %v896 = vunpack.c.l.b16 %v329
    %v897 = vunpack.c.h.b16 %v329
    %v898 = vunpack.c.l.b16 %v330
    %v899 = vunpack.c.h.b16 %v330
    %v900 = vunpack.c.l.b16 %v331
    %v901 = vunpack.c.h.b16 %v331
    %v902 = vunpack.c.l.b16 %v332
    %v903 = vunpack.c.h.b16 %v332
    %v904 = vunpack.c.l.b16 %v333
    %v905 = vunpack.c.h.b16 %v333
    %v906 = vunpack.c.l.b16 %v334
    %v907 = vunpack.c.h.b16 %v334
    %v908 = vunpack.c.l.b16 %v335
    %v909 = vunpack.c.h.b16 %v335
    %v910 = vunpack.c.l.b16 %v336
    %v911 = vunpack.c.h.b16 %v336
    %v912 = vunpack.c.l.b16 %v337
    %v913 = vunpack.c.h.b16 %v337
    %v914 = vunpack.c.l.b16 %v338
    %v915 = vunpack.c.h.b16 %v338
    %v916 = vunpack.c.l.b16 %v339
    %v917 = vunpack.c.h.b16 %v339
    %v918 = vunpack.c.l.b16 %v340
    %v919 = vunpack.c.h.b16 %v340
    %v920 = vunpack.c.l.b16 %v341
    %v921 = vunpack.c.h.b16 %v341
    %v922 = vunpack.c.l.b16 %v342
    %v923 = vunpack.c.h.b16 %v342
    %v924 = vunpack.c.l.b16 %v343
    %v925 = vunpack.c.h.b16 %v343
    %v926 = vunpack.c.l.b16 %v344
    %v927 = vunpack.c.h.b16 %v344
    %v928 = vunpack.c.l.b16 %v345
    %v929 = vunpack.c.h.b16 %v345
    %v930 = vunpack.c.l.b16 %v346
    %v931 = vunpack.c.h.b16 %v346
    %v932 = vunpack.c.l.b16 %v347
    %v933 = vunpack.c.h.b16 %v347
    %v934 = vunpack.c.l.b16 %v348
    %v935 = vunpack.c.h.b16 %v348
    %v936 = vunpack.c.l.b16 %v349
    %v937 = vunpack.c.h.b16 %v349
    %v938 = vunpack.c.l.b16 %v350
    %v939 = vunpack.c.h.b16 %v350
    %v940 = vunpack.c.l.b16 %v351
    %v941 = vunpack.c.h.b16 %v351
    %v942 = vunpack.c.l.b16 %v352
    %v943 = vunpack.c.h.b16 %v352
    %v944 = vunpack.c.l.b16 %v353
    %v945 = vunpack.c.h.b16 %v353
    %v946 = vunpack.c.l.b16 %v354
    %v947 = vunpack.c.h.b16 %v354
    %v948 = vunpack.c.l.b16 %v355
    %v949 = vunpack.c.h.b16 %v355
    %v950 = vunpack.c.l.b16 %v356
    %v951 = vunpack.c.h.b16 %v356
    %v952 = vunpack.c.l.b16 %v357
    %v953 = vunpack.c.h.b16 %v357
    %v954 = vunpack.c.l.b16 %v358
    %v955 = vunpack.c.h.b16 %v358
    %v956 = vunpack.c.l.b16 %v359
    %v957 = vunpack.c.h.b16 %v359
    %v958 = vunpack.c.l.b16 %v360
    %v959 = vunpack.c.h.b16 %v360
    %v960 = vunpack.c.l.b16 %v361
    %v961 = vunpack.c.h.b16 %v361
    %v962 = vunpack.c.l.b16 %v362
    %v963 = vunpack.c.h.b16 %v362
    %v964 = vunpack.c.l.b16 %v363
    %v965 = vunpack.c.h.b16 %v363
    %v966 = vunpack.c.l.b16 %v364
    %v967 = vunpack.c.h.b16 %v364
    %v968 = vunpack.c.l.b16 %v365
    %v969 = vunpack.c.h.b16 %v365
    %v970 = vunpack.c.l.b16 %v366
    %v971 = vunpack.c.h.b16 %v366
    %v972 = vunpack.c.l.b16 %v367
    %v973 = vunpack.c.h.b16 %v367
    %v974 = vunpack.c.l.b16 %v368
    %v975 = vunpack.c.h.b16 %v368
    %v976 = vunpack.c.l.b16 %v369
    %v977 = vunpack.c.h.b16 %v369
    %v978 = vunpack.c.l.b16 %v370
    %v979 = vunpack.c.h.b16 %v370
    %v980 = vunpack.c.l.b16 %v371
    %v981 = vunpack.c.h.b16 %v371
    %v982 = vunpack.c.l.b16 %v372
    %v983 = vunpack.c.h.b16 %v372
    %v984 = vunpack.c.l.b16 %v373
    %v985 = vunpack.c.h.b16 %v373
    %v986 = vunpack.c.l.b16 %v374
    %v987 = vunpack.c.h.b16 %v374
    %v988 = vunpack.c.l.b16 %v375
    %v989 = vunpack.c.h.b16 %v375
    %v990 = vunpack.c.l.b16 %v376
    %v991 = vunpack.c.h.b16 %v376
    %v992 = vunpack.c.l.b16 %v377
    %v993 = vunpack.c.h.b16 %v377
    %v994 = vunpack.c.l.b16 %v378
    %v995 = vunpack.c.h.b16 %v378
    %v996 = vunpack.c.l.b16 %v379
    %v997 = vunpack.c.h.b16 %v379
    %v998 = vunpack.c.l.b16 %v380
    %v999 = vunpack.c.h.b16 %v380
    %v1000 = vunpack.c.l.b16 %v381
    %v1001 = vunpack.c.h.b16 %v381
    %v1002 = vunpack.c.l.b16 %v382
    %v1003 = vunpack.c.h.b16 %v382
    %v1004 = vunpack.c.l.b16 %v383
    %v1005 = vunpack.c.h.b16 %v383
    %v1006 = vunpack.c.l.b16 %v384
    %v1007 = vunpack.c.h.b16 %v384
    %v1008 = vunpack.c.l.b16 %v385
    %v1009 = vunpack.c.h.b16 %v385
    %v1010 = vunpack.c.l.b16 %v386
    %v1011 = vunpack.c.h.b16 %v386
    %v1012 = vunpack.c.l.b16 %v387
    %v1013 = vunpack.c.h.b16 %v387
    %v1014 = vunpack.c.l.b16 %v388
    %v1015 = vunpack.c.h.b16 %v388
    %v1016 = vunpack.c.l.b16 %v389
    %v1017 = vunpack.c.h.b16 %v389
    %v1018 = vunpack.c.l.b16 %v390
    %v1019 = vunpack.c.h.b16 %v390
    %v1020 = vunpack.c.l.b16 %v391
    %v1021 = vunpack.c.h.b16 %v391
    %v1022 = vunpack.c.l.b16 %v392
    %v1023 = vunpack.c.h.b16 %v392
    %v1024 = vunpack.c.l.b16 %v393
    %v1025 = vunpack.c.h.b16 %v393
    %v1026 = vunpack.c.l.b16 %v394
    %v1027 = vunpack.c.h.b16 %v394
    %v1028 = vunpack.c.l.b16 %v395
    %v1029 = vunpack.c.h.b16 %v395
    %v1030 = vunpack.c.l.b16 %v396
    %v1031 = vunpack.c.h.b16 %v396
    %v1032 = vunpack.c.l.b16 %v397
    %v1033 = vunpack.c.h.b16 %v397
    %v1034 = vunpack.c.l.b16 %v398
    %v1035 = vunpack.c.h.b16 %v398
    %v1036 = vunpack.c.l.b16 %v399
    %v1037 = vunpack.c.h.b16 %v399
    %v1038 = vunpack.c.l.b16 %v400
    %v1039 = vunpack.c.h.b16 %v400
    %v1040 = vunpack.c.l.b16 %v401
    %v1041 = vunpack.c.h.b16 %v401
    %v1042 = vunpack.c.l.b16 %v402
    %v1043 = vunpack.c.h.b16 %v402
    %v1044 = vunpack.c.l.b16 %v403
    %v1045 = vunpack.c.h.b16 %v403
    %v1046 = vunpack.c.l.b16 %v404
    %v1047 = vunpack.c.h.b16 %v404
    %v1048 = vunpack.c.l.b16 %v405
    %v1049 = vunpack.c.h.b16 %v405
    %v1050 = vunpack.c.l.b16 %v406
    %v1051 = vunpack.c.h.b16 %v406
    %v1052 = vunpack.c.l.b16 %v407
    %v1053 = vunpack.c.h.b16 %v407
    %v1054 = vunpack.c.l.b16 %v408
    %v1055 = vunpack.c.h.b16 %v408
    %v1056 = vunpack.c.l.b16 %v409
    %v1057 = vunpack.c.h.b16 %v409
    %v1058 = vunpack.c.l.b16 %v410
    %v1059 = vunpack.c.h.b16 %v410
    %v1060 = vunpack.c.l.b16 %v411
    %v1061 = vunpack.c.h.b16 %v411
    %v1062 = vunpack.c.l.b16 %v412
    %v1063 = vunpack.c.h.b16 %v412
    %v1064 = vunpack.c.l.b16 %v413
    %v1065 = vunpack.c.h.b16 %v413
    %v1066 = vunpack.c.l.b16 %v414
    %v1067 = vunpack.c.h.b16 %v414
    %v1068 = vunpack.c.l.b16 %v415
    %v1069 = vunpack.c.h.b16 %v415
    %v1070 = vunpack.c.l.b16 %v416
    %v1071 = vunpack.c.h.b16 %v416
    %v1072 = vunpack.c.l.b16 %v417
    %v1073 = vunpack.c.h.b16 %v417
    %v1074 = vunpack.c.l.b16 %v418
    %v1075 = vunpack.c.h.b16 %v418
    %v1076 = vunpack.c.l.b16 %v419
    %v1077 = vunpack.c.h.b16 %v419
    %v1078 = vunpack.c.l.b16 %v420
    %v1079 = vunpack.c.h.b16 %v420
    %v1080 = vunpack.c.l.b16 %v421
    %v1081 = vunpack.c.h.b16 %v421
    %v1082 = vunpack.c.l.b16 %v422
    %v1083 = vunpack.c.h.b16 %v422
    %v1084 = vunpack.c.l.b16 %v423
    %v1085 = vunpack.c.h.b16 %v423
    %v1086 = vunpack.c.l.b16 %v424
    %v1087 = vunpack.c.h.b16 %v424
    %v1088 = vunpack.c.l.b16 %v425
    %v1089 = vunpack.c.h.b16 %v425
    %v1090 = vunpack.c.l.b16 %v426
    %v1091 = vunpack.c.h.b16 %v426
    %v1092 = vunpack.c.l.b16 %v427
    %v1093 = vunpack.c.h.b16 %v427
    %v1094 = vunpack.c.l.b16 %v428
    %v1095 = vunpack.c.h.b16 %v428
    %v1096 = vunpack.c.l.b16 %v429
    %v1097 = vunpack.c.h.b16 %v429
    %v1098 = vunpack.c.l.b16 %v430
    %v1099 = vunpack.c.h.b16 %v430
    %v1100 = vunpack.c.l.b16 %v431
    %v1101 = vunpack.c.h.b16 %v431
    %v1102 = vunpack.c.l.b16 %v432
    %v1103 = vunpack.c.h.b16 %v432
    %v1104 = vunpack.c.l.b16 %v433
    %v1105 = vunpack.c.h.b16 %v433
    %v1106 = vunpack.c.l.b16 %v434
    %v1107 = vunpack.c.h.b16 %v434
    %v1108 = vunpack.c.l.b16 %v435
    %v1109 = vunpack.c.h.b16 %v435
    %v1110 = vunpack.c.l.b16 %v436
    %v1111 = vunpack.c.h.b16 %v436
    %v1112 = vunpack.c.l.b16 %v437
    %v1113 = vunpack.c.h.b16 %v437
    %v1114 = vunpack.c.l.b16 %v438
    %v1115 = vunpack.c.h.b16 %v438
    %v1116 = vunpack.c.l.b16 %v439
    %v1117 = vunpack.c.h.b16 %v439
    %v1118 = vunpack.c.l.b16 %v440
    %v1119 = vunpack.c.h.b16 %v440
    %v1120 = vunpack.c.l.b16 %v441
    %v1121 = vunpack.c.h.b16 %v441
    %v1122 = vunpack.c.l.b16 %v442
    %v1123 = vunpack.c.h.b16 %v442
    %v1124 = vunpack.c.l.b16 %v443
    %v1125 = vunpack.c.h.b16 %v443
    %v1126 = vpack.c.b16 %v682, %v678
    %v1127 = vpack.c.b16 %v683, %v679
    %v1128 = vpack.c.b16 %v684, %v680
    %v1129 = vpack.c.b16 %v685, %v681
    %v1130 = vpack.c.b16 %v690, %v686
    %v1131 = vpack.c.b16 %v691, %v687
    %v1132 = vpack.c.b16 %v692, %v688
    %v1133 = vpack.c.b16 %v693, %v689
    %v1134 = vpack.c.b16 %v698, %v694
    %v1135 = vpack.c.b16 %v699, %v695
    %v1136 = vpack.c.b16 %v700, %v696
    %v1137 = vpack.c.b16 %v701, %v697
    %v1138 = vpack.c.b16 %v706, %v702
    %v1139 = vpack.c.b16 %v707, %v703
    %v1140 = vpack.c.b16 %v708, %v704
    %v1141 = vpack.c.b16 %v709, %v705
    %v1142 = vpack.c.b16 %v714, %v710
    %v1143 = vpack.c.b16 %v715, %v711
    %v1144 = vpack.c.b16 %v716, %v712
    %v1145 = vpack.c.b16 %v717, %v713
    %v1146 = vpack.c.b16 %v722, %v718
    %v1147 = vpack.c.b16 %v723, %v719
    %v1148 = vpack.c.b16 %v724, %v720
    %v1149 = vpack.c.b16 %v725, %v721
    %v1150 = vpack.c.b16 %v730, %v726
    %v1151 = vpack.c.b16 %v731, %v727
    %v1152 = vpack.c.b16 %v732, %v728
    %v1153 = vpack.c.b16 %v733, %v729
    %v1154 = vpack.c.b16 %v738, %v734
    %v1155 = vpack.c.b16 %v739, %v735
    %v1156 = vpack.c.b16 %v740, %v736
    %v1157 = vpack.c.b16 %v741, %v737
    %v1158 = vpack.c.b16 %v746, %v742
    %v1159 = vpack.c.b16 %v747, %v743
    %v1160 = vpack.c.b16 %v748, %v744
    %v1161 = vpack.c.b16 %v749, %v745
    %v1162 = vpack.c.b16 %v754, %v750
    %v1163 = vpack.c.b16 %v755, %v751
    %v1164 = vpack.c.b16 %v756, %v752
    %v1165 = vpack.c.b16 %v757, %v753
    %v1166 = vpack.c.b16 %v762, %v758
    %v1167 = vpack.c.b16 %v763, %v759
    %v1168 = vpack.c.b16 %v764, %v760
    %v1169 = vpack.c.b16 %v765, %v761
    %v1170 = vpack.c.b16 %v770, %v766
    %v1171 = vpack.c.b16 %v771, %v767
    %v1172 = vpack.c.b16 %v772, %v768
    %v1173 = vpack.c.b16 %v773, %v769
    %v1174 = vpack.c.b16 %v778, %v774
    %v1175 = vpack.c.b16 %v779, %v775
    %v1176 = vpack.c.b16 %v780, %v776
    %v1177 = vpack.c.b16 %v781, %v777
    %v1178 = vpack.c.b16 %v786, %v782
    %v1179 = vpack.c.b16 %v787, %v783
    %v1180 = vpack.c.b16 %v788, %v784
    %v1181 = vpack.c.b16 %v789, %v785
    %v1182 = vpack.c.b16 %v794, %v790
    %v1183 = vpack.c.b16 %v795, %v791
    %v1184 = vpack.c.b16 %v796, %v792
    %v1185 = vpack.c.b16 %v797, %v793
    %v1186 = vpack.c.b16 %v802, %v798
    %v1187 = vpack.c.b16 %v803, %v799
    %v1188 = vpack.c.b16 %v804, %v800
    %v1189 = vpack.c.b16 %v805, %v801
    %v1190 = vpack.c.b16 %v810, %v806
    %v1191 = vpack.c.b16 %v811, %v807
    %v1192 = vpack.c.b16 %v812, %v808
    %v1193 = vpack.c.b16 %v813, %v809
    %v1194 = vpack.c.b16 %v818, %v814
    %v1195 = vpack.c.b16 %v819, %v815
    %v1196 = vpack.c.b16 %v820, %v816
    %v1197 = vpack.c.b16 %v821, %v817
    %v1198 = vpack.c.b16 %v826, %v822
    %v1199 = vpack.c.b16 %v827, %v823
    %v1200 = vpack.c.b16 %v828, %v824
    %v1201 = vpack.c.b16 %v829, %v825
    %v1202 = vpack.c.b16 %v834, %v830
    %v1203 = vpack.c.b16 %v835, %v831
    %v1204 = vpack.c.b16 %v836, %v832
    %v1205 = vpack.c.b16 %v837, %v833
    %v1206 = vpack.c.b16 %v842, %v838
    %v1207 = vpack.c.b16 %v843, %v839
    %v1208 = vpack.c.b16 %v844, %v840
    %v1209 = vpack.c.b16 %v845, %v841
    %v1210 = vpack.c.b16 %v850, %v846
    %v1211 = vpack.c.b16 %v851, %v847
    %v1212 = vpack.c.b16 %v852, %v848
    %v1213 = vpack.c.b16 %v853, %v849
    %v1214 = vpack.c.b16 %v858, %v854
    %v1215 = vpack.c.b16 %v859, %v855
    %v1216 = vpack.c.b16 %v860, %v856
    %v1217 = vpack.c.b16 %v861, %v857
    %v1218 = vpack.c.b16 %v866, %v862
    %v1219 = vpack.c.b16 %v867, %v863
    %v1220 = vpack.c.b16 %v868, %v864
    %v1221 = vpack.c.b16 %v869, %v865
    %v1222 = vpack.c.b16 %v874, %v870
    %v1223 = vpack.c.b16 %v875, %v871
    %v1224 = vpack.c.b16 %v876, %v872
    %v1225 = vpack.c.b16 %v877, %v873
    %v1226 = vpack.c.b16 %v882, %v878
    %v1227 = vpack.c.b16 %v883, %v879
    %v1228 = vpack.c.b16 %v884, %v880
    %v1229 = vpack.c.b16 %v885, %v881
    %v1230 = vpack.c.b16 %v890, %v886
    %v1231 = vpack.c.b16 %v891, %v887
    %v1232 = vpack.c.b16 %v892, %v888
    %v1233 = vpack.c.b16 %v893, %v889
    %v1234 = vpack.c.b16 %v898, %v894
    %v1235 = vpack.c.b16 %v899, %v895
    %v1236 = vpack.c.b16 %v900, %v896
    %v1237 = vpack.c.b16 %v901, %v897
    %v1238 = vpack.c.b16 %v906, %v902
    %v1239 = vpack.c.b16 %v907, %v903
    %v1240 = vpack.c.b16 %v908, %v904
    %v1241 = vpack.c.b16 %v909, %v905
    %v1242 = vpack.c.b16 %v914, %v910
    %v1243 = vpack.c.b16 %v915, %v911
    %v1244 = vpack.c.b16 %v916, %v912
    %v1245 = vpack.c.b16 %v917, %v913
    %v1246 = vpack.c.b16 %v922, %v918
    %v1247 = vpack.c.b16 %v923, %v919
    %v1248 = vpack.c.b16 %v924, %v920
    %v1249 = vpack.c.b16 %v925, %v921
    %v1250 = vpack.c.b16 %v930, %v926
    %v1251 = vpack.c.b16 %v931, %v927
    %v1252 = vpack.c.b16 %v932, %v928
    %v1253 = vpack.c.b16 %v933, %v929
    %v1254 = vpack.c.b16 %v938, %v934
    %v1255 = vpack.c.b16 %v939, %v935
    %v1256 = vpack.c.b16 %v940, %v936
    %v1257 = vpack.c.b16 %v941, %v937
    %v1258 = vpack.c.b16 %v946, %v942
    %v1259 = vpack.c.b16 %v947, %v943
    %v1260 = vpack.c.b16 %v948, %v944
    %v1261 = vpack.c.b16 %v949, %v945
    %v1262 = vpack.c.b16 %v954, %v950
    %v1263 = vpack.c.b16 %v955, %v951
    %v1264 = vpack.c.b16 %v956, %v952
    %v1265 = vpack.c.b16 %v957, %v953
    %v1266 = vpack.c.b16 %v962, %v958
    %v1267 = vpack.c.b16 %v963, %v959
    %v1268 = vpack.c.b16 %v964, %v960
    %v1269 = vpack.c.b16 %v965, %v961
    %v1270 = vpack.c.b16 %v970, %v966
    %v1271 = vpack.c.b16 %v971, %v967
    %v1272 = vpack.c.b16 %v972, %v968
    %v1273 = vpack.c.b16 %v973, %v969
    %v1274 = vpack.c.b16 %v978, %v974
    %v1275 = vpack.c.b16 %v979, %v975
    %v1276 = vpack.c.b16 %v980, %v976
    %v1277 = vpack.c.b16 %v981, %v977
    %v1278 = vpack.c.b16 %v986, %v982
    %v1279 = vpack.c.b16 %v987, %v983
    %v1280 = vpack.c.b16 %v988, %v984
    %v1281 = vpack.c.b16 %v989, %v985
    %v1282 = vpack.c.b16 %v994, %v990
    %v1283 = vpack.c.b16 %v995, %v991
    %v1284 = vpack.c.b16 %v996, %v992
    %v1285 = vpack.c.b16 %v997, %v993
    %v1286 = vpack.c.b16 %v1002, %v998
    %v1287 = vpack.c.b16 %v1003, %v999
    %v1288 = vpack.c.b16 %v1004, %v1000
    %v1289 = vpack.c.b16 %v1005, %v1001
    %v1290 = vpack.c.b16 %v1010, %v1006
    %v1291 = vpack.c.b16 %v1011, %v1007
    %v1292 = vpack.c.b16 %v1012, %v1008
    %v1293 = vpack.c.b16 %v1013, %v1009
    %v1294 = vpack.c.b16 %v1018, %v1014
    %v1295 = vpack.c.b16 %v1019, %v1015
    %v1296 = vpack.c.b16 %v1020, %v1016
    %v1297 = vpack.c.b16 %v1021, %v1017
    %v1298 = vpack.c.b16 %v1026, %v1022
    %v1299 = vpack.c.b16 %v1027, %v1023
    %v1300 = vpack.c.b16 %v1028, %v1024
    %v1301 = vpack.c.b16 %v1029, %v1025
    %v1302 = vpack.c.b16 %v1034, %v1030
    %v1303 = vpack.c.b16 %v1035, %v1031
    %v1304 = vpack.c.b16 %v1036, %v1032
    %v1305 = vpack.c.b16 %v1037, %v1033
    %v1306 = vpack.c.b16 %v1042, %v1038
    %v1307 = vpack.c.b16 %v1043, %v1039
    %v1308 = vpack.c.b16 %v1044, %v1040
    %v1309 = vpack.c.b16 %v1045, %v1041
    %v1310 = vpack.c.b16 %v1050, %v1046
    %v1311 = vpack.c.b16 %v1051, %v1047
    %v1312 = vpack.c.b16 %v1052, %v1048
    %v1313 = vpack.c.b16 %v1053, %v1049
    %v1314 = vpack.c.b16 %v1058, %v1054
    %v1315 = vpack.c.b16 %v1059, %v1055
    %v1316 = vpack.c.b16 %v1060, %v1056
    %v1317 = vpack.c.b16 %v1061, %v1057
    %v1318 = vpack.c.b16 %v1066, %v1062
    %v1319 = vpack.c.b16 %v1067, %v1063
    %v1320 = vpack.c.b16 %v1068, %v1064
    %v1321 = vpack.c.b16 %v1069, %v1065
    %v1322 = vpack.c.b16 %v1074, %v1070
    %v1323 = vpack.c.b16 %v1075, %v1071
    %v1324 = vpack.c.b16 %v1076, %v1072
    %v1325 = vpack.c.b16 %v1077, %v1073
    %v1326 = vpack.c.b16 %v1082, %v1078
    %v1327 = vpack.c.b16 %v1083, %v1079
    %v1328 = vpack.c.b16 %v1084, %v1080
    %v1329 = vpack.c.b16 %v1085, %v1081
    %v1330 = vpack.c.b16 %v1090, %v1086
    %v1331 = vpack.c.b16 %v1091, %v1087
    %v1332 = vpack.c.b16 %v1092, %v1088
    %v1333 = vpack.c.b16 %v1093, %v1089
    %v1334 = vpack.c.b16 %v1098, %v1094
    %v1335 = vpack.c.b16 %v1099, %v1095
    %v1336 = vpack.c.b16 %v1100, %v1096
    %v1337 = vpack.c.b16 %v1101, %v1097
    %v1338 = vpack.c.b16 %v1106, %v1102
    %v1339 = vpack.c.b16 %v1107, %v1103
    %v1340 = vpack.c.b16 %v1108, %v1104
    %v1341 = vpack.c.b16 %v1109, %v1105
    %v1342 = vpack.c.b16 %v1114, %v1110
    %v1343 = vpack.c.b16 %v1115, %v1111
    %v1344 = vpack.c.b16 %v1116, %v1112
    %v1345 = vpack.c.b16 %v1117, %v1113
    %v1346 = vpack.c.b16 %v1122, %v1118
    %v1347 = vpack.c.b16 %v1123, %v1119
    %v1348 = vpack.c.b16 %v1124, %v1120
    %v1349 = vpack.c.b16 %v1125, %v1121
    %1574 = vmatpush.bf16.msra.mxu0 %v1154
    %1575 = vmatpush.bf16.msra.mxu0 %v1150
    %1576 = vmatpush.bf16.msra.mxu0 %v1146
    %1577 = vmatpush.bf16.msra.mxu0 %v1142
    %1578 = vmatpush.bf16.msra.mxu0 %v1138
    %1579 = vmatpush.bf16.msra.mxu0 %v1134
    %1580 = vmatpush.bf16.msra.mxu0 %v1130
    %1581 = vmatpush.bf16.msra.mxu0 %v1126
    %1582 = vmatmul.bf16.gmra.mxu0 %v213
    %v1583 = vpop.f32.mrf.mxu0
    %v1584 = vadd.f32 %v446, %v1583
    %v1585 = vpop.f32.mrf.mxu0
    %1586 = vdwg.mxu0
    %1587 = vmatpush.bf16.msra.mxu0 %v1186
    %1588 = vmatpush.bf16.msra.mxu0 %v1182
    %1589 = vmatpush.bf16.msra.mxu0 %v1178
    %1590 = vmatpush.bf16.msra.mxu0 %v1174
    %1591 = vmatpush.bf16.msra.mxu0 %v1170
    %1592 = vmatpush.bf16.msra.mxu0 %v1166
    %1593 = vmatpush.bf16.msra.mxu0 %v1162
    %1594 = vmatpush.bf16.msra.mxu0 %v1158
    %1595 = vmatmul.bf16.gmra.mxu0 %v214
    %v1596 = vpop.f32.mrf.mxu0
    %v1597 = vadd.f32 %v1584, %v1596
    %v1598 = vpop.f32.mrf.mxu0
    %1599 = vdwg.mxu0
    %1600 = vmatpush.bf16.msra.mxu0 %v1218
    %1601 = vmatpush.bf16.msra.mxu0 %v1214
    %1602 = vmatpush.bf16.msra.mxu0 %v1210
    %1603 = vmatpush.bf16.msra.mxu0 %v1206
    %1604 = vmatpush.bf16.msra.mxu0 %v1202
    %1605 = vmatpush.bf16.msra.mxu0 %v1198
    %1606 = vmatpush.bf16.msra.mxu0 %v1194
    %1607 = vmatpush.bf16.msra.mxu0 %v1190
    %1608 = vmatmul.bf16.gmra.mxu0 %v215
    %v1609 = vpop.f32.mrf.mxu0
    %v1610 = vadd.f32 %v1597, %v1609
    %v1611 = vpop.f32.mrf.mxu0
    %1612 = vdwg.mxu0
    %1613 = vmatpush.bf16.msra.mxu0 %v1250
    %1614 = vmatpush.bf16.msra.mxu0 %v1246
    %1615 = vmatpush.bf16.msra.mxu0 %v1242
    %1616 = vmatpush.bf16.msra.mxu0 %v1238
    %1617 = vmatpush.bf16.msra.mxu0 %v1234
    %1618 = vmatpush.bf16.msra.mxu0 %v1230
    %1619 = vmatpush.bf16.msra.mxu0 %v1226
    %1620 = vmatpush.bf16.msra.mxu0 %v1222
    %1621 = vmatmul.bf16.gmra.mxu0 %v216
    %v1622 = vpop.f32.mrf.mxu0
    %v1623 = vadd.f32 %v1610, %v1622
    %v1624 = vpop.f32.mrf.mxu0
    %1625 = vdwg.mxu0
    %1626 = vmatpush.bf16.msra.mxu0 %v1282
    %1627 = vmatpush.bf16.msra.mxu0 %v1278
    %1628 = vmatpush.bf16.msra.mxu0 %v1274
    %1629 = vmatpush.bf16.msra.mxu0 %v1270
    %1630 = vmatpush.bf16.msra.mxu0 %v1266
    %1631 = vmatpush.bf16.msra.mxu0 %v1262
    %1632 = vmatpush.bf16.msra.mxu0 %v1258
    %1633 = vmatpush.bf16.msra.mxu0 %v1254
    %1634 = vmatmul.bf16.gmra.mxu0 %v217
    %v1635 = vpop.f32.mrf.mxu0
    %v1636 = vadd.f32 %v1623, %v1635
    %v1637 = vpop.f32.mrf.mxu0
    %1638 = vdwg.mxu0
    %1639 = vmatpush.bf16.msra.mxu0 %v1314
    %1640 = vmatpush.bf16.msra.mxu0 %v1310
    %1641 = vmatpush.bf16.msra.mxu0 %v1306
    %1642 = vmatpush.bf16.msra.mxu0 %v1302
    %1643 = vmatpush.bf16.msra.mxu0 %v1298
    %1644 = vmatpush.bf16.msra.mxu0 %v1294
    %1645 = vmatpush.bf16.msra.mxu0 %v1290
    %1646 = vmatpush.bf16.msra.mxu0 %v1286
    %1647 = vmatmul.bf16.gmra.mxu0 %v218
    %v1648 = vpop.f32.mrf.mxu0
    %v1649 = vadd.f32 %v1636, %v1648
    %v1650 = vpop.f32.mrf.mxu0
    %1651 = vdwg.mxu0
    %1652 = vmatpush.bf16.msra.mxu0 %v1346
    %1653 = vmatpush.bf16.msra.mxu0 %v1342
    %1654 = vmatpush.bf16.msra.mxu0 %v1338
    %1655 = vmatpush.bf16.msra.mxu0 %v1334
    %1656 = vmatpush.bf16.msra.mxu0 %v1330
    %1657 = vmatpush.bf16.msra.mxu0 %v1326
    %1658 = vmatpush.bf16.msra.mxu0 %v1322
    %1659 = vmatpush.bf16.msra.mxu0 %v1318
    %1660 = vmatmul.bf16.gmra.mxu0 %v219
    %v1661 = vpop.f32.mrf.mxu0
    %v1662 = vadd.f32 %v1649, %v1661
    %v1663 = vpop.f32.mrf.mxu0
    %1664 = vdwg.mxu0
    %1665 = vmatpush.bf16.msra.mxu0 %v1155
    %1666 = vmatpush.bf16.msra.mxu0 %v1151
    %1667 = vmatpush.bf16.msra.mxu0 %v1147
    %1668 = vmatpush.bf16.msra.mxu0 %v1143
    %1669 = vmatpush.bf16.msra.mxu0 %v1139
    %1670 = vmatpush.bf16.msra.mxu0 %v1135
    %1671 = vmatpush.bf16.msra.mxu0 %v1131
    %1672 = vmatpush.bf16.msra.mxu0 %v1127
    %1673 = vmatmul.bf16.gmra.mxu0 %v213
    %v1674 = vpop.f32.mrf.mxu0
    %v1675 = vadd.f32 %v447, %v1674
    %v1676 = vpop.f32.mrf.mxu0
    %1677 = vdwg.mxu0
    %1678 = vmatpush.bf16.msra.mxu0 %v1187
    %1679 = vmatpush.bf16.msra.mxu0 %v1183
    %1680 = vmatpush.bf16.msra.mxu0 %v1179
    %1681 = vmatpush.bf16.msra.mxu0 %v1175
    %1682 = vmatpush.bf16.msra.mxu0 %v1171
    %1683 = vmatpush.bf16.msra.mxu0 %v1167
    %1684 = vmatpush.bf16.msra.mxu0 %v1163
    %1685 = vmatpush.bf16.msra.mxu0 %v1159
    %1686 = vmatmul.bf16.gmra.mxu0 %v214
    %v1687 = vpop.f32.mrf.mxu0
    %v1688 = vadd.f32 %v1675, %v1687
    %v1689 = vpop.f32.mrf.mxu0
    %1690 = vdwg.mxu0
    %1691 = vmatpush.bf16.msra.mxu0 %v1219
    %1692 = vmatpush.bf16.msra.mxu0 %v1215
    %1693 = vmatpush.bf16.msra.mxu0 %v1211
    %1694 = vmatpush.bf16.msra.mxu0 %v1207
    %1695 = vmatpush.bf16.msra.mxu0 %v1203
    %1696 = vmatpush.bf16.msra.mxu0 %v1199
    %1697 = vmatpush.bf16.msra.mxu0 %v1195
    %1698 = vmatpush.bf16.msra.mxu0 %v1191
    %1699 = vmatmul.bf16.gmra.mxu0 %v215
    %v1700 = vpop.f32.mrf.mxu0
    %v1701 = vadd.f32 %v1688, %v1700
    %v1702 = vpop.f32.mrf.mxu0
    %1703 = vdwg.mxu0
    %1704 = vmatpush.bf16.msra.mxu0 %v1251
    %1705 = vmatpush.bf16.msra.mxu0 %v1247
    %1706 = vmatpush.bf16.msra.mxu0 %v1243
    %1707 = vmatpush.bf16.msra.mxu0 %v1239
    %1708 = vmatpush.bf16.msra.mxu0 %v1235
    %1709 = vmatpush.bf16.msra.mxu0 %v1231
    %1710 = vmatpush.bf16.msra.mxu0 %v1227
    %1711 = vmatpush.bf16.msra.mxu0 %v1223
    %1712 = vmatmul.bf16.gmra.mxu0 %v216
    %v1713 = vpop.f32.mrf.mxu0
    %v1714 = vadd.f32 %v1701, %v1713
    %v1715 = vpop.f32.mrf.mxu0
    %1716 = vdwg.mxu0
    %1717 = vmatpush.bf16.msra.mxu0 %v1283
    %1718 = vmatpush.bf16.msra.mxu0 %v1279
    %1719 = vmatpush.bf16.msra.mxu0 %v1275
    %1720 = vmatpush.bf16.msra.mxu0 %v1271
    %1721 = vmatpush.bf16.msra.mxu0 %v1267
    %1722 = vmatpush.bf16.msra.mxu0 %v1263
    %1723 = vmatpush.bf16.msra.mxu0 %v1259
    %1724 = vmatpush.bf16.msra.mxu0 %v1255
    %1725 = vmatmul.bf16.gmra.mxu0 %v217
    %v1726 = vpop.f32.mrf.mxu0
    %v1727 = vadd.f32 %v1714, %v1726
    %v1728 = vpop.f32.mrf.mxu0
    %1729 = vdwg.mxu0
    %1730 = vmatpush.bf16.msra.mxu0 %v1315
    %1731 = vmatpush.bf16.msra.mxu0 %v1311
    %1732 = vmatpush.bf16.msra.mxu0 %v1307
    %1733 = vmatpush.bf16.msra.mxu0 %v1303
    %1734 = vmatpush.bf16.msra.mxu0 %v1299
    %1735 = vmatpush.bf16.msra.mxu0 %v1295
    %1736 = vmatpush.bf16.msra.mxu0 %v1291
    %1737 = vmatpush.bf16.msra.mxu0 %v1287
    %1738 = vmatmul.bf16.gmra.mxu0 %v218
    %v1739 = vpop.f32.mrf.mxu0
    %v1740 = vadd.f32 %v1727, %v1739
    %v1741 = vpop.f32.mrf.mxu0
    %1742 = vdwg.mxu0
    %1743 = vmatpush.bf16.msra.mxu0 %v1347
    %1744 = vmatpush.bf16.msra.mxu0 %v1343
    %1745 = vmatpush.bf16.msra.mxu0 %v1339
    %1746 = vmatpush.bf16.msra.mxu0 %v1335
    %1747 = vmatpush.bf16.msra.mxu0 %v1331
    %1748 = vmatpush.bf16.msra.mxu0 %v1327
    %1749 = vmatpush.bf16.msra.mxu0 %v1323
    %1750 = vmatpush.bf16.msra.mxu0 %v1319
    %1751 = vmatmul.bf16.gmra.mxu0 %v219
    %v1752 = vpop.f32.mrf.mxu0
    %v1753 = vadd.f32 %v1740, %v1752
    %v1754 = vpop.f32.mrf.mxu0
    %1755 = vdwg.mxu0
    %1756 = vmatpush.bf16.msra.mxu0 %v1156
    %1757 = vmatpush.bf16.msra.mxu0 %v1152
    %1758 = vmatpush.bf16.msra.mxu0 %v1148
    %1759 = vmatpush.bf16.msra.mxu0 %v1144
    %1760 = vmatpush.bf16.msra.mxu0 %v1140
    %1761 = vmatpush.bf16.msra.mxu0 %v1136
    %1762 = vmatpush.bf16.msra.mxu0 %v1132
    %1763 = vmatpush.bf16.msra.mxu0 %v1128
    %1764 = vmatmul.bf16.gmra.mxu0 %v213
    %v1765 = vpop.f32.mrf.mxu0
    %v1766 = vadd.f32 %v448, %v1765
    %v1767 = vpop.f32.mrf.mxu0
    %1768 = vdwg.mxu0
    %1769 = vmatpush.bf16.msra.mxu0 %v1188
    %1770 = vmatpush.bf16.msra.mxu0 %v1184
    %1771 = vmatpush.bf16.msra.mxu0 %v1180
    %1772 = vmatpush.bf16.msra.mxu0 %v1176
    %1773 = vmatpush.bf16.msra.mxu0 %v1172
    %1774 = vmatpush.bf16.msra.mxu0 %v1168
    %1775 = vmatpush.bf16.msra.mxu0 %v1164
    %1776 = vmatpush.bf16.msra.mxu0 %v1160
    %1777 = vmatmul.bf16.gmra.mxu0 %v214
    %v1778 = vpop.f32.mrf.mxu0
    %v1779 = vadd.f32 %v1766, %v1778
    %v1780 = vpop.f32.mrf.mxu0
    %1781 = vdwg.mxu0
    %1782 = vmatpush.bf16.msra.mxu0 %v1220
    %1783 = vmatpush.bf16.msra.mxu0 %v1216
    %1784 = vmatpush.bf16.msra.mxu0 %v1212
    %1785 = vmatpush.bf16.msra.mxu0 %v1208
    %1786 = vmatpush.bf16.msra.mxu0 %v1204
    %1787 = vmatpush.bf16.msra.mxu0 %v1200
    %1788 = vmatpush.bf16.msra.mxu0 %v1196
    %1789 = vmatpush.bf16.msra.mxu0 %v1192
    %1790 = vmatmul.bf16.gmra.mxu0 %v215
    %v1791 = vpop.f32.mrf.mxu0
    %v1792 = vadd.f32 %v1779, %v1791
    %v1793 = vpop.f32.mrf.mxu0
    %1794 = vdwg.mxu0
    %1795 = vmatpush.bf16.msra.mxu0 %v1252
    %1796 = vmatpush.bf16.msra.mxu0 %v1248
    %1797 = vmatpush.bf16.msra.mxu0 %v1244
    %1798 = vmatpush.bf16.msra.mxu0 %v1240
    %1799 = vmatpush.bf16.msra.mxu0 %v1236
    %1800 = vmatpush.bf16.msra.mxu0 %v1232
    %1801 = vmatpush.bf16.msra.mxu0 %v1228
    %1802 = vmatpush.bf16.msra.mxu0 %v1224
    %1803 = vmatmul.bf16.gmra.mxu0 %v216
    %v1804 = vpop.f32.mrf.mxu0
    %v1805 = vadd.f32 %v1792, %v1804
    %v1806 = vpop.f32.mrf.mxu0
    %1807 = vdwg.mxu0
    %1808 = vmatpush.bf16.msra.mxu0 %v1284
    %1809 = vmatpush.bf16.msra.mxu0 %v1280
    %1810 = vmatpush.bf16.msra.mxu0 %v1276
    %1811 = vmatpush.bf16.msra.mxu0 %v1272
    %1812 = vmatpush.bf16.msra.mxu0 %v1268
    %1813 = vmatpush.bf16.msra.mxu0 %v1264
    %1814 = vmatpush.bf16.msra.mxu0 %v1260
    %1815 = vmatpush.bf16.msra.mxu0 %v1256
    %1816 = vmatmul.bf16.gmra.mxu0 %v217
    %v1817 = vpop.f32.mrf.mxu0
    %v1818 = vadd.f32 %v1805, %v1817
    %v1819 = vpop.f32.mrf.mxu0
    %1820 = vdwg.mxu0
    %1821 = vmatpush.bf16.msra.mxu0 %v1316
    %1822 = vmatpush.bf16.msra.mxu0 %v1312
    %1823 = vmatpush.bf16.msra.mxu0 %v1308
    %1824 = vmatpush.bf16.msra.mxu0 %v1304
    %1825 = vmatpush.bf16.msra.mxu0 %v1300
    %1826 = vmatpush.bf16.msra.mxu0 %v1296
    %1827 = vmatpush.bf16.msra.mxu0 %v1292
    %1828 = vmatpush.bf16.msra.mxu0 %v1288
    %1829 = vmatmul.bf16.gmra.mxu0 %v218
    %v1830 = vpop.f32.mrf.mxu0
    %v1831 = vadd.f32 %v1818, %v1830
    %v1832 = vpop.f32.mrf.mxu0
    %1833 = vdwg.mxu0
    %1834 = vmatpush.bf16.msra.mxu0 %v1348
    %1835 = vmatpush.bf16.msra.mxu0 %v1344
    %1836 = vmatpush.bf16.msra.mxu0 %v1340
    %1837 = vmatpush.bf16.msra.mxu0 %v1336
    %1838 = vmatpush.bf16.msra.mxu0 %v1332
    %1839 = vmatpush.bf16.msra.mxu0 %v1328
    %1840 = vmatpush.bf16.msra.mxu0 %v1324
    %1841 = vmatpush.bf16.msra.mxu0 %v1320
    %1842 = vmatmul.bf16.gmra.mxu0 %v219
    %v1843 = vpop.f32.mrf.mxu0
    %v1844 = vadd.f32 %v1831, %v1843
    %v1845 = vpop.f32.mrf.mxu0
    %1846 = vdwg.mxu0
    %1847 = vmatpush.bf16.msra.mxu0 %v1157
    %1848 = vmatpush.bf16.msra.mxu0 %v1153
    %1849 = vmatpush.bf16.msra.mxu0 %v1149
    %1850 = vmatpush.bf16.msra.mxu0 %v1145
    %1851 = vmatpush.bf16.msra.mxu0 %v1141
    %1852 = vmatpush.bf16.msra.mxu0 %v1137
    %1853 = vmatpush.bf16.msra.mxu0 %v1133
    %1854 = vmatpush.bf16.msra.mxu0 %v1129
    %1855 = vmatmul.bf16.gmra.mxu0 %v213
    %v1856 = vpop.f32.mrf.mxu0
    %v1857 = vadd.f32 %v449, %v1856
    %v1858 = vpop.f32.mrf.mxu0
    %1859 = vdwg.mxu0
    %1860 = vmatpush.bf16.msra.mxu0 %v1189
    %1861 = vmatpush.bf16.msra.mxu0 %v1185
    %1862 = vmatpush.bf16.msra.mxu0 %v1181
    %1863 = vmatpush.bf16.msra.mxu0 %v1177
    %1864 = vmatpush.bf16.msra.mxu0 %v1173
    %1865 = vmatpush.bf16.msra.mxu0 %v1169
    %1866 = vmatpush.bf16.msra.mxu0 %v1165
    %1867 = vmatpush.bf16.msra.mxu0 %v1161
    %1868 = vmatmul.bf16.gmra.mxu0 %v214
    %v1869 = vpop.f32.mrf.mxu0
    %v1870 = vadd.f32 %v1857, %v1869
    %v1871 = vpop.f32.mrf.mxu0
    %1872 = vdwg.mxu0
    %1873 = vmatpush.bf16.msra.mxu0 %v1221
    %1874 = vmatpush.bf16.msra.mxu0 %v1217
    %1875 = vmatpush.bf16.msra.mxu0 %v1213
    %1876 = vmatpush.bf16.msra.mxu0 %v1209
    %1877 = vmatpush.bf16.msra.mxu0 %v1205
    %1878 = vmatpush.bf16.msra.mxu0 %v1201
    %1879 = vmatpush.bf16.msra.mxu0 %v1197
    %1880 = vmatpush.bf16.msra.mxu0 %v1193
    %1881 = vmatmul.bf16.gmra.mxu0 %v215
    %v1882 = vpop.f32.mrf.mxu0
    %v1883 = vadd.f32 %v1870, %v1882
    %v1884 = vpop.f32.mrf.mxu0
    %1885 = vdwg.mxu0
    %1886 = vmatpush.bf16.msra.mxu0 %v1253
    %1887 = vmatpush.bf16.msra.mxu0 %v1249
    %1888 = vmatpush.bf16.msra.mxu0 %v1245
    %1889 = vmatpush.bf16.msra.mxu0 %v1241
    %1890 = vmatpush.bf16.msra.mxu0 %v1237
    %1891 = vmatpush.bf16.msra.mxu0 %v1233
    %1892 = vmatpush.bf16.msra.mxu0 %v1229
    %1893 = vmatpush.bf16.msra.mxu0 %v1225
    %1894 = vmatmul.bf16.gmra.mxu0 %v216
    %v1895 = vpop.f32.mrf.mxu0
    %v1896 = vadd.f32 %v1883, %v1895
    %v1897 = vpop.f32.mrf.mxu0
    %1898 = vdwg.mxu0
    %1899 = vmatpush.bf16.msra.mxu0 %v1285
    %1900 = vmatpush.bf16.msra.mxu0 %v1281
    %1901 = vmatpush.bf16.msra.mxu0 %v1277
    %1902 = vmatpush.bf16.msra.mxu0 %v1273
    %1903 = vmatpush.bf16.msra.mxu0 %v1269
    %1904 = vmatpush.bf16.msra.mxu0 %v1265
    %1905 = vmatpush.bf16.msra.mxu0 %v1261
    %1906 = vmatpush.bf16.msra.mxu0 %v1257
    %1907 = vmatmul.bf16.gmra.mxu0 %v217
    %v1908 = vpop.f32.mrf.mxu0
    %v1909 = vadd.f32 %v1896, %v1908
    %v1910 = vpop.f32.mrf.mxu0
    %1911 = vdwg.mxu0
    %1912 = vmatpush.bf16.msra.mxu0 %v1317
    %1913 = vmatpush.bf16.msra.mxu0 %v1313
    %1914 = vmatpush.bf16.msra.mxu0 %v1309
    %1915 = vmatpush.bf16.msra.mxu0 %v1305
    %1916 = vmatpush.bf16.msra.mxu0 %v1301
    %1917 = vmatpush.bf16.msra.mxu0 %v1297
    %1918 = vmatpush.bf16.msra.mxu0 %v1293
    %1919 = vmatpush.bf16.msra.mxu0 %v1289
    %1920 = vmatmul.bf16.gmra.mxu0 %v218
    %v1921 = vpop.f32.mrf.mxu0
    %v1922 = vadd.f32 %v1909, %v1921
    %v1923 = vpop.f32.mrf.mxu0
    %1924 = vdwg.mxu0
    %1925 = vmatpush.bf16.msra.mxu0 %v1349
    %1926 = vmatpush.bf16.msra.mxu0 %v1345
    %1927 = vmatpush.bf16.msra.mxu0 %v1341
    %1928 = vmatpush.bf16.msra.mxu0 %v1337
    %1929 = vmatpush.bf16.msra.mxu0 %v1333
    %1930 = vmatpush.bf16.msra.mxu0 %v1329
    %1931 = vmatpush.bf16.msra.mxu0 %v1325
    %1932 = vmatpush.bf16.msra.mxu0 %v1321
    %1933 = vmatmul.bf16.gmra.mxu0 %v219
    %v1934 = vpop.f32.mrf.mxu0
    %v1935 = vadd.f32 %v1922, %v1934
    %v1936 = vpop.f32.mrf.mxu0
    %1937 = vdwg.mxu0
    %vm1938 = vcmp.gt.f32.partialorder %v1662, 0.0
    %vm1939 = vcmp.gt.f32.partialorder %v1753, 0.0
    %vm1940 = vcmp.gt.f32.partialorder %v1844, 0.0
    %vm1941 = vcmp.gt.f32.partialorder %v1935, 0.0
    %v1942 = vmul.f32 %v1662, 0.2
    %v1943 = vmul.f32 %v1753, 0.2
    %v1944 = vmul.f32 %v1844, 0.2
    %v1945 = vmul.f32 %v1935, 0.2
    %v1946 = vsel %vm1938, %v1662, %v1942
    %v1947 = vsel %vm1939, %v1753, %v1943
    %v1948 = vsel %vm1940, %v1844, %v1944
    %v1949 = vsel %vm1941, %v1935, %v1945
    %v1950 = vpack.c.bf16 %v1946, %v1946
    %v1951 = vpack.c.bf16 %v1947, %v1947
    %v1952 = vpack.c.bf16 %v1948, %v1948
    %v1953 = vpack.c.bf16 %v1949, %v1949
    %v1954 = vld [vmem:[%s4] sm:$0xff]
    %v1955 = vld [vmem:[%s4 + $0x8] sm:$0xff]
    %v1956 = vld [vmem:[%s4 + $0x10] sm:$0xff]
    %v1957 = vld [vmem:[%s4 + $0x18] sm:$0xff]
    %v1958 = vld [vmem:[%s4 + $0x20] sm:$0xff]
    %v1959 = vld [vmem:[%s4 + $0x28] sm:$0xff]
    %v1960 = vld [vmem:[%s4 + $0x30] sm:$0xff]
    %v1961 = vld [vmem:[%s4 + $0x38] sm:$0xff]
    %v1962 = vld [vmem:[%s4 + $0x40] sm:$0xff]
    %v1963 = vld [vmem:[%s4 + $0x48] sm:$0xff]
    %v1964 = vld [vmem:[%s4 + $0x50] sm:$0xff]
    %v1965 = vld [vmem:[%s4 + $0x58] sm:$0xff]
    %v1966 = vld [vmem:[%s4 + $0x60] sm:$0xff]
    %v1967 = vld [vmem:[%s4 + $0x68] sm:$0xff]
    %v1968 = vld [vmem:[%s4 + $0x70] sm:$0xff]
    %v1969 = vld [vmem:[%s4 + $0x78] sm:$0xff]
    %v1970 = vld [vmem:[%s4 + $0x80] sm:$0xff]
    %v1971 = vld [vmem:[%s4 + $0x88] sm:$0xff]
    %v1972 = vld [vmem:[%s4 + $0x90] sm:$0xff]
    %v1973 = vld [vmem:[%s4 + $0x98] sm:$0xff]
    %v1974 = vld [vmem:[%s4 + $0xa0] sm:$0xff]
    %v1975 = vld [vmem:[%s4 + $0xa8] sm:$0xff]
    %v1976 = vld [vmem:[%s4 + $0xb0] sm:$0xff]
    %v1977 = vld [vmem:[%s4 + $0xb8] sm:$0xff]
    %v1978 = vld [vmem:[%s4 + $0xc0] sm:$0xff]
    %v1979 = vld [vmem:[%s4 + $0xc8] sm:$0xff]
    %v1980 = vld [vmem:[%s4 + $0xd0] sm:$0xff]
    %v1981 = vld [vmem:[%s4 + $0xd8] sm:$0xff]
    %v1982 = vld [vmem:[%s4 + $0xe0] sm:$0xff]
    %v1983 = vld [vmem:[%s4 + $0xe8] sm:$0xff]
    %v1984 = vld [vmem:[%s4 + $0xf0] sm:$0xff]
    %v1985 = vld [vmem:[%s4 + $0xf8] sm:$0xff]
    %v1986 = vld [vmem:[%s4 + $0x100] sm:$0xff]
    %v1987 = vld [vmem:[%s4 + $0x108] sm:$0xff]
    %v1988 = vld [vmem:[%s4 + $0x110] sm:$0xff]
    %v1989 = vld [vmem:[%s4 + $0x118] sm:$0xff]
    %v1990 = vld [vmem:[%s4 + $0x120] sm:$0xff]
    %v1991 = vld [vmem:[%s4 + $0x128] sm:$0xff]
    %v1992 = vld [vmem:[%s4 + $0x130] sm:$0xff]
    %v1993 = vld [vmem:[%s4 + $0x138] sm:$0xff]
    %v1994 = vld [vmem:[%s4 + $0x140] sm:$0xff]
    %v1995 = vld [vmem:[%s4 + $0x148] sm:$0xff]
    %v1996 = vld [vmem:[%s4 + $0x150] sm:$0xff]
    %v1997 = vld [vmem:[%s4 + $0x158] sm:$0xff]
    %v1998 = vld [vmem:[%s4 + $0x160] sm:$0xff]
    %v1999 = vld [vmem:[%s4 + $0x168] sm:$0xff]
    %v2000 = vld [vmem:[%s4 + $0x170] sm:$0xff]
    %v2001 = vld [vmem:[%s4 + $0x178] sm:$0xff]
    %v2002 = vld [vmem:[%s4 + $0x180] sm:$0xff]
    %v2003 = vld [vmem:[%s4 + $0x188] sm:$0xff]
    %v2004 = vld [vmem:[%s4 + $0x190] sm:$0xff]
    %v2005 = vld [vmem:[%s4 + $0x198] sm:$0xff]
    %v2006 = vld [vmem:[%s4 + $0x1a0] sm:$0xff]
    %v2007 = vld [vmem:[%s4 + $0x1a8] sm:$0xff]
    %v2008 = vld [vmem:[%s4 + $0x1b0] sm:$0xff]
    %v2009 = vld [vmem:[%s4 + $0x1b8] sm:$0xff]
    %v2010 = vld [vmem:[%s4 + $0x1c0] sm:$0xff]
    %v2011 = vld [vmem:[%s4 + $0x1c8] sm:$0xff]
    %v2012 = vld [vmem:[%s4 + $0x1d0] sm:$0xff]
    %v2013 = vld [vmem:[%s4 + $0x1d8] sm:$0xff]
    %v2014 = vld [vmem:[%s4 + $0x1e0] sm:$0xff]
    %v2015 = vld [vmem:[%s4 + $0x1e8] sm:$0xff]
    %v2016 = vld [vmem:[%s4 + $0x1f0] sm:$0xff]
    %v2017 = vld [vmem:[%s4 + $0x1f8] sm:$0xff]
    %v2018 = vld [vmem:[#allocation5] sm:$0x3]
    %v2020 = vperm.slane %v2018, 0
    %v2021 = vperm.slane %v2018, 1
    %v2088 = vunpack.c.l.b16 %v1954
    %v2089 = vunpack.c.h.b16 %v1954
    %v2090 = vunpack.c.l.b16 %v1955
    %v2091 = vunpack.c.h.b16 %v1955
    %v2092 = vunpack.c.l.b16 %v1956
    %v2093 = vunpack.c.h.b16 %v1956
    %v2094 = vunpack.c.l.b16 %v1957
    %v2095 = vunpack.c.h.b16 %v1957
    %v2096 = vunpack.c.l.b16 %v1958
    %v2097 = vunpack.c.h.b16 %v1958
    %v2098 = vunpack.c.l.b16 %v1959
    %v2099 = vunpack.c.h.b16 %v1959
    %v2100 = vunpack.c.l.b16 %v1960
    %v2101 = vunpack.c.h.b16 %v1960
    %v2102 = vunpack.c.l.b16 %v1961
    %v2103 = vunpack.c.h.b16 %v1961
    %v2104 = vunpack.c.l.b16 %v1962
    %v2105 = vunpack.c.h.b16 %v1962
    %v2106 = vunpack.c.l.b16 %v1963
    %v2107 = vunpack.c.h.b16 %v1963
    %v2108 = vunpack.c.l.b16 %v1964
    %v2109 = vunpack.c.h.b16 %v1964
    %v2110 = vunpack.c.l.b16 %v1965
    %v2111 = vunpack.c.h.b16 %v1965
    %v2112 = vunpack.c.l.b16 %v1966
    %v2113 = vunpack.c.h.b16 %v1966
    %v2114 = vunpack.c.l.b16 %v1967
    %v2115 = vunpack.c.h.b16 %v1967
    %v2116 = vunpack.c.l.b16 %v1968
    %v2117 = vunpack.c.h.b16 %v1968
    %v2118 = vunpack.c.l.b16 %v1969
    %v2119 = vunpack.c.h.b16 %v1969
    %v2120 = vunpack.c.l.b16 %v1970
    %v2121 = vunpack.c.h.b16 %v1970
    %v2122 = vunpack.c.l.b16 %v1971
    %v2123 = vunpack.c.h.b16 %v1971
    %v2124 = vunpack.c.l.b16 %v1972
    %v2125 = vunpack.c.h.b16 %v1972
    %v2126 = vunpack.c.l.b16 %v1973
    %v2127 = vunpack.c.h.b16 %v1973
    %v2128 = vunpack.c.l.b16 %v1974
    %v2129 = vunpack.c.h.b16 %v1974
    %v2130 = vunpack.c.l.b16 %v1975
    %v2131 = vunpack.c.h.b16 %v1975
    %v2132 = vunpack.c.l.b16 %v1976
    %v2133 = vunpack.c.h.b16 %v1976
    %v2134 = vunpack.c.l.b16 %v1977
    %v2135 = vunpack.c.h.b16 %v1977
    %v2136 = vunpack.c.l.b16 %v1978
    %v2137 = vunpack.c.h.b16 %v1978
    %v2138 = vunpack.c.l.b16 %v1979
    %v2139 = vunpack.c.h.b16 %v1979
    %v2140 = vunpack.c.l.b16 %v1980
    %v2141 = vunpack.c.h.b16 %v1980
    %v2142 = vunpack.c.l.b16 %v1981
    %v2143 = vunpack.c.h.b16 %v1981
    %v2144 = vunpack.c.l.b16 %v1982
    %v2145 = vunpack.c.h.b16 %v1982
    %v2146 = vunpack.c.l.b16 %v1983
    %v2147 = vunpack.c.h.b16 %v1983
    %v2148 = vunpack.c.l.b16 %v1984
    %v2149 = vunpack.c.h.b16 %v1984
    %v2150 = vunpack.c.l.b16 %v1985
    %v2151 = vunpack.c.h.b16 %v1985
    %v2152 = vunpack.c.l.b16 %v1986
    %v2153 = vunpack.c.h.b16 %v1986
    %v2154 = vunpack.c.l.b16 %v1987
    %v2155 = vunpack.c.h.b16 %v1987
    %v2156 = vunpack.c.l.b16 %v1988
    %v2157 = vunpack.c.h.b16 %v1988
    %v2158 = vunpack.c.l.b16 %v1989
    %v2159 = vunpack.c.h.b16 %v1989
    %v2160 = vunpack.c.l.b16 %v1990
    %v2161 = vunpack.c.h.b16 %v1990
    %v2162 = vunpack.c.l.b16 %v1991
    %v2163 = vunpack.c.h.b16 %v1991
    %v2164 = vunpack.c.l.b16 %v1992
    %v2165 = vunpack.c.h.b16 %v1992
    %v2166 = vunpack.c.l.b16 %v1993
    %v2167 = vunpack.c.h.b16 %v1993
    %v2168 = vunpack.c.l.b16 %v1994
    %v2169 = vunpack.c.h.b16 %v1994
    %v2170 = vunpack.c.l.b16 %v1995
    %v2171 = vunpack.c.h.b16 %v1995
    %v2172 = vunpack.c.l.b16 %v1996
    %v2173 = vunpack.c.h.b16 %v1996
    %v2174 = vunpack.c.l.b16 %v1997
    %v2175 = vunpack.c.h.b16 %v1997
    %v2176 = vunpack.c.l.b16 %v1998
    %v2177 = vunpack.c.h.b16 %v1998
    %v2178 = vunpack.c.l.b16 %v1999
    %v2179 = vunpack.c.h.b16 %v1999
    %v2180 = vunpack.c.l.b16 %v2000
    %v2181 = vunpack.c.h.b16 %v2000
    %v2182 = vunpack.c.l.b16 %v2001
    %v2183 = vunpack.c.h.b16 %v2001
    %v2184 = vunpack.c.l.b16 %v2002
    %v2185 = vunpack.c.h.b16 %v2002
    %v2186 = vunpack.c.l.b16 %v2003
    %v2187 = vunpack.c.h.b16 %v2003
    %v2188 = vunpack.c.l.b16 %v2004
    %v2189 = vunpack.c.h.b16 %v2004
    %v2190 = vunpack.c.l.b16 %v2005
    %v2191 = vunpack.c.h.b16 %v2005
    %v2192 = vunpack.c.l.b16 %v2006
    %v2193 = vunpack.c.h.b16 %v2006
    %v2194 = vunpack.c.l.b16 %v2007
    %v2195 = vunpack.c.h.b16 %v2007
    %v2196 = vunpack.c.l.b16 %v2008
    %v2197 = vunpack.c.h.b16 %v2008
    %v2198 = vunpack.c.l.b16 %v2009
    %v2199 = vunpack.c.h.b16 %v2009
    %v2200 = vunpack.c.l.b16 %v2010
    %v2201 = vunpack.c.h.b16 %v2010
    %v2202 = vunpack.c.l.b16 %v2011
    %v2203 = vunpack.c.h.b16 %v2011
    %v2204 = vunpack.c.l.b16 %v2012
    %v2205 = vunpack.c.h.b16 %v2012
    %v2206 = vunpack.c.l.b16 %v2013
    %v2207 = vunpack.c.h.b16 %v2013
    %v2208 = vunpack.c.l.b16 %v2014
    %v2209 = vunpack.c.h.b16 %v2014
    %v2210 = vunpack.c.l.b16 %v2015
    %v2211 = vunpack.c.h.b16 %v2015
    %v2212 = vunpack.c.l.b16 %v2016
    %v2213 = vunpack.c.h.b16 %v2016
    %v2214 = vunpack.c.l.b16 %v2017
    %v2215 = vunpack.c.h.b16 %v2017
    %v2216 = vpack.c.b16 %v2090, %v2088
    %v2217 = vpack.c.b16 %v2091, %v2089
    %v2218 = vpack.c.b16 %v2094, %v2092
    %v2219 = vpack.c.b16 %v2095, %v2093
    %v2220 = vpack.c.b16 %v2098, %v2096
    %v2221 = vpack.c.b16 %v2099, %v2097
    %v2222 = vpack.c.b16 %v2102, %v2100
    %v2223 = vpack.c.b16 %v2103, %v2101
    %v2224 = vpack.c.b16 %v2106, %v2104
    %v2225 = vpack.c.b16 %v2107, %v2105
    %v2226 = vpack.c.b16 %v2110, %v2108
    %v2227 = vpack.c.b16 %v2111, %v2109
    %v2228 = vpack.c.b16 %v2114, %v2112
    %v2229 = vpack.c.b16 %v2115, %v2113
    %v2230 = vpack.c.b16 %v2118, %v2116
    %v2231 = vpack.c.b16 %v2119, %v2117
    %v2232 = vpack.c.b16 %v2122, %v2120
    %v2233 = vpack.c.b16 %v2123, %v2121
    %v2234 = vpack.c.b16 %v2126, %v2124
    %v2235 = vpack.c.b16 %v2127, %v2125
    %v2236 = vpack.c.b16 %v2130, %v2128
    %v2237 = vpack.c.b16 %v2131, %v2129
    %v2238 = vpack.c.b16 %v2134, %v2132
    %v2239 = vpack.c.b16 %v2135, %v2133
    %v2240 = vpack.c.b16 %v2138, %v2136
    %v2241 = vpack.c.b16 %v2139, %v2137
    %v2242 = vpack.c.b16 %v2142, %v2140
    %v2243 = vpack.c.b16 %v2143, %v2141
    %v2244 = vpack.c.b16 %v2146, %v2144
    %v2245 = vpack.c.b16 %v2147, %v2145
    %v2246 = vpack.c.b16 %v2150, %v2148
    %v2247 = vpack.c.b16 %v2151, %v2149
    %v2248 = vpack.c.b16 %v2154, %v2152
    %v2249 = vpack.c.b16 %v2155, %v2153
    %v2250 = vpack.c.b16 %v2158, %v2156
    %v2251 = vpack.c.b16 %v2159, %v2157
    %v2252 = vpack.c.b16 %v2162, %v2160
    %v2253 = vpack.c.b16 %v2163, %v2161
    %v2254 = vpack.c.b16 %v2166, %v2164
    %v2255 = vpack.c.b16 %v2167, %v2165
    %v2256 = vpack.c.b16 %v2170, %v2168
    %v2257 = vpack.c.b16 %v2171, %v2169
    %v2258 = vpack.c.b16 %v2174, %v2172
    %v2259 = vpack.c.b16 %v2175, %v2173
    %v2260 = vpack.c.b16 %v2178, %v2176
    %v2261 = vpack.c.b16 %v2179, %v2177
    %v2262 = vpack.c.b16 %v2182, %v2180
    %v2263 = vpack.c.b16 %v2183, %v2181
    %v2264 = vpack.c.b16 %v2186, %v2184
    %v2265 = vpack.c.b16 %v2187, %v2185
    %v2266 = vpack.c.b16 %v2190, %v2188
    %v2267 = vpack.c.b16 %v2191, %v2189
    %v2268 = vpack.c.b16 %v2194, %v2192
    %v2269 = vpack.c.b16 %v2195, %v2193
    %v2270 = vpack.c.b16 %v2198, %v2196
    %v2271 = vpack.c.b16 %v2199, %v2197
    %v2272 = vpack.c.b16 %v2202, %v2200
    %v2273 = vpack.c.b16 %v2203, %v2201
    %v2274 = vpack.c.b16 %v2206, %v2204
    %v2275 = vpack.c.b16 %v2207, %v2205
    %v2276 = vpack.c.b16 %v2210, %v2208
    %v2277 = vpack.c.b16 %v2211, %v2209
    %v2278 = vpack.c.b16 %v2214, %v2212
    %v2279 = vpack.c.b16 %v2215, %v2213
    %2344 = vmatpush.bf16.msra.mxu0 %v2230
    %2345 = vmatpush.bf16.msra.mxu0 %v2228
    %2346 = vmatpush.bf16.msra.mxu0 %v2226
    %2347 = vmatpush.bf16.msra.mxu0 %v2224
    %2348 = vmatpush.bf16.msra.mxu0 %v2222
    %2349 = vmatpush.bf16.msra.mxu0 %v2220
    %2350 = vmatpush.bf16.msra.mxu0 %v2218
    %2351 = vmatpush.bf16.msra.mxu0 %v2216
    %2352 = vmatmul.bf16.gmra.mxu0 %v1950
    %v2353 = vpop.f32.mrf.mxu0
    %v2354 = vadd.f32 %v2020, %v2353
    %v2355 = vpop.f32.mrf.mxu0
    %2356 = vdwg.mxu0
    %2357 = vmatpush.bf16.msra.mxu0 %v2246
    %2358 = vmatpush.bf16.msra.mxu0 %v2244
    %2359 = vmatpush.bf16.msra.mxu0 %v2242
    %2360 = vmatpush.bf16.msra.mxu0 %v2240
    %2361 = vmatpush.bf16.msra.mxu0 %v2238
    %2362 = vmatpush.bf16.msra.mxu0 %v2236
    %2363 = vmatpush.bf16.msra.mxu0 %v2234
    %2364 = vmatpush.bf16.msra.mxu0 %v2232
    %2365 = vmatmul.bf16.gmra.mxu0 %v1951
    %v2366 = vpop.f32.mrf.mxu0
    %v2367 = vadd.f32 %v2354, %v2366
    %v2368 = vpop.f32.mrf.mxu0
    %2369 = vdwg.mxu0
    %2370 = vmatpush.bf16.msra.mxu0 %v2262
    %2371 = vmatpush.bf16.msra.mxu0 %v2260
    %2372 = vmatpush.bf16.msra.mxu0 %v2258
    %2373 = vmatpush.bf16.msra.mxu0 %v2256
    %2374 = vmatpush.bf16.msra.mxu0 %v2254
    %2375 = vmatpush.bf16.msra.mxu0 %v2252
    %2376 = vmatpush.bf16.msra.mxu0 %v2250
    %2377 = vmatpush.bf16.msra.mxu0 %v2248
    %2378 = vmatmul.bf16.gmra.mxu0 %v1952
    %v2379 = vpop.f32.mrf.mxu0
    %v2380 = vadd.f32 %v2367, %v2379
    %v2381 = vpop.f32.mrf.mxu0
    %2382 = vdwg.mxu0
    %2383 = vmatpush.bf16.msra.mxu0 %v2278
    %2384 = vmatpush.bf16.msra.mxu0 %v2276
    %2385 = vmatpush.bf16.msra.mxu0 %v2274
    %2386 = vmatpush.bf16.msra.mxu0 %v2272
    %2387 = vmatpush.bf16.msra.mxu0 %v2270
    %2388 = vmatpush.bf16.msra.mxu0 %v2268
    %2389 = vmatpush.bf16.msra.mxu0 %v2266
    %2390 = vmatpush.bf16.msra.mxu0 %v2264
    %2391 = vmatmul.bf16.gmra.mxu0 %v1953
    %v2392 = vpop.f32.mrf.mxu0
    %v2393 = vadd.f32 %v2380, %v2392
    %v2394 = vpop.f32.mrf.mxu0
    %2395 = vdwg.mxu0
    %2396 = vmatpush.bf16.msra.mxu0 %v2231
    %2397 = vmatpush.bf16.msra.mxu0 %v2229
    %2398 = vmatpush.bf16.msra.mxu0 %v2227
    %2399 = vmatpush.bf16.msra.mxu0 %v2225
    %2400 = vmatpush.bf16.msra.mxu0 %v2223
    %2401 = vmatpush.bf16.msra.mxu0 %v2221
    %2402 = vmatpush.bf16.msra.mxu0 %v2219
    %2403 = vmatpush.bf16.msra.mxu0 %v2217
    %2404 = vmatmul.bf16.gmra.mxu0 %v1950
    %v2405 = vpop.f32.mrf.mxu0
    %v2406 = vadd.f32 %v2021, %v2405
    %v2407 = vpop.f32.mrf.mxu0
    %2408 = vdwg.mxu0
    %2409 = vmatpush.bf16.msra.mxu0 %v2247
    %2410 = vmatpush.bf16.msra.mxu0 %v2245
    %2411 = vmatpush.bf16.msra.mxu0 %v2243
    %2412 = vmatpush.bf16.msra.mxu0 %v2241
    %2413 = vmatpush.bf16.msra.mxu0 %v2239
    %2414 = vmatpush.bf16.msra.mxu0 %v2237
    %2415 = vmatpush.bf16.msra.mxu0 %v2235
    %2416 = vmatpush.bf16.msra.mxu0 %v2233
    %2417 = vmatmul.bf16.gmra.mxu0 %v1951
    %v2418 = vpop.f32.mrf.mxu0
    %v2419 = vadd.f32 %v2406, %v2418
    %v2420 = vpop.f32.mrf.mxu0
    %2421 = vdwg.mxu0
    %2422 = vmatpush.bf16.msra.mxu0 %v2263
    %2423 = vmatpush.bf16.msra.mxu0 %v2261
    %2424 = vmatpush.bf16.msra.mxu0 %v2259
    %2425 = vmatpush.bf16.msra.mxu0 %v2257
    %2426 = vmatpush.bf16.msra.mxu0 %v2255
    %2427 = vmatpush.bf16.msra.mxu0 %v2253
    %2428 = vmatpush.bf16.msra.mxu0 %v2251
    %2429 = vmatpush.bf16.msra.mxu0 %v2249
    %2430 = vmatmul.bf16.gmra.mxu0 %v1952
    %v2431 = vpop.f32.mrf.mxu0
    %v2432 = vadd.f32 %v2419, %v2431
    %v2433 = vpop.f32.mrf.mxu0
    %2434 = vdwg.mxu0
    %2435 = vmatpush.bf16.msra.mxu0 %v2279
    %2436 = vmatpush.bf16.msra.mxu0 %v2277
    %2437 = vmatpush.bf16.msra.mxu0 %v2275
    %2438 = vmatpush.bf16.msra.mxu0 %v2273
    %2439 = vmatpush.bf16.msra.mxu0 %v2271
    %2440 = vmatpush.bf16.msra.mxu0 %v2269
    %2441 = vmatpush.bf16.msra.mxu0 %v2267
    %2442 = vmatpush.bf16.msra.mxu0 %v2265
    %2443 = vmatmul.bf16.gmra.mxu0 %v1953
    %v2444 = vpop.f32.mrf.mxu0
    %v2445 = vadd.f32 %v2432, %v2444
    %v2446 = vpop.f32.mrf.mxu0
    %2447 = vdwg.mxu0
    %vm2448 = vcmp.gt.f32.partialorder %v2393, 0.0
    %vm2449 = vcmp.gt.f32.partialorder %v2445, 0.0
    %v2450 = vmul.f32 %v2393, 0.2
    %v2451 = vmul.f32 %v2445, 0.2
    %v2452 = vsel %vm2448, %v2393, %v2450
    %v2453 = vsel %vm2449, %v2445, %v2451
    %v2454 = vpack.c.bf16 %v2452, %v2452
    %v2455 = vpack.c.bf16 %v2453, %v2453
    %v2456 = vld [vmem:[%s6] sm:$0xff]
    %v2457 = vld [vmem:[%s6 + $0x8] sm:$0xff]
    %v2458 = vld [vmem:[%s6 + $0x10] sm:$0xff]
    %v2459 = vld [vmem:[%s6 + $0x18] sm:$0xff]
    %v2460 = vld [vmem:[%s6 + $0x20] sm:$0xff]
    %v2461 = vld [vmem:[%s6 + $0x28] sm:$0xff]
    %v2462 = vld [vmem:[%s6 + $0x30] sm:$0xff]
    %v2463 = vld [vmem:[%s6 + $0x38] sm:$0xff]
    %v2464 = vld [vmem:[%s6 + $0x40] sm:$0xff]
    %v2465 = vld [vmem:[%s6 + $0x48] sm:$0xff]
    %v2466 = vld [vmem:[%s6 + $0x50] sm:$0xff]
    %v2467 = vld [vmem:[%s6 + $0x58] sm:$0xff]
    %v2468 = vld [vmem:[%s6 + $0x60] sm:$0xff]
    %v2469 = vld [vmem:[%s6 + $0x68] sm:$0xff]
    %v2470 = vld [vmem:[%s6 + $0x70] sm:$0xff]
    %v2471 = vld [vmem:[%s6 + $0x78] sm:$0xff]
    %v2472 = vld [vmem:[%s6 + $0x80] sm:$0xff]
    %v2473 = vld [vmem:[%s6 + $0x88] sm:$0xff]
    %v2474 = vld [vmem:[%s6 + $0x90] sm:$0xff]
    %v2475 = vld [vmem:[%s6 + $0x98] sm:$0xff]
    %v2476 = vld [vmem:[%s6 + $0xa0] sm:$0xff]
    %v2477 = vld [vmem:[%s6 + $0xa8] sm:$0xff]
    %v2478 = vld [vmem:[%s6 + $0xb0] sm:$0xff]
    %v2479 = vld [vmem:[%s6 + $0xb8] sm:$0xff]
    %v2480 = vld [vmem:[%s6 + $0xc0] sm:$0xff]
    %v2481 = vld [vmem:[%s6 + $0xc8] sm:$0xff]
    %v2482 = vld [vmem:[%s6 + $0xd0] sm:$0xff]
    %v2483 = vld [vmem:[%s6 + $0xd8] sm:$0xff]
    %v2484 = vld [vmem:[%s6 + $0xe0] sm:$0xff]
    %v2485 = vld [vmem:[%s6 + $0xe8] sm:$0xff]
    %v2486 = vld [vmem:[%s6 + $0xf0] sm:$0xff]
    %v2487 = vld [vmem:[%s6 + $0xf8] sm:$0xff]
    %v2488 = vld [vmem:[#allocation7] sm:$0x3]
    %v2490 = vperm.slane %v2488, 0
    %v2491 = vperm.slane %v2488, 1
    %v2526 = vunpack.c.l.b16 %v2456
    %v2527 = vunpack.c.h.b16 %v2456
    %v2528 = vunpack.c.l.b16 %v2457
    %v2529 = vunpack.c.h.b16 %v2457
    %v2530 = vunpack.c.l.b16 %v2458
    %v2531 = vunpack.c.h.b16 %v2458
    %v2532 = vunpack.c.l.b16 %v2459
    %v2533 = vunpack.c.h.b16 %v2459
    %v2534 = vunpack.c.l.b16 %v2460
    %v2535 = vunpack.c.h.b16 %v2460
    %v2536 = vunpack.c.l.b16 %v2461
    %v2537 = vunpack.c.h.b16 %v2461
    %v2538 = vunpack.c.l.b16 %v2462
    %v2539 = vunpack.c.h.b16 %v2462
    %v2540 = vunpack.c.l.b16 %v2463
    %v2541 = vunpack.c.h.b16 %v2463
    %v2542 = vunpack.c.l.b16 %v2464
    %v2543 = vunpack.c.h.b16 %v2464
    %v2544 = vunpack.c.l.b16 %v2465
    %v2545 = vunpack.c.h.b16 %v2465
    %v2546 = vunpack.c.l.b16 %v2466
    %v2547 = vunpack.c.h.b16 %v2466
    %v2548 = vunpack.c.l.b16 %v2467
    %v2549 = vunpack.c.h.b16 %v2467
    %v2550 = vunpack.c.l.b16 %v2468
    %v2551 = vunpack.c.h.b16 %v2468
    %v2552 = vunpack.c.l.b16 %v2469
    %v2553 = vunpack.c.h.b16 %v2469
    %v2554 = vunpack.c.l.b16 %v2470
    %v2555 = vunpack.c.h.b16 %v2470
    %v2556 = vunpack.c.l.b16 %v2471
    %v2557 = vunpack.c.h.b16 %v2471
    %v2558 = vunpack.c.l.b16 %v2472
    %v2559 = vunpack.c.h.b16 %v2472
    %v2560 = vunpack.c.l.b16 %v2473
    %v2561 = vunpack.c.h.b16 %v2473
    %v2562 = vunpack.c.l.b16 %v2474
    %v2563 = vunpack.c.h.b16 %v2474
    %v2564 = vunpack.c.l.b16 %v2475
    %v2565 = vunpack.c.h.b16 %v2475
    %v2566 = vunpack.c.l.b16 %v2476
    %v2567 = vunpack.c.h.b16 %v2476
    %v2568 = vunpack.c.l.b16 %v2477
    %v2569 = vunpack.c.h.b16 %v2477
    %v2570 = vunpack.c.l.b16 %v2478
    %v2571 = vunpack.c.h.b16 %v2478
    %v2572 = vunpack.c.l.b16 %v2479
    %v2573 = vunpack.c.h.b16 %v2479
    %v2574 = vunpack.c.l.b16 %v2480
    %v2575 = vunpack.c.h.b16 %v2480
    %v2576 = vunpack.c.l.b16 %v2481
    %v2577 = vunpack.c.h.b16 %v2481
    %v2578 = vunpack.c.l.b16 %v2482
    %v2579 = vunpack.c.h.b16 %v2482
    %v2580 = vunpack.c.l.b16 %v2483
    %v2581 = vunpack.c.h.b16 %v2483
    %v2582 = vunpack.c.l.b16 %v2484
    %v2583 = vunpack.c.h.b16 %v2484
    %v2584 = vunpack.c.l.b16 %v2485
    %v2585 = vunpack.c.h.b16 %v2485
    %v2586 = vunpack.c.l.b16 %v2486
    %v2587 = vunpack.c.h.b16 %v2486
    %v2588 = vunpack.c.l.b16 %v2487
    %v2589 = vunpack.c.h.b16 %v2487
    %v2590 = vpack.c.b16 %v2528, %v2526
    %v2591 = vpack.c.b16 %v2529, %v2527
    %v2592 = vpack.c.b16 %v2532, %v2530
    %v2593 = vpack.c.b16 %v2533, %v2531
    %v2594 = vpack.c.b16 %v2536, %v2534
    %v2595 = vpack.c.b16 %v2537, %v2535
    %v2596 = vpack.c.b16 %v2540, %v2538
    %v2597 = vpack.c.b16 %v2541, %v2539
    %v2598 = vpack.c.b16 %v2544, %v2542
    %v2599 = vpack.c.b16 %v2545, %v2543
    %v2600 = vpack.c.b16 %v2548, %v2546
    %v2601 = vpack.c.b16 %v2549, %v2547
    %v2602 = vpack.c.b16 %v2552, %v2550
    %v2603 = vpack.c.b16 %v2553, %v2551
    %v2604 = vpack.c.b16 %v2556, %v2554
    %v2605 = vpack.c.b16 %v2557, %v2555
    %v2606 = vpack.c.b16 %v2560, %v2558
    %v2607 = vpack.c.b16 %v2561, %v2559
    %v2608 = vpack.c.b16 %v2564, %v2562
    %v2609 = vpack.c.b16 %v2565, %v2563
    %v2610 = vpack.c.b16 %v2568, %v2566
    %v2611 = vpack.c.b16 %v2569, %v2567
    %v2612 = vpack.c.b16 %v2572, %v2570
    %v2613 = vpack.c.b16 %v2573, %v2571
    %v2614 = vpack.c.b16 %v2576, %v2574
    %v2615 = vpack.c.b16 %v2577, %v2575
    %v2616 = vpack.c.b16 %v2580, %v2578
    %v2617 = vpack.c.b16 %v2581, %v2579
    %v2618 = vpack.c.b16 %v2584, %v2582
    %v2619 = vpack.c.b16 %v2585, %v2583
    %v2620 = vpack.c.b16 %v2588, %v2586
    %v2621 = vpack.c.b16 %v2589, %v2587
    %2654 = vmatpush.bf16.msra.mxu0 %v2604
    %2655 = vmatpush.bf16.msra.mxu0 %v2602
    %2656 = vmatpush.bf16.msra.mxu0 %v2600
    %2657 = vmatpush.bf16.msra.mxu0 %v2598
    %2658 = vmatpush.bf16.msra.mxu0 %v2596
    %2659 = vmatpush.bf16.msra.mxu0 %v2594
    %2660 = vmatpush.bf16.msra.mxu0 %v2592
    %2661 = vmatpush.bf16.msra.mxu0 %v2590
    %2662 = vmatmul.bf16.gmra.mxu0 %v2454
    %v2663 = vpop.f32.mrf.mxu0
    %v2664 = vadd.f32 %v2490, %v2663
    %v2665 = vpop.f32.mrf.mxu0
    %2666 = vdwg.mxu0
    %2667 = vmatpush.bf16.msra.mxu0 %v2620
    %2668 = vmatpush.bf16.msra.mxu0 %v2618
    %2669 = vmatpush.bf16.msra.mxu0 %v2616
    %2670 = vmatpush.bf16.msra.mxu0 %v2614
    %2671 = vmatpush.bf16.msra.mxu0 %v2612
    %2672 = vmatpush.bf16.msra.mxu0 %v2610
    %2673 = vmatpush.bf16.msra.mxu0 %v2608
    %2674 = vmatpush.bf16.msra.mxu0 %v2606
    %2675 = vmatmul.bf16.gmra.mxu0 %v2455
    %v2676 = vpop.f32.mrf.mxu0
    %v2677 = vadd.f32 %v2664, %v2676
    %v2678 = vpop.f32.mrf.mxu0
    %2679 = vdwg.mxu0
    %2680 = vmatpush.bf16.msra.mxu0 %v2605
    %2681 = vmatpush.bf16.msra.mxu0 %v2603
    %2682 = vmatpush.bf16.msra.mxu0 %v2601
    %2683 = vmatpush.bf16.msra.mxu0 %v2599
    %2684 = vmatpush.bf16.msra.mxu0 %v2597
    %2685 = vmatpush.bf16.msra.mxu0 %v2595
    %2686 = vmatpush.bf16.msra.mxu0 %v2593
    %2687 = vmatpush.bf16.msra.mxu0 %v2591
    %2688 = vmatmul.bf16.gmra.mxu0 %v2454
    %v2689 = vpop.f32.mrf.mxu0
    %v2690 = vadd.f32 %v2491, %v2689
    %v2691 = vpop.f32.mrf.mxu0
    %2692 = vdwg.mxu0
    %2693 = vmatpush.bf16.msra.mxu0 %v2621
    %2694 = vmatpush.bf16.msra.mxu0 %v2619
    %2695 = vmatpush.bf16.msra.mxu0 %v2617
    %2696 = vmatpush.bf16.msra.mxu0 %v2615
    %2697 = vmatpush.bf16.msra.mxu0 %v2613
    %2698 = vmatpush.bf16.msra.mxu0 %v2611
    %2699 = vmatpush.bf16.msra.mxu0 %v2609
    %2700 = vmatpush.bf16.msra.mxu0 %v2607
    %2701 = vmatmul.bf16.gmra.mxu0 %v2455
    %v2702 = vpop.f32.mrf.mxu0
    %v2703 = vadd.f32 %v2690, %v2702
    %v2704 = vpop.f32.mrf.mxu0
    %2705 = vdwg.mxu0
    %2706 = vst [vmem:[#allocation19] sm:$0xff] %v2677
    %2707 = vst [vmem:[#allocation20] sm:$0xff] %v2703
    %v2708 = vld [vmem:[%s1] sm:$0xff]
    %v2709 = vmul.f32 %v2703, 0.5
    %v2710 = vmul.f32 %v2709, 1.442695
    %v2711 = vpow.pop %v2710
    %v2712 = vmul.f32 %v2708, %v2711
    %v2713 = vadd.f32 %v2677, %v2712
    %v2714 = vpack.c.bf16 %v2713, %v2713
    %v2715 = vld [vmem:[%s8] sm:$0xff]
    %v2716 = vld [vmem:[%s8 + $0x8] sm:$0xff]
    %v2717 = vld [vmem:[%s8 + $0x10] sm:$0xff]
    %v2718 = vld [vmem:[%s8 + $0x18] sm:$0xff]
    %v2719 = vld [vmem:[%s8 + $0x20] sm:$0xff]
    %v2720 = vld [vmem:[%s8 + $0x28] sm:$0xff]
    %v2721 = vld [vmem:[%s8 + $0x30] sm:$0xff]
    %v2722 = vld [vmem:[%s8 + $0x38] sm:$0xff]
    %v2723 = vld [vmem:[%s8 + $0x40] sm:$0xff]
    %v2724 = vld [vmem:[%s8 + $0x48] sm:$0xff]
    %v2725 = vld [vmem:[%s8 + $0x50] sm:$0xff]
    %v2726 = vld [vmem:[%s8 + $0x58] sm:$0xff]
    %v2727 = vld [vmem:[%s8 + $0x60] sm:$0xff]
    %v2728 = vld [vmem:[%s8 + $0x68] sm:$0xff]
    %v2729 = vld [vmem:[%s8 + $0x70] sm:$0xff]
    %v2730 = vld [vmem:[%s8 + $0x78] sm:$0xff]
    %v2731 = vld [vmem:[#allocation8] sm:$0x3]
    %v2733 = vperm.slane %v2731, 0
    %v2734 = vperm.slane %v2731, 1
    %v2753 = vunpack.c.l.b16 %v2715
    %v2754 = vunpack.c.h.b16 %v2715
    %v2755 = vunpack.c.l.b16 %v2716
    %v2756 = vunpack.c.h.b16 %v2716
    %v2757 = vunpack.c.l.b16 %v2717
    %v2758 = vunpack.c.h.b16 %v2717
    %v2759 = vunpack.c.l.b16 %v2718
    %v2760 = vunpack.c.h.b16 %v2718
    %v2761 = vunpack.c.l.b16 %v2719
    %v2762 = vunpack.c.h.b16 %v2719
    %v2763 = vunpack.c.l.b16 %v2720
    %v2764 = vunpack.c.h.b16 %v2720
    %v2765 = vunpack.c.l.b16 %v2721
    %v2766 = vunpack.c.h.b16 %v2721
    %v2767 = vunpack.c.l.b16 %v2722
    %v2768 = vunpack.c.h.b16 %v2722
    %v2769 = vunpack.c.l.b16 %v2723
    %v2770 = vunpack.c.h.b16 %v2723
    %v2771 = vunpack.c.l.b16 %v2724
    %v2772 = vunpack.c.h.b16 %v2724
    %v2773 = vunpack.c.l.b16 %v2725
    %v2774 = vunpack.c.h.b16 %v2725
    %v2775 = vunpack.c.l.b16 %v2726
    %v2776 = vunpack.c.h.b16 %v2726
    %v2777 = vunpack.c.l.b16 %v2727
    %v2778 = vunpack.c.h.b16 %v2727
    %v2779 = vunpack.c.l.b16 %v2728
    %v2780 = vunpack.c.h.b16 %v2728
    %v2781 = vunpack.c.l.b16 %v2729
    %v2782 = vunpack.c.h.b16 %v2729
    %v2783 = vunpack.c.l.b16 %v2730
    %v2784 = vunpack.c.h.b16 %v2730
    %v2785 = vpack.c.b16 %v2755, %v2753
    %v2786 = vpack.c.b16 %v2756, %v2754
    %v2787 = vpack.c.b16 %v2759, %v2757
    %v2788 = vpack.c.b16 %v2760, %v2758
    %v2789 = vpack.c.b16 %v2763, %v2761
    %v2790 = vpack.c.b16 %v2764, %v2762
    %v2791 = vpack.c.b16 %v2767, %v2765
    %v2792 = vpack.c.b16 %v2768, %v2766
    %v2793 = vpack.c.b16 %v2771, %v2769
    %v2794 = vpack.c.b16 %v2772, %v2770
    %v2795 = vpack.c.b16 %v2775, %v2773
    %v2796 = vpack.c.b16 %v2776, %v2774
    %v2797 = vpack.c.b16 %v2779, %v2777
    %v2798 = vpack.c.b16 %v2780, %v2778
    %v2799 = vpack.c.b16 %v2783, %v2781
    %v2800 = vpack.c.b16 %v2784, %v2782
    %2817 = vmatpush.bf16.msra.mxu0 %v2799
    %2818 = vmatpush.bf16.msra.mxu0 %v2797
    %2819 = vmatpush.bf16.msra.mxu0 %v2795
    %2820 = vmatpush.bf16.msra.mxu0 %v2793
    %2821 = vmatpush.bf16.msra.mxu0 %v2791
    %2822 = vmatpush.bf16.msra.mxu0 %v2789
    %2823 = vmatpush.bf16.msra.mxu0 %v2787
    %2824 = vmatpush.bf16.msra.mxu0 %v2785
    %2825 = vmatmul.bf16.gmra.mxu0 %v2714
    %v2826 = vpop.f32.mrf.mxu0
    %v2827 = vadd.f32 %v2733, %v2826
    %v2828 = vpop.f32.mrf.mxu0
    %2829 = vdwg.mxu0
    %2830 = vmatpush.bf16.msra.mxu0 %v2800
    %2831 = vmatpush.bf16.msra.mxu0 %v2798
    %2832 = vmatpush.bf16.msra.mxu0 %v2796
    %2833 = vmatpush.bf16.msra.mxu0 %v2794
    %2834 = vmatpush.bf16.msra.mxu0 %v2792
    %2835 = vmatpush.bf16.msra.mxu0 %v2790
    %2836 = vmatpush.bf16.msra.mxu0 %v2788
    %2837 = vmatpush.bf16.msra.mxu0 %v2786
    %2838 = vmatmul.bf16.gmra.mxu0 %v2714
    %v2839 = vpop.f32.mrf.mxu0
    %v2840 = vadd.f32 %v2734, %v2839
    %v2841 = vpop.f32.mrf.mxu0
    %2842 = vdwg.mxu0
    %v2843 = vld [vmem:[#allocation10] sm:$0x3]
    %v2844 = vld [vmem:[#allocation11] sm:$0x3]
    %v2845 = vrot.slane %v2827, 4
    %v2846 = vadd.f32 %v2827, %v2845
    %v2847 = vrot.slane %v2846, 2
    %v2848 = vadd.f32 %v2846, %v2847
    %v2849 = vrot.slane %v2848, 1
    %v2850 = vadd.f32 %v2848, %v2849
    %v2851 = vrot.slane %v2840, 4
    %v2852 = vadd.f32 %v2840, %v2851
    %v2853 = vrot.slane %v2852, 2
    %v2854 = vadd.f32 %v2852, %v2853
    %v2855 = vrot.slane %v2854, 1
    %v2856 = vadd.f32 %v2854, %v2855
    %v2857 = vrcp.pop 8.0
    %v2858 = vmul.f32 8.0, %v2857
    %v2859 = vsub.f32 1.0, %v2858
    %v2860 = vmul.f32 %v2857, %v2859
    %v2861 = vadd.f32 %v2857, %v2860
    %vm2862 = vweird.f32 %v2857
    %v2863 = vsel %vm2862, %v2857, %v2861
    %v2864 = vmul.f32 %v2850, %v2863
    %v2865 = vmul.f32 %v2856, %v2863
    %v2866 = vsub.f32 %v2827, %v2864
    %v2867 = vsub.f32 %v2840, %v2865
    %v2868 = vmul.f32 %v2866, %v2866
    %v2869 = vmul.f32 %v2867, %v2867
    %v2870 = vrot.slane %v2868, 4
    %v2871 = vadd.f32 %v2868, %v2870
    %v2872 = vrot.slane %v2871, 2
    %v2873 = vadd.f32 %v2871, %v2872
    %v2874 = vrot.slane %v2873, 1
    %v2875 = vadd.f32 %v2873, %v2874
    %v2876 = vrot.slane %v2869, 4
    %v2877 = vadd.f32 %v2869, %v2876
    %v2878 = vrot.slane %v2877, 2
    %v2879 = vadd.f32 %v2877, %v2878
    %v2880 = vrot.slane %v2879, 1
    %v2881 = vadd.f32 %v2879, %v2880
    %v2882 = vmul.f32 %v2875, %v2863
    %v2883 = vmul.f32 %v2881, %v2863
    %v2884 = vadd.f32 %v2882, 1e-05
    %v2885 = vadd.f32 %v2883, 1e-05
    %v2886 = vrsqrt.pop %v2884
    %v2887 = vmul.f32 %v2886, %v2884
    %v2888 = vmul.f32 %v2887, %v2886
    %v2889 = vmul.f32 0.5, %v2888
    %v2890 = vsub.f32 1.5, %v2889
    %v2891 = vmul.f32 %v2886, %v2890
    %vm2892 = vweird.f32 %v2884
    %vm2893 = vweird.f32 %v2886
    %vm2894 = vmor %vm2892, %vm2893
    %v2895 = vsel %vm2894, %v2886, %v2891
    %v2896 = vrsqrt.pop %v2885
    %v2897 = vmul.f32 %v2896, %v2885
    %v2898 = vmul.f32 %v2897, %v2896
    %v2899 = vmul.f32 0.5, %v2898
    %v2900 = vsub.f32 1.5, %v2899
    %v2901 = vmul.f32 %v2896, %v2900
    %vm2902 = vweird.f32 %v2885
    %vm2903 = vweird.f32 %v2896
    %vm2904 = vmor %vm2902, %vm2903
    %v2905 = vsel %vm2904, %v2896, %v2901
    %v2908 = vrot.slane %v2905, 7
    %vm2909 = vcmask 1040384
    %v2910 = vsel %vm2909, %v2895, %v2908
    %v2912 = vmul.f32 %v2843, %v2910
    %v2914 = vperm.slane %v2912, 0
    %v2915 = vperm.slane %v2912, 1
    %v2918 = vmul.f32 %v2864, %v2914
    %v2919 = vmul.f32 %v2865, %v2915
    %v2922 = vrot.slane %v2919, 7
    %v2923 = vsel %vm2909, %v2918, %v2922
    %v2925 = vsub.f32 %v2844, %v2923
    %v2926 = vmul.f32 %v2827, %v2914
    %v2927 = vmul.f32 %v2840, %v2915
    %v2929 = vperm.slane %v2925, 0
    %v2930 = vperm.slane %v2925, 1
    %v2933 = vadd.f32 %v2926, %v2929
    %v2934 = vadd.f32 %v2927, %v2930
    %vm2935 = vcmp.gt.f32.partialorder %v2933, 0.0
    %vm2936 = vcmp.gt.f32.partialorder %v2934, 0.0
    %v2937 = vmul.f32 %v2933, 0.2
    %v2938 = vmul.f32 %v2934, 0.2
    %v2939 = vsel %vm2935, %v2933, %v2937
    %v2940 = vsel %vm2936, %v2934, %v2938
    %v2941 = vpack.c.bf16 %v2939, %v2939
    %v2942 = vpack.c.bf16 %v2940, %v2940
    %v2943 = vld [vmem:[#allocation13] sm:$0xff]
    %v2944 = vld [vmem:[#allocation13 + $0x8] sm:$0xff]
    %v2945 = vld [vmem:[#allocation13 + $0x10] sm:$0xff]
    %v2946 = vld [vmem:[#allocation13 + $0x18] sm:$0xff]
    %v2947 = vld [vmem:[#allocation13 + $0x20] sm:$0xff]
    %v2948 = vld [vmem:[#allocation13 + $0x28] sm:$0xff]
    %v2949 = vld [vmem:[#allocation13 + $0x30] sm:$0xff]
    %v2950 = vld [vmem:[#allocation13 + $0x38] sm:$0xff]
    %v2951 = vld [vmem:[#allocation13 + $0x40] sm:$0xff]
    %v2952 = vld [vmem:[#allocation13 + $0x48] sm:$0xff]
    %v2953 = vld [vmem:[#allocation13 + $0x50] sm:$0xff]
    %v2954 = vld [vmem:[#allocation13 + $0x58] sm:$0xff]
    %v2955 = vld [vmem:[#allocation13 + $0x60] sm:$0xff]
    %v2956 = vld [vmem:[#allocation13 + $0x68] sm:$0xff]
    %v2957 = vld [vmem:[#allocation13 + $0x70] sm:$0xff]
    %v2958 = vld [vmem:[#allocation13 + $0x78] sm:$0xff]
    %v2959 = vld [vmem:[#allocation13 + $0x80] sm:$0xff]
    %v2960 = vld [vmem:[#allocation13 + $0x88] sm:$0xff]
    %v2961 = vld [vmem:[#allocation13 + $0x90] sm:$0xff]
    %v2962 = vld [vmem:[#allocation13 + $0x98] sm:$0xff]
    %v2963 = vld [vmem:[#allocation13 + $0xa0] sm:$0xff]
    %v2964 = vld [vmem:[#allocation13 + $0xa8] sm:$0xff]
    %v2965 = vld [vmem:[#allocation13 + $0xb0] sm:$0xff]
    %v2966 = vld [vmem:[#allocation13 + $0xb8] sm:$0xff]
    %v2967 = vld [vmem:[#allocation13 + $0xc0] sm:$0xff]
    %v2968 = vld [vmem:[#allocation13 + $0xc8] sm:$0xff]
    %v2969 = vld [vmem:[#allocation13 + $0xd0] sm:$0xff]
    %v2970 = vld [vmem:[#allocation13 + $0xd8] sm:$0xff]
    %v2971 = vld [vmem:[#allocation13 + $0xe0] sm:$0xff]
    %v2972 = vld [vmem:[#allocation13 + $0xe8] sm:$0xff]
    %v2973 = vld [vmem:[#allocation13 + $0xf0] sm:$0xff]
    %v2974 = vld [vmem:[#allocation13 + $0xf8] sm:$0xff]
    %v2975 = vld [vmem:[#allocation13 + $0x100] sm:$0xff]
    %v2976 = vld [vmem:[#allocation13 + $0x108] sm:$0xff]
    %v2977 = vld [vmem:[#allocation13 + $0x110] sm:$0xff]
    %v2978 = vld [vmem:[#allocation13 + $0x118] sm:$0xff]
    %v2979 = vld [vmem:[#allocation13 + $0x120] sm:$0xff]
    %v2980 = vld [vmem:[#allocation13 + $0x128] sm:$0xff]
    %v2981 = vld [vmem:[#allocation13 + $0x130] sm:$0xff]
    %v2982 = vld [vmem:[#allocation13 + $0x138] sm:$0xff]
    %v2983 = vld [vmem:[#allocation13 + $0x140] sm:$0xff]
    %v2984 = vld [vmem:[#allocation13 + $0x148] sm:$0xff]
    %v2985 = vld [vmem:[#allocation13 + $0x150] sm:$0xff]
    %v2986 = vld [vmem:[#allocation13 + $0x158] sm:$0xff]
    %v2987 = vld [vmem:[#allocation13 + $0x160] sm:$0xff]
    %v2988 = vld [vmem:[#allocation13 + $0x168] sm:$0xff]
    %v2989 = vld [vmem:[#allocation13 + $0x170] sm:$0xff]
    %v2990 = vld [vmem:[#allocation13 + $0x178] sm:$0xff]
    %v2991 = vld [vmem:[#allocation13 + $0x180] sm:$0xff]
    %v2992 = vld [vmem:[#allocation13 + $0x188] sm:$0xff]
    %v2993 = vld [vmem:[#allocation13 + $0x190] sm:$0xff]
    %v2994 = vld [vmem:[#allocation13 + $0x198] sm:$0xff]
    %v2995 = vld [vmem:[#allocation13 + $0x1a0] sm:$0xff]
    %v2996 = vld [vmem:[#allocation13 + $0x1a8] sm:$0xff]
    %v2997 = vld [vmem:[#allocation13 + $0x1b0] sm:$0xff]
    %v2998 = vld [vmem:[#allocation13 + $0x1b8] sm:$0xff]
    %v2999 = vld [vmem:[#allocation13 + $0x1c0] sm:$0xff]
    %v3000 = vld [vmem:[#allocation13 + $0x1c8] sm:$0xff]
    %v3001 = vld [vmem:[#allocation13 + $0x1d0] sm:$0xff]
    %v3002 = vld [vmem:[#allocation13 + $0x1d8] sm:$0xff]
    %v3003 = vld [vmem:[#allocation13 + $0x1e0] sm:$0xff]
    %v3004 = vld [vmem:[#allocation13 + $0x1e8] sm:$0xff]
    %v3005 = vld [vmem:[#allocation13 + $0x1f0] sm:$0xff]
    %v3006 = vld [vmem:[#allocation13 + $0x1f8] sm:$0xff]
    %v3007 = vld [vmem:[%s13] sm:$0xf]
    %v3009 = vperm.slane %v3007, 0
    %v3010 = vperm.slane %v3007, 1
    %v3011 = vperm.slane %v3007, 2
    %v3012 = vperm.slane %v3007, 3
    %v3081 = vunpack.c.l.b16 %v2943
    %v3082 = vunpack.c.h.b16 %v2943
    %v3083 = vunpack.c.l.b16 %v2944
    %v3084 = vunpack.c.h.b16 %v2944
    %v3085 = vunpack.c.l.b16 %v2945
    %v3086 = vunpack.c.h.b16 %v2945
    %v3087 = vunpack.c.l.b16 %v2946
    %v3088 = vunpack.c.h.b16 %v2946
    %v3089 = vunpack.c.l.b16 %v2947
    %v3090 = vunpack.c.h.b16 %v2947
    %v3091 = vunpack.c.l.b16 %v2948
    %v3092 = vunpack.c.h.b16 %v2948
    %v3093 = vunpack.c.l.b16 %v2949
    %v3094 = vunpack.c.h.b16 %v2949
    %v3095 = vunpack.c.l.b16 %v2950
    %v3096 = vunpack.c.h.b16 %v2950
    %v3097 = vunpack.c.l.b16 %v2951
    %v3098 = vunpack.c.h.b16 %v2951
    %v3099 = vunpack.c.l.b16 %v2952
    %v3100 = vunpack.c.h.b16 %v2952
    %v3101 = vunpack.c.l.b16 %v2953
    %v3102 = vunpack.c.h.b16 %v2953
    %v3103 = vunpack.c.l.b16 %v2954
    %v3104 = vunpack.c.h.b16 %v2954
    %v3105 = vunpack.c.l.b16 %v2955
    %v3106 = vunpack.c.h.b16 %v2955
    %v3107 = vunpack.c.l.b16 %v2956
    %v3108 = vunpack.c.h.b16 %v2956
    %v3109 = vunpack.c.l.b16 %v2957
    %v3110 = vunpack.c.h.b16 %v2957
    %v3111 = vunpack.c.l.b16 %v2958
    %v3112 = vunpack.c.h.b16 %v2958
    %v3113 = vunpack.c.l.b16 %v2959
    %v3114 = vunpack.c.h.b16 %v2959
    %v3115 = vunpack.c.l.b16 %v2960
    %v3116 = vunpack.c.h.b16 %v2960
    %v3117 = vunpack.c.l.b16 %v2961
    %v3118 = vunpack.c.h.b16 %v2961
    %v3119 = vunpack.c.l.b16 %v2962
    %v3120 = vunpack.c.h.b16 %v2962
    %v3121 = vunpack.c.l.b16 %v2963
    %v3122 = vunpack.c.h.b16 %v2963
    %v3123 = vunpack.c.l.b16 %v2964
    %v3124 = vunpack.c.h.b16 %v2964
    %v3125 = vunpack.c.l.b16 %v2965
    %v3126 = vunpack.c.h.b16 %v2965
    %v3127 = vunpack.c.l.b16 %v2966
    %v3128 = vunpack.c.h.b16 %v2966
    %v3129 = vunpack.c.l.b16 %v2967
    %v3130 = vunpack.c.h.b16 %v2967
    %v3131 = vunpack.c.l.b16 %v2968
    %v3132 = vunpack.c.h.b16 %v2968
    %v3133 = vunpack.c.l.b16 %v2969
    %v3134 = vunpack.c.h.b16 %v2969
    %v3135 = vunpack.c.l.b16 %v2970
    %v3136 = vunpack.c.h.b16 %v2970
    %v3137 = vunpack.c.l.b16 %v2971
    %v3138 = vunpack.c.h.b16 %v2971
    %v3139 = vunpack.c.l.b16 %v2972
    %v3140 = vunpack.c.h.b16 %v2972
    %v3141 = vunpack.c.l.b16 %v2973
    %v3142 = vunpack.c.h.b16 %v2973
    %v3143 = vunpack.c.l.b16 %v2974
    %v3144 = vunpack.c.h.b16 %v2974
    %v3145 = vunpack.c.l.b16 %v2975
    %v3146 = vunpack.c.h.b16 %v2975
    %v3147 = vunpack.c.l.b16 %v2976
    %v3148 = vunpack.c.h.b16 %v2976
    %v3149 = vunpack.c.l.b16 %v2977
    %v3150 = vunpack.c.h.b16 %v2977
    %v3151 = vunpack.c.l.b16 %v2978
    %v3152 = vunpack.c.h.b16 %v2978
    %v3153 = vunpack.c.l.b16 %v2979
    %v3154 = vunpack.c.h.b16 %v2979
    %v3155 = vunpack.c.l.b16 %v2980
    %v3156 = vunpack.c.h.b16 %v2980
    %v3157 = vunpack.c.l.b16 %v2981
    %v3158 = vunpack.c.h.b16 %v2981
    %v3159 = vunpack.c.l.b16 %v2982
    %v3160 = vunpack.c.h.b16 %v2982
    %v3161 = vunpack.c.l.b16 %v2983
    %v3162 = vunpack.c.h.b16 %v2983
    %v3163 = vunpack.c.l.b16 %v2984
    %v3164 = vunpack.c.h.b16 %v2984
    %v3165 = vunpack.c.l.b16 %v2985
    %v3166 = vunpack.c.h.b16 %v2985
    %v3167 = vunpack.c.l.b16 %v2986
    %v3168 = vunpack.c.h.b16 %v2986
    %v3169 = vunpack.c.l.b16 %v2987
    %v3170 = vunpack.c.h.b16 %v2987
    %v3171 = vunpack.c.l.b16 %v2988
    %v3172 = vunpack.c.h.b16 %v2988
    %v3173 = vunpack.c.l.b16 %v2989
    %v3174 = vunpack.c.h.b16 %v2989
    %v3175 = vunpack.c.l.b16 %v2990
    %v3176 = vunpack.c.h.b16 %v2990
    %v3177 = vunpack.c.l.b16 %v2991
    %v3178 = vunpack.c.h.b16 %v2991
    %v3179 = vunpack.c.l.b16 %v2992
    %v3180 = vunpack.c.h.b16 %v2992
    %v3181 = vunpack.c.l.b16 %v2993
    %v3182 = vunpack.c.h.b16 %v2993
    %v3183 = vunpack.c.l.b16 %v2994
    %v3184 = vunpack.c.h.b16 %v2994
    %v3185 = vunpack.c.l.b16 %v2995
    %v3186 = vunpack.c.h.b16 %v2995
    %v3187 = vunpack.c.l.b16 %v2996
    %v3188 = vunpack.c.h.b16 %v2996
    %v3189 = vunpack.c.l.b16 %v2997
    %v3190 = vunpack.c.h.b16 %v2997
    %v3191 = vunpack.c.l.b16 %v2998
    %v3192 = vunpack.c.h.b16 %v2998
    %v3193 = vunpack.c.l.b16 %v2999
    %v3194 = vunpack.c.h.b16 %v2999
    %v3195 = vunpack.c.l.b16 %v3000
    %v3196 = vunpack.c.h.b16 %v3000
    %v3197 = vunpack.c.l.b16 %v3001
    %v3198 = vunpack.c.h.b16 %v3001
    %v3199 = vunpack.c.l.b16 %v3002
    %v3200 = vunpack.c.h.b16 %v3002
    %v3201 = vunpack.c.l.b16 %v3003
    %v3202 = vunpack.c.h.b16 %v3003
    %v3203 = vunpack.c.l.b16 %v3004
    %v3204 = vunpack.c.h.b16 %v3004
    %v3205 = vunpack.c.l.b16 %v3005
    %v3206 = vunpack.c.h.b16 %v3005
    %v3207 = vunpack.c.l.b16 %v3006
    %v3208 = vunpack.c.h.b16 %v3006
    %v3209 = vpack.c.b16 %v3085, %v3081
    %v3210 = vpack.c.b16 %v3086, %v3082
    %v3211 = vpack.c.b16 %v3087, %v3083
    %v3212 = vpack.c.b16 %v3088, %v3084
    %v3213 = vpack.c.b16 %v3093, %v3089
    %v3214 = vpack.c.b16 %v3094, %v3090
    %v3215 = vpack.c.b16 %v3095, %v3091
    %v3216 = vpack.c.b16 %v3096, %v3092
    %v3217 = vpack.c.b16 %v3101, %v3097
    %v3218 = vpack.c.b16 %v3102, %v3098
    %v3219 = vpack.c.b16 %v3103, %v3099
    %v3220 = vpack.c.b16 %v3104, %v3100
    %v3221 = vpack.c.b16 %v3109, %v3105
    %v3222 = vpack.c.b16 %v3110, %v3106
    %v3223 = vpack.c.b16 %v3111, %v3107
    %v3224 = vpack.c.b16 %v3112, %v3108
    %v3225 = vpack.c.b16 %v3117, %v3113
    %v3226 = vpack.c.b16 %v3118, %v3114
    %v3227 = vpack.c.b16 %v3119, %v3115
    %v3228 = vpack.c.b16 %v3120, %v3116
    %v3229 = vpack.c.b16 %v3125, %v3121
    %v3230 = vpack.c.b16 %v3126, %v3122
    %v3231 = vpack.c.b16 %v3127, %v3123
    %v3232 = vpack.c.b16 %v3128, %v3124
    %v3233 = vpack.c.b16 %v3133, %v3129
    %v3234 = vpack.c.b16 %v3134, %v3130
    %v3235 = vpack.c.b16 %v3135, %v3131
    %v3236 = vpack.c.b16 %v3136, %v3132
    %v3237 = vpack.c.b16 %v3141, %v3137
    %v3238 = vpack.c.b16 %v3142, %v3138
    %v3239 = vpack.c.b16 %v3143, %v3139
    %v3240 = vpack.c.b16 %v3144, %v3140
    %v3241 = vpack.c.b16 %v3149, %v3145
    %v3242 = vpack.c.b16 %v3150, %v3146
    %v3243 = vpack.c.b16 %v3151, %v3147
    %v3244 = vpack.c.b16 %v3152, %v3148
    %v3245 = vpack.c.b16 %v3157, %v3153
    %v3246 = vpack.c.b16 %v3158, %v3154
    %v3247 = vpack.c.b16 %v3159, %v3155
    %v3248 = vpack.c.b16 %v3160, %v3156
    %v3249 = vpack.c.b16 %v3165, %v3161
    %v3250 = vpack.c.b16 %v3166, %v3162
    %v3251 = vpack.c.b16 %v3167, %v3163
    %v3252 = vpack.c.b16 %v3168, %v3164
    %v3253 = vpack.c.b16 %v3173, %v3169
    %v3254 = vpack.c.b16 %v3174, %v3170
    %v3255 = vpack.c.b16 %v3175, %v3171
    %v3256 = vpack.c.b16 %v3176, %v3172
    %v3257 = vpack.c.b16 %v3181, %v3177
    %v3258 = vpack.c.b16 %v3182, %v3178
    %v3259 = vpack.c.b16 %v3183, %v3179
    %v3260 = vpack.c.b16 %v3184, %v3180
    %v3261 = vpack.c.b16 %v3189, %v3185
    %v3262 = vpack.c.b16 %v3190, %v3186
    %v3263 = vpack.c.b16 %v3191, %v3187
    %v3264 = vpack.c.b16 %v3192, %v3188
    %v3265 = vpack.c.b16 %v3197, %v3193
    %v3266 = vpack.c.b16 %v3198, %v3194
    %v3267 = vpack.c.b16 %v3199, %v3195
    %v3268 = vpack.c.b16 %v3200, %v3196
    %v3269 = vpack.c.b16 %v3205, %v3201
    %v3270 = vpack.c.b16 %v3206, %v3202
    %v3271 = vpack.c.b16 %v3207, %v3203
    %v3272 = vpack.c.b16 %v3208, %v3204
    %3337 = vmatpush.bf16.msra.mxu0 %v3237
    %3338 = vmatpush.bf16.msra.mxu0 %v3233
    %3339 = vmatpush.bf16.msra.mxu0 %v3229
    %3340 = vmatpush.bf16.msra.mxu0 %v3225
    %3341 = vmatpush.bf16.msra.mxu0 %v3221
    %3342 = vmatpush.bf16.msra.mxu0 %v3217
    %3343 = vmatpush.bf16.msra.mxu0 %v3213
    %3344 = vmatpush.bf16.msra.mxu0 %v3209
    %3345 = vmatmul.bf16.gmra.mxu0 %v2941
    %v3346 = vpop.f32.mrf.mxu0
    %v3347 = vadd.f32 %v3009, %v3346
    %v3348 = vpop.f32.mrf.mxu0
    %3349 = vdwg.mxu0
    %3350 = vmatpush.bf16.msra.mxu0 %v3269
    %3351 = vmatpush.bf16.msra.mxu0 %v3265
    %3352 = vmatpush.bf16.msra.mxu0 %v3261
    %3353 = vmatpush.bf16.msra.mxu0 %v3257
    %3354 = vmatpush.bf16.msra.mxu0 %v3253
    %3355 = vmatpush.bf16.msra.mxu0 %v3249
    %3356 = vmatpush.bf16.msra.mxu0 %v3245
    %3357 = vmatpush.bf16.msra.mxu0 %v3241
    %3358 = vmatmul.bf16.gmra.mxu0 %v2942
    %v3359 = vpop.f32.mrf.mxu0
    %v3360 = vadd.f32 %v3347, %v3359
    %v3361 = vpop.f32.mrf.mxu0
    %3362 = vdwg.mxu0
    %3363 = vmatpush.bf16.msra.mxu0 %v3238
    %3364 = vmatpush.bf16.msra.mxu0 %v3234
    %3365 = vmatpush.bf16.msra.mxu0 %v3230
    %3366 = vmatpush.bf16.msra.mxu0 %v3226
    %3367 = vmatpush.bf16.msra.mxu0 %v3222
    %3368 = vmatpush.bf16.msra.mxu0 %v3218
    %3369 = vmatpush.bf16.msra.mxu0 %v3214
    %3370 = vmatpush.bf16.msra.mxu0 %v3210
    %3371 = vmatmul.bf16.gmra.mxu0 %v2941
    %v3372 = vpop.f32.mrf.mxu0
    %v3373 = vadd.f32 %v3010, %v3372
    %v3374 = vpop.f32.mrf.mxu0
    %3375 = vdwg.mxu0
    %3376 = vmatpush.bf16.msra.mxu0 %v3270
    %3377 = vmatpush.bf16.msra.mxu0 %v3266
    %3378 = vmatpush.bf16.msra.mxu0 %v3262
    %3379 = vmatpush.bf16.msra.mxu0 %v3258
    %3380 = vmatpush.bf16.msra.mxu0 %v3254
    %3381 = vmatpush.bf16.msra.mxu0 %v3250
    %3382 = vmatpush.bf16.msra.mxu0 %v3246
    %3383 = vmatpush.bf16.msra.mxu0 %v3242
    %3384 = vmatmul.bf16.gmra.mxu0 %v2942
    %v3385 = vpop.f32.mrf.mxu0
    %v3386 = vadd.f32 %v3373, %v3385
    %v3387 = vpop.f32.mrf.mxu0
    %3388 = vdwg.mxu0
    %3389 = vmatpush.bf16.msra.mxu0 %v3239
    %3390 = vmatpush.bf16.msra.mxu0 %v3235
    %3391 = vmatpush.bf16.msra.mxu0 %v3231
    %3392 = vmatpush.bf16.msra.mxu0 %v3227
    %3393 = vmatpush.bf16.msra.mxu0 %v3223
    %3394 = vmatpush.bf16.msra.mxu0 %v3219
    %3395 = vmatpush.bf16.msra.mxu0 %v3215
    %3396 = vmatpush.bf16.msra.mxu0 %v3211
    %3397 = vmatmul.bf16.gmra.mxu0 %v2941
    %v3398 = vpop.f32.mrf.mxu0
    %v3399 = vadd.f32 %v3011, %v3398
    %v3400 = vpop.f32.mrf.mxu0
    %3401 = vdwg.mxu0
    %3402 = vmatpush.bf16.msra.mxu0 %v3271
    %3403 = vmatpush.bf16.msra.mxu0 %v3267
    %3404 = vmatpush.bf16.msra.mxu0 %v3263
    %3405 = vmatpush.bf16.msra.mxu0 %v3259
    %3406 = vmatpush.bf16.msra.mxu0 %v3255
    %3407 = vmatpush.bf16.msra.mxu0 %v3251
    %3408 = vmatpush.bf16.msra.mxu0 %v3247
    %3409 = vmatpush.bf16.msra.mxu0 %v3243
    %3410 = vmatmul.bf16.gmra.mxu0 %v2942
    %v3411 = vpop.f32.mrf.mxu0
    %v3412 = vadd.f32 %v3399, %v3411
    %v3413 = vpop.f32.mrf.mxu0
    %3414 = vdwg.mxu0
    %3415 = vmatpush.bf16.msra.mxu0 %v3240
    %3416 = vmatpush.bf16.msra.mxu0 %v3236
    %3417 = vmatpush.bf16.msra.mxu0 %v3232
    %3418 = vmatpush.bf16.msra.mxu0 %v3228
    %3419 = vmatpush.bf16.msra.mxu0 %v3224
    %3420 = vmatpush.bf16.msra.mxu0 %v3220
    %3421 = vmatpush.bf16.msra.mxu0 %v3216
    %3422 = vmatpush.bf16.msra.mxu0 %v3212
    %3423 = vmatmul.bf16.gmra.mxu0 %v2941
    %v3424 = vpop.f32.mrf.mxu0
    %v3425 = vadd.f32 %v3012, %v3424
    %v3426 = vpop.f32.mrf.mxu0
    %3427 = vdwg.mxu0
    %3428 = vmatpush.bf16.msra.mxu0 %v3272
    %3429 = vmatpush.bf16.msra.mxu0 %v3268
    %3430 = vmatpush.bf16.msra.mxu0 %v3264
    %3431 = vmatpush.bf16.msra.mxu0 %v3260
    %3432 = vmatpush.bf16.msra.mxu0 %v3256
    %3433 = vmatpush.bf16.msra.mxu0 %v3252
    %3434 = vmatpush.bf16.msra.mxu0 %v3248
    %3435 = vmatpush.bf16.msra.mxu0 %v3244
    %3436 = vmatmul.bf16.gmra.mxu0 %v2942
    %v3437 = vpop.f32.mrf.mxu0
    %v3438 = vadd.f32 %v3425, %v3437
    %v3439 = vpop.f32.mrf.mxu0
    %3440 = vdwg.mxu0
    %v3441 = vld [vmem:[#allocation14] sm:$0xf]
    %v3442 = vld [vmem:[#allocation16] sm:$0xf]
    %v3443 = vrot.slane %v3360, 4
    %v3444 = vadd.f32 %v3360, %v3443
    %v3445 = vrot.slane %v3444, 2
    %v3446 = vadd.f32 %v3444, %v3445
    %v3447 = vrot.slane %v3446, 1
    %v3448 = vadd.f32 %v3446, %v3447
    %v3449 = vrot.slane %v3386, 4
    %v3450 = vadd.f32 %v3386, %v3449
    %v3451 = vrot.slane %v3450, 2
    %v3452 = vadd.f32 %v3450, %v3451
    %v3453 = vrot.slane %v3452, 1
    %v3454 = vadd.f32 %v3452, %v3453
    %v3455 = vrot.slane %v3412, 4
    %v3456 = vadd.f32 %v3412, %v3455
    %v3457 = vrot.slane %v3456, 2
    %v3458 = vadd.f32 %v3456, %v3457
    %v3459 = vrot.slane %v3458, 1
    %v3460 = vadd.f32 %v3458, %v3459
    %v3461 = vrot.slane %v3438, 4
    %v3462 = vadd.f32 %v3438, %v3461
    %v3463 = vrot.slane %v3462, 2
    %v3464 = vadd.f32 %v3462, %v3463
    %v3465 = vrot.slane %v3464, 1
    %v3466 = vadd.f32 %v3464, %v3465
    %v3467 = vmul.f32 %v3448, %v2863
    %v3468 = vmul.f32 %v3454, %v2863
    %v3469 = vmul.f32 %v3460, %v2863
    %v3470 = vmul.f32 %v3466, %v2863
    %v3471 = vsub.f32 %v3360, %v3467
    %v3472 = vsub.f32 %v3386, %v3468
    %v3473 = vsub.f32 %v3412, %v3469
    %v3474 = vsub.f32 %v3438, %v3470
    %v3475 = vmul.f32 %v3471, %v3471
    %v3476 = vmul.f32 %v3472, %v3472
    %v3477 = vmul.f32 %v3473, %v3473
    %v3478 = vmul.f32 %v3474, %v3474
    %v3479 = vrot.slane %v3475, 4
    %v3480 = vadd.f32 %v3475, %v3479
    %v3481 = vrot.slane %v3480, 2
    %v3482 = vadd.f32 %v3480, %v3481
    %v3483 = vrot.slane %v3482, 1
    %v3484 = vadd.f32 %v3482, %v3483
    %v3485 = vrot.slane %v3476, 4
    %v3486 = vadd.f32 %v3476, %v3485
    %v3487 = vrot.slane %v3486, 2
    %v3488 = vadd.f32 %v3486, %v3487
    %v3489 = vrot.slane %v3488, 1
    %v3490 = vadd.f32 %v3488, %v3489
    %v3491 = vrot.slane %v3477, 4
    %v3492 = vadd.f32 %v3477, %v3491
    %v3493 = vrot.slane %v3492, 2
    %v3494 = vadd.f32 %v3492, %v3493
    %v3495 = vrot.slane %v3494, 1
    %v3496 = vadd.f32 %v3494, %v3495
    %v3497 = vrot.slane %v3478, 4
    %v3498 = vadd.f32 %v3478, %v3497
    %v3499 = vrot.slane %v3498, 2
    %v3500 = vadd.f32 %v3498, %v3499
    %v3501 = vrot.slane %v3500, 1
    %v3502 = vadd.f32 %v3500, %v3501
    %v3503 = vmul.f32 %v3484, %v2863
    %v3504 = vmul.f32 %v3490, %v2863
    %v3505 = vmul.f32 %v3496, %v2863
    %v3506 = vmul.f32 %v3502, %v2863
    %v3507 = vadd.f32 %v3503, 1e-05
    %v3508 = vadd.f32 %v3504, 1e-05
    %v3509 = vadd.f32 %v3505, 1e-05
    %v3510 = vadd.f32 %v3506, 1e-05
    %v3511 = vrsqrt.pop %v3507
    %v3512 = vmul.f32 %v3511, %v3507
    %v3513 = vmul.f32 %v3512, %v3511
    %v3514 = vmul.f32 0.5, %v3513
    %v3515 = vsub.f32 1.5, %v3514
    %v3516 = vmul.f32 %v3511, %v3515
    %vm3517 = vweird.f32 %v3507
    %vm3518 = vweird.f32 %v3511
    %vm3519 = vmor %vm3517, %vm3518
    %v3520 = vsel %vm3519, %v3511, %v3516
    %v3521 = vrsqrt.pop %v3508
    %v3522 = vmul.f32 %v3521, %v3508
    %v3523 = vmul.f32 %v3522, %v3521
    %v3524 = vmul.f32 0.5, %v3523
    %v3525 = vsub.f32 1.5, %v3524
    %v3526 = vmul.f32 %v3521, %v3525
    %vm3527 = vweird.f32 %v3508
    %vm3528 = vweird.f32 %v3521
    %vm3529 = vmor %vm3527, %vm3528
    %v3530 = vsel %vm3529, %v3521, %v3526
    %v3531 = vrsqrt.pop %v3509
    %v3532 = vmul.f32 %v3531, %v3509
    %v3533 = vmul.f32 %v3532, %v3531
    %v3534 = vmul.f32 0.5, %v3533
    %v3535 = vsub.f32 1.5, %v3534
    %v3536 = vmul.f32 %v3531, %v3535
    %vm3537 = vweird.f32 %v3509
    %vm3538 = vweird.f32 %v3531
    %vm3539 = vmor %vm3537, %vm3538
    %v3540 = vsel %vm3539, %v3531, %v3536
    %v3541 = vrsqrt.pop %v3510
    %v3542 = vmul.f32 %v3541, %v3510
    %v3543 = vmul.f32 %v3542, %v3541
    %v3544 = vmul.f32 0.5, %v3543
    %v3545 = vsub.f32 1.5, %v3544
    %v3546 = vmul.f32 %v3541, %v3545
    %vm3547 = vweird.f32 %v3510
    %vm3548 = vweird.f32 %v3541
    %vm3549 = vmor %vm3547, %vm3548
    %v3550 = vsel %vm3549, %v3541, %v3546
    %v3555 = vrot.slane %v3530, 7
    %v3556 = vrot.slane %v3540, 6
    %v3557 = vrot.slane %v3550, 5
    %v3558 = vsel %vm2909, %v3520, %v3555
    %vm3559 = vcmask 1042434
    %v3560 = vsel %vm3559, %v3556, %v3557
    %vm3561 = vcmask 1041408
    %v3562 = vsel %vm3561, %v3558, %v3560
    %v3564 = vmul.f32 %v3441, %v3562
    %v3566 = vperm.slane %v3564, 0
    %v3567 = vperm.slane %v3564, 1
    %v3568 = vperm.slane %v3564, 2
    %v3569 = vperm.slane %v3564, 3
    %v3574 = vmul.f32 %v3467, %v3566
    %v3575 = vmul.f32 %v3468, %v3567
    %v3576 = vmul.f32 %v3469, %v3568
    %v3577 = vmul.f32 %v3470, %v3569
    %v3582 = vrot.slane %v3575, 7
    %v3583 = vrot.slane %v3576, 6
    %v3584 = vrot.slane %v3577, 5
    %v3585 = vsel %vm2909, %v3574, %v3582
    %v3586 = vsel %vm3559, %v3583, %v3584
    %v3587 = vsel %vm3561, %v3585, %v3586
    %v3589 = vsub.f32 %v3442, %v3587
    %v3590 = vmul.f32 %v3360, %v3566
    %v3591 = vmul.f32 %v3386, %v3567
    %v3592 = vmul.f32 %v3412, %v3568
    %v3593 = vmul.f32 %v3438, %v3569
    %v3595 = vperm.slane %v3589, 0
    %v3596 = vperm.slane %v3589, 1
    %v3597 = vperm.slane %v3589, 2
    %v3598 = vperm.slane %v3589, 3
    %v3603 = vadd.f32 %v3590, %v3595
    %v3604 = vadd.f32 %v3591, %v3596
    %v3605 = vadd.f32 %v3592, %v3597
    %v3606 = vadd.f32 %v3593, %v3598
    %vm3607 = vcmp.gt.f32.partialorder %v3603, 0.0
    %vm3608 = vcmp.gt.f32.partialorder %v3604, 0.0
    %vm3609 = vcmp.gt.f32.partialorder %v3605, 0.0
    %vm3610 = vcmp.gt.f32.partialorder %v3606, 0.0
    %v3611 = vmul.f32 %v3603, 0.2
    %v3612 = vmul.f32 %v3604, 0.2
    %v3613 = vmul.f32 %v3605, 0.2
    %v3614 = vmul.f32 %v3606, 0.2
    %v3615 = vsel %vm3607, %v3603, %v3611
    %v3616 = vsel %vm3608, %v3604, %v3612
    %v3617 = vsel %vm3609, %v3605, %v3613
    %v3618 = vsel %vm3610, %v3606, %v3614
    %v3619 = vpack.c.bf16 %v3615, %v3615
    %v3620 = vpack.c.bf16 %v3616, %v3616
    %v3621 = vpack.c.bf16 %v3617, %v3617
    %v3622 = vpack.c.bf16 %v3618, %v3618
    %v3623 = vld [vmem:[#allocation17] sm:$0xff]
    %v3624 = vld [vmem:[#allocation17 + $0x8] sm:$0xff]
    %v3625 = vld [vmem:[#allocation17 + $0x10] sm:$0xff]
    %v3626 = vld [vmem:[#allocation17 + $0x18] sm:$0xf]
    %v3627 = vld [vmem:[#allocation17 + $0x1c] sm:$0xff]
    %v3628 = vld [vmem:[#allocation17 + $0x24] sm:$0xff]
    %v3629 = vld [vmem:[#allocation17 + $0x2c] sm:$0xff]
    %v3630 = vld [vmem:[#allocation17 + $0x34] sm:$0xf]
    %v3631 = vld [vmem:[#allocation17 + $0x38] sm:$0xff]
    %v3632 = vld [vmem:[#allocation17 + $0x40] sm:$0xff]
    %v3633 = vld [vmem:[#allocation17 + $0x48] sm:$0xff]
    %v3634 = vld [vmem:[#allocation17 + $0x50] sm:$0xf]
    %v3635 = vld [vmem:[#allocation17 + $0x54] sm:$0xff]
    %v3636 = vld [vmem:[#allocation17 + $0x5c] sm:$0xff]
    %v3637 = vld [vmem:[#allocation17 + $0x64] sm:$0xff]
    %v3638 = vld [vmem:[#allocation17 + $0x6c] sm:$0xf]
    %v3639 = vld [vmem:[#allocation17 + $0x70] sm:$0xff]
    %v3640 = vld [vmem:[#allocation17 + $0x78] sm:$0xff]
    %v3641 = vld [vmem:[#allocation17 + $0x80] sm:$0xff]
    %v3642 = vld [vmem:[#allocation17 + $0x88] sm:$0xf]
    %v3643 = vld [vmem:[#allocation17 + $0x8c] sm:$0xff]
    %v3644 = vld [vmem:[#allocation17 + $0x94] sm:$0xff]
    %v3645 = vld [vmem:[#allocation17 + $0x9c] sm:$0xff]
    %v3646 = vld [vmem:[#allocation17 + $0xa4] sm:$0xf]
    %v3647 = vld [vmem:[#allocation17 + $0xa8] sm:$0xff]
    %v3648 = vld [vmem:[#allocation17 + $0xb0] sm:$0xff]
    %v3649 = vld [vmem:[#allocation17 + $0xb8] sm:$0xff]
    %v3650 = vld [vmem:[#allocation17 + $0xc0] sm:$0xf]
    %v3651 = vld [vmem:[#allocation17 + $0xc4] sm:$0xff]
    %v3652 = vld [vmem:[#allocation17 + $0xcc] sm:$0xff]
    %v3653 = vld [vmem:[#allocation17 + $0xd4] sm:$0xff]
    %v3654 = vld [vmem:[#allocation17 + $0xdc] sm:$0xf]
    %v3655 = vld [vmem:[#allocation17 + $0xe0] sm:$0xff]
    %v3656 = vld [vmem:[#allocation17 + $0xe8] sm:$0xff]
    %v3657 = vld [vmem:[#allocation17 + $0xf0] sm:$0xff]
    %v3658 = vld [vmem:[#allocation17 + $0xf8] sm:$0xf]
    %v3659 = vld [vmem:[#allocation17 + $0xfc] sm:$0xff]
    %v3660 = vld [vmem:[#allocation17 + $0x104] sm:$0xff]
    %v3661 = vld [vmem:[#allocation17 + $0x10c] sm:$0xff]
    %v3662 = vld [vmem:[#allocation17 + $0x114] sm:$0xf]
    %v3663 = vld [vmem:[#allocation17 + $0x118] sm:$0xff]
    %v3664 = vld [vmem:[#allocation17 + $0x120] sm:$0xff]
    %v3665 = vld [vmem:[#allocation17 + $0x128] sm:$0xff]
    %v3666 = vld [vmem:[#allocation17 + $0x130] sm:$0xf]
    %v3667 = vld [vmem:[#allocation17 + $0x134] sm:$0xff]
    %v3668 = vld [vmem:[#allocation17 + $0x13c] sm:$0xff]
    %v3669 = vld [vmem:[#allocation17 + $0x144] sm:$0xff]
    %v3670 = vld [vmem:[#allocation17 + $0x14c] sm:$0xf]
    %v3671 = vld [vmem:[#allocation17 + $0x150] sm:$0xff]
    %v3672 = vld [vmem:[#allocation17 + $0x158] sm:$0xff]
    %v3673 = vld [vmem:[#allocation17 + $0x160] sm:$0xff]
    %v3674 = vld [vmem:[#allocation17 + $0x168] sm:$0xf]
    %v3675 = vld [vmem:[#allocation17 + $0x16c] sm:$0xff]
    %v3676 = vld [vmem:[#allocation17 + $0x174] sm:$0xff]
    %v3677 = vld [vmem:[#allocation17 + $0x17c] sm:$0xff]
    %v3678 = vld [vmem:[#allocation17 + $0x184] sm:$0xf]
    %v3679 = vld [vmem:[#allocation17 + $0x188] sm:$0xff]
    %v3680 = vld [vmem:[#allocation17 + $0x190] sm:$0xff]
    %v3681 = vld [vmem:[#allocation17 + $0x198] sm:$0xff]
    %v3682 = vld [vmem:[#allocation17 + $0x1a0] sm:$0xf]
    %v3683 = vld [vmem:[#allocation17 + $0x1a4] sm:$0xff]
    %v3684 = vld [vmem:[#allocation17 + $0x1ac] sm:$0xff]
    %v3685 = vld [vmem:[#allocation17 + $0x1b4] sm:$0xff]
    %v3686 = vld [vmem:[#allocation17 + $0x1bc] sm:$0xf]
    %v3687 = vld [vmem:[#allocation17 + $0x1c0] sm:$0xff]
    %v3688 = vld [vmem:[#allocation17 + $0x1c8] sm:$0xff]
    %v3689 = vld [vmem:[#allocation17 + $0x1d0] sm:$0xff]
    %v3690 = vld [vmem:[#allocation17 + $0x1d8] sm:$0xf]
    %v3691 = vld [vmem:[#allocation17 + $0x1dc] sm:$0xff]
    %v3692 = vld [vmem:[#allocation17 + $0x1e4] sm:$0xff]
    %v3693 = vld [vmem:[#allocation17 + $0x1ec] sm:$0xff]
    %v3694 = vld [vmem:[#allocation17 + $0x1f4] sm:$0xf]
    %v3695 = vld [vmem:[#allocation17 + $0x1f8] sm:$0xff]
    %v3696 = vld [vmem:[#allocation17 + $0x200] sm:$0xff]
    %v3697 = vld [vmem:[#allocation17 + $0x208] sm:$0xff]
    %v3698 = vld [vmem:[#allocation17 + $0x210] sm:$0xf]
    %v3699 = vld [vmem:[#allocation17 + $0x214] sm:$0xff]
    %v3700 = vld [vmem:[#allocation17 + $0x21c] sm:$0xff]
    %v3701 = vld [vmem:[#allocation17 + $0x224] sm:$0xff]
    %v3702 = vld [vmem:[#allocation17 + $0x22c] sm:$0xf]
    %v3703 = vld [vmem:[#allocation17 + $0x230] sm:$0xff]
    %v3704 = vld [vmem:[#allocation17 + $0x238] sm:$0xff]
    %v3705 = vld [vmem:[#allocation17 + $0x240] sm:$0xff]
    %v3706 = vld [vmem:[#allocation17 + $0x248] sm:$0xf]
    %v3707 = vld [vmem:[#allocation17 + $0x24c] sm:$0xff]
    %v3708 = vld [vmem:[#allocation17 + $0x254] sm:$0xff]
    %v3709 = vld [vmem:[#allocation17 + $0x25c] sm:$0xff]
    %v3710 = vld [vmem:[#allocation17 + $0x264] sm:$0xf]
    %v3711 = vld [vmem:[#allocation17 + $0x268] sm:$0xff]
    %v3712 = vld [vmem:[#allocation17 + $0x270] sm:$0xff]
    %v3713 = vld [vmem:[#allocation17 + $0x278] sm:$0xff]
    %v3714 = vld [vmem:[#allocation17 + $0x280] sm:$0xf]
    %v3715 = vld [vmem:[#allocation17 + $0x284] sm:$0xff]
    %v3716 = vld [vmem:[#allocation17 + $0x28c] sm:$0xff]
    %v3717 = vld [vmem:[#allocation17 + $0x294] sm:$0xff]
    %v3718 = vld [vmem:[#allocation17 + $0x29c] sm:$0xf]
    %v3719 = vld [vmem:[#allocation17 + $0x2a0] sm:$0xff]
    %v3720 = vld [vmem:[#allocation17 + $0x2a8] sm:$0xff]
    %v3721 = vld [vmem:[#allocation17 + $0x2b0] sm:$0xff]
    %v3722 = vld [vmem:[#allocation17 + $0x2b8] sm:$0xf]
    %v3723 = vld [vmem:[#allocation17 + $0x2bc] sm:$0xff]
    %v3724 = vld [vmem:[#allocation17 + $0x2c4] sm:$0xff]
    %v3725 = vld [vmem:[#allocation17 + $0x2cc] sm:$0xff]
    %v3726 = vld [vmem:[#allocation17 + $0x2d4] sm:$0xf]
    %v3727 = vld [vmem:[#allocation17 + $0x2d8] sm:$0xff]
    %v3728 = vld [vmem:[#allocation17 + $0x2e0] sm:$0xff]
    %v3729 = vld [vmem:[#allocation17 + $0x2e8] sm:$0xff]
    %v3730 = vld [vmem:[#allocation17 + $0x2f0] sm:$0xf]
    %v3731 = vld [vmem:[#allocation17 + $0x2f4] sm:$0xff]
    %v3732 = vld [vmem:[#allocation17 + $0x2fc] sm:$0xff]
    %v3733 = vld [vmem:[#allocation17 + $0x304] sm:$0xff]
    %v3734 = vld [vmem:[#allocation17 + $0x30c] sm:$0xf]
    %v3735 = vld [vmem:[#allocation17 + $0x310] sm:$0xff]
    %v3736 = vld [vmem:[#allocation17 + $0x318] sm:$0xff]
    %v3737 = vld [vmem:[#allocation17 + $0x320] sm:$0xff]
    %v3738 = vld [vmem:[#allocation17 + $0x328] sm:$0xf]
    %v3739 = vld [vmem:[#allocation17 + $0x32c] sm:$0xff]
    %v3740 = vld [vmem:[#allocation17 + $0x334] sm:$0xff]
    %v3741 = vld [vmem:[#allocation17 + $0x33c] sm:$0xff]
    %v3742 = vld [vmem:[#allocation17 + $0x344] sm:$0xf]
    %v3743 = vld [vmem:[#allocation17 + $0x348] sm:$0xff]
    %v3744 = vld [vmem:[#allocation17 + $0x350] sm:$0xff]
    %v3745 = vld [vmem:[#allocation17 + $0x358] sm:$0xff]
    %v3746 = vld [vmem:[#allocation17 + $0x360] sm:$0xf]
    %v3747 = vld [vmem:[#allocation17 + $0x364] sm:$0xff]
    %v3748 = vld [vmem:[#allocation17 + $0x36c] sm:$0xff]
    %v3749 = vld [vmem:[#allocation17 + $0x374] sm:$0xff]
    %v3750 = vld [vmem:[#allocation17 + $0x37c] sm:$0xf]
    %v3751 = vld [vmem:[#allocation17 + $0x380] sm:$0xff]
    %v3752 = vld [vmem:[#allocation17 + $0x388] sm:$0xff]
    %v3753 = vld [vmem:[#allocation17 + $0x390] sm:$0xff]
    %v3754 = vld [vmem:[#allocation17 + $0x398] sm:$0xf]
    %v3755 = vld [vmem:[#allocation17 + $0x39c] sm:$0xff]
    %v3756 = vld [vmem:[#allocation17 + $0x3a4] sm:$0xff]
    %v3757 = vld [vmem:[#allocation17 + $0x3ac] sm:$0xff]
    %v3758 = vld [vmem:[#allocation17 + $0x3b4] sm:$0xf]
    %v3759 = vld [vmem:[#allocation17 + $0x3b8] sm:$0xff]
    %v3760 = vld [vmem:[#allocation17 + $0x3c0] sm:$0xff]
    %v3761 = vld [vmem:[#allocation17 + $0x3c8] sm:$0xff]
    %v3762 = vld [vmem:[#allocation17 + $0x3d0] sm:$0xf]
    %v3763 = vld [vmem:[#allocation17 + $0x3d4] sm:$0xff]
    %v3764 = vld [vmem:[#allocation17 + $0x3dc] sm:$0xff]
    %v3765 = vld [vmem:[#allocation17 + $0x3e4] sm:$0xff]
    %v3766 = vld [vmem:[#allocation17 + $0x3ec] sm:$0xf]
    %v3767 = vld [vmem:[#allocation17 + $0x3f0] sm:$0xff]
    %v3768 = vld [vmem:[#allocation17 + $0x3f8] sm:$0xff]
    %v3769 = vld [vmem:[#allocation17 + $0x400] sm:$0xff]
    %v3770 = vld [vmem:[#allocation17 + $0x408] sm:$0xf]
    %v3771 = vld [vmem:[#allocation17 + $0x40c] sm:$0xff]
    %v3772 = vld [vmem:[#allocation17 + $0x414] sm:$0xff]
    %v3773 = vld [vmem:[#allocation17 + $0x41c] sm:$0xff]
    %v3774 = vld [vmem:[#allocation17 + $0x424] sm:$0xf]
    %v3775 = vld [vmem:[#allocation17 + $0x428] sm:$0xff]
    %v3776 = vld [vmem:[#allocation17 + $0x430] sm:$0xff]
    %v3777 = vld [vmem:[#allocation17 + $0x438] sm:$0xff]
    %v3778 = vld [vmem:[#allocation17 + $0x440] sm:$0xf]
    %v3779 = vld [vmem:[#allocation17 + $0x444] sm:$0xff]
    %v3780 = vld [vmem:[#allocation17 + $0x44c] sm:$0xff]
    %v3781 = vld [vmem:[#allocation17 + $0x454] sm:$0xff]
    %v3782 = vld [vmem:[#allocation17 + $0x45c] sm:$0xf]
    %v3783 = vld [vmem:[#allocation17 + $0x460] sm:$0xff]
    %v3784 = vld [vmem:[#allocation17 + $0x468] sm:$0xff]
    %v3785 = vld [vmem:[#allocation17 + $0x470] sm:$0xff]
    %v3786 = vld [vmem:[#allocation17 + $0x478] sm:$0xf]
    %v3787 = vld [vmem:[#allocation17 + $0x47c] sm:$0xff]
    %v3788 = vld [vmem:[#allocation17 + $0x484] sm:$0xff]
    %v3789 = vld [vmem:[#allocation17 + $0x48c] sm:$0xff]
    %v3790 = vld [vmem:[#allocation17 + $0x494] sm:$0xf]
    %v3791 = vld [vmem:[#allocation17 + $0x498] sm:$0xff]
    %v3792 = vld [vmem:[#allocation17 + $0x4a0] sm:$0xff]
    %v3793 = vld [vmem:[#allocation17 + $0x4a8] sm:$0xff]
    %v3794 = vld [vmem:[#allocation17 + $0x4b0] sm:$0xf]
    %v3795 = vld [vmem:[#allocation17 + $0x4b4] sm:$0xff]
    %v3796 = vld [vmem:[#allocation17 + $0x4bc] sm:$0xff]
    %v3797 = vld [vmem:[#allocation17 + $0x4c4] sm:$0xff]
    %v3798 = vld [vmem:[#allocation17 + $0x4cc] sm:$0xf]
    %v3799 = vld [vmem:[#allocation17 + $0x4d0] sm:$0xff]
    %v3800 = vld [vmem:[#allocation17 + $0x4d8] sm:$0xff]
    %v3801 = vld [vmem:[#allocation17 + $0x4e0] sm:$0xff]
    %v3802 = vld [vmem:[#allocation17 + $0x4e8] sm:$0xf]
    %v3803 = vld [vmem:[#allocation17 + $0x4ec] sm:$0xff]
    %v3804 = vld [vmem:[#allocation17 + $0x4f4] sm:$0xff]
    %v3805 = vld [vmem:[#allocation17 + $0x4fc] sm:$0xff]
    %v3806 = vld [vmem:[#allocation17 + $0x504] sm:$0xf]
    %v3807 = vld [vmem:[#allocation17 + $0x508] sm:$0xff]
    %v3808 = vld [vmem:[#allocation17 + $0x510] sm:$0xff]
    %v3809 = vld [vmem:[#allocation17 + $0x518] sm:$0xff]
    %v3810 = vld [vmem:[#allocation17 + $0x520] sm:$0xf]
    %v3811 = vld [vmem:[#allocation17 + $0x524] sm:$0xff]
    %v3812 = vld [vmem:[#allocation17 + $0x52c] sm:$0xff]
    %v3813 = vld [vmem:[#allocation17 + $0x534] sm:$0xff]
    %v3814 = vld [vmem:[#allocation17 + $0x53c] sm:$0xf]
    %v3815 = vld [vmem:[#allocation17 + $0x540] sm:$0xff]
    %v3816 = vld [vmem:[#allocation17 + $0x548] sm:$0xff]
    %v3817 = vld [vmem:[#allocation17 + $0x550] sm:$0xff]
    %v3818 = vld [vmem:[#allocation17 + $0x558] sm:$0xf]
    %v3819 = vld [vmem:[#allocation17 + $0x55c] sm:$0xff]
    %v3820 = vld [vmem:[#allocation17 + $0x564] sm:$0xff]
    %v3821 = vld [vmem:[#allocation17 + $0x56c] sm:$0xff]
    %v3822 = vld [vmem:[#allocation17 + $0x574] sm:$0xf]
    %v3823 = vld [vmem:[#allocation17 + $0x578] sm:$0xff]
    %v3824 = vld [vmem:[#allocation17 + $0x580] sm:$0xff]
    %v3825 = vld [vmem:[#allocation17 + $0x588] sm:$0xff]
    %v3826 = vld [vmem:[#allocation17 + $0x590] sm:$0xf]
    %v3827 = vld [vmem:[#allocation17 + $0x594] sm:$0xff]
    %v3828 = vld [vmem:[#allocation17 + $0x59c] sm:$0xff]
    %v3829 = vld [vmem:[#allocation17 + $0x5a4] sm:$0xff]
    %v3830 = vld [vmem:[#allocation17 + $0x5ac] sm:$0xf]
    %v3831 = vld [vmem:[#allocation17 + $0x5b0] sm:$0xff]
    %v3832 = vld [vmem:[#allocation17 + $0x5b8] sm:$0xff]
    %v3833 = vld [vmem:[#allocation17 + $0x5c0] sm:$0xff]
    %v3834 = vld [vmem:[#allocation17 + $0x5c8] sm:$0xf]
    %v3835 = vld [vmem:[#allocation17 + $0x5cc] sm:$0xff]
    %v3836 = vld [vmem:[#allocation17 + $0x5d4] sm:$0xff]
    %v3837 = vld [vmem:[#allocation17 + $0x5dc] sm:$0xff]
    %v3838 = vld [vmem:[#allocation17 + $0x5e4] sm:$0xf]
    %v3839 = vld [vmem:[#allocation17 + $0x5e8] sm:$0xff]
    %v3840 = vld [vmem:[#allocation17 + $0x5f0] sm:$0xff]
    %v3841 = vld [vmem:[#allocation17 + $0x5f8] sm:$0xff]
    %v3842 = vld [vmem:[#allocation17 + $0x600] sm:$0xf]
    %v3843 = vld [vmem:[#allocation17 + $0x604] sm:$0xff]
    %v3844 = vld [vmem:[#allocation17 + $0x60c] sm:$0xff]
    %v3845 = vld [vmem:[#allocation17 + $0x614] sm:$0xff]
    %v3846 = vld [vmem:[#allocation17 + $0x61c] sm:$0xf]
    %v3847 = vld [vmem:[#allocation17 + $0x620] sm:$0xff]
    %v3848 = vld [vmem:[#allocation17 + $0x628] sm:$0xff]
    %v3849 = vld [vmem:[#allocation17 + $0x630] sm:$0xff]
    %v3850 = vld [vmem:[#allocation17 + $0x638] sm:$0xf]
    %v3851 = vld [vmem:[#allocation17 + $0x63c] sm:$0xff]
    %v3852 = vld [vmem:[#allocation17 + $0x644] sm:$0xff]
    %v3853 = vld [vmem:[#allocation17 + $0x64c] sm:$0xff]
    %v3854 = vld [vmem:[#allocation17 + $0x654] sm:$0xf]
    %v3855 = vld [vmem:[#allocation17 + $0x658] sm:$0xff]
    %v3856 = vld [vmem:[#allocation17 + $0x660] sm:$0xff]
    %v3857 = vld [vmem:[#allocation17 + $0x668] sm:$0xff]
    %v3858 = vld [vmem:[#allocation17 + $0x670] sm:$0xf]
    %v3859 = vld [vmem:[#allocation17 + $0x674] sm:$0xff]
    %v3860 = vld [vmem:[#allocation17 + $0x67c] sm:$0xff]
    %v3861 = vld [vmem:[#allocation17 + $0x684] sm:$0xff]
    %v3862 = vld [vmem:[#allocation17 + $0x68c] sm:$0xf]
    %v3863 = vld [vmem:[#allocation17 + $0x690] sm:$0xff]
    %v3864 = vld [vmem:[#allocation17 + $0x698] sm:$0xff]
    %v3865 = vld [vmem:[#allocation17 + $0x6a0] sm:$0xff]
    %v3866 = vld [vmem:[#allocation17 + $0x6a8] sm:$0xf]
    %v3867 = vld [vmem:[#allocation17 + $0x6ac] sm:$0xff]
    %v3868 = vld [vmem:[#allocation17 + $0x6b4] sm:$0xff]
    %v3869 = vld [vmem:[#allocation17 + $0x6bc] sm:$0xff]
    %v3870 = vld [vmem:[#allocation17 + $0x6c4] sm:$0xf]
    %v3871 = vld [vmem:[#allocation17 + $0x6c8] sm:$0xff]
    %v3872 = vld [vmem:[#allocation17 + $0x6d0] sm:$0xff]
    %v3873 = vld [vmem:[#allocation17 + $0x6d8] sm:$0xff]
    %v3874 = vld [vmem:[#allocation17 + $0x6e0] sm:$0xf]
    %v3875 = vld [vmem:[#allocation17 + $0x6e4] sm:$0xff]
    %v3876 = vld [vmem:[#allocation17 + $0x6ec] sm:$0xff]
    %v3877 = vld [vmem:[#allocation17 + $0x6f4] sm:$0xff]
    %v3878 = vld [vmem:[#allocation17 + $0x6fc] sm:$0xf]
    %v3879 = vld [vmem:[%s17] sm:$0xff]
    %v3881 = vperm.slane %v3879, 0
    %v3882 = vperm.slane %v3879, 1
    %v3883 = vperm.slane %v3879, 2
    %v3884 = vperm.slane %v3879, 3
    %v3885 = vperm.slane %v3879, 4
    %v3886 = vperm.slane %v3879, 5
    %v3887 = vperm.slane %v3879, 6
    %v4151 = vunpack.c.l.b16 %v3623
    %v4152 = vunpack.c.h.b16 %v3623
    %v4153 = vunpack.c.l.b16 %v3624
    %v4154 = vunpack.c.h.b16 %v3624
    %v4155 = vunpack.c.l.b16 %v3625
    %v4156 = vunpack.c.h.b16 %v3625
    %v4157 = vunpack.c.l.b16 %v3626
    %v4158 = vunpack.c.l.b16 %v3627
    %v4159 = vunpack.c.h.b16 %v3627
    %v4160 = vunpack.c.l.b16 %v3628
    %v4161 = vunpack.c.h.b16 %v3628
    %v4162 = vunpack.c.l.b16 %v3629
    %v4163 = vunpack.c.h.b16 %v3629
    %v4164 = vunpack.c.l.b16 %v3630
    %v4165 = vunpack.c.l.b16 %v3631
    %v4166 = vunpack.c.h.b16 %v3631
    %v4167 = vunpack.c.l.b16 %v3632
    %v4168 = vunpack.c.h.b16 %v3632
    %v4169 = vunpack.c.l.b16 %v3633
    %v4170 = vunpack.c.h.b16 %v3633
    %v4171 = vunpack.c.l.b16 %v3634
    %v4172 = vunpack.c.l.b16 %v3635
    %v4173 = vunpack.c.h.b16 %v3635
    %v4174 = vunpack.c.l.b16 %v3636
    %v4175 = vunpack.c.h.b16 %v3636
    %v4176 = vunpack.c.l.b16 %v3637
    %v4177 = vunpack.c.h.b16 %v3637
    %v4178 = vunpack.c.l.b16 %v3638
    %v4179 = vunpack.c.l.b16 %v3639
    %v4180 = vunpack.c.h.b16 %v3639
    %v4181 = vunpack.c.l.b16 %v3640
    %v4182 = vunpack.c.h.b16 %v3640
    %v4183 = vunpack.c.l.b16 %v3641
    %v4184 = vunpack.c.h.b16 %v3641
    %v4185 = vunpack.c.l.b16 %v3642
    %v4186 = vunpack.c.l.b16 %v3643
    %v4187 = vunpack.c.h.b16 %v3643
    %v4188 = vunpack.c.l.b16 %v3644
    %v4189 = vunpack.c.h.b16 %v3644
    %v4190 = vunpack.c.l.b16 %v3645
    %v4191 = vunpack.c.h.b16 %v3645
    %v4192 = vunpack.c.l.b16 %v3646
    %v4193 = vunpack.c.l.b16 %v3647
    %v4194 = vunpack.c.h.b16 %v3647
    %v4195 = vunpack.c.l.b16 %v3648
    %v4196 = vunpack.c.h.b16 %v3648
    %v4197 = vunpack.c.l.b16 %v3649
    %v4198 = vunpack.c.h.b16 %v3649
    %v4199 = vunpack.c.l.b16 %v3650
    %v4200 = vunpack.c.l.b16 %v3651
    %v4201 = vunpack.c.h.b16 %v3651
    %v4202 = vunpack.c.l.b16 %v3652
    %v4203 = vunpack.c.h.b16 %v3652
    %v4204 = vunpack.c.l.b16 %v3653
    %v4205 = vunpack.c.h.b16 %v3653
    %v4206 = vunpack.c.l.b16 %v3654
    %v4207 = vunpack.c.l.b16 %v3655
    %v4208 = vunpack.c.h.b16 %v3655
    %v4209 = vunpack.c.l.b16 %v3656
    %v4210 = vunpack.c.h.b16 %v3656
    %v4211 = vunpack.c.l.b16 %v3657
    %v4212 = vunpack.c.h.b16 %v3657
    %v4213 = vunpack.c.l.b16 %v3658
    %v4214 = vunpack.c.l.b16 %v3659
    %v4215 = vunpack.c.h.b16 %v3659
    %v4216 = vunpack.c.l.b16 %v3660
    %v4217 = vunpack.c.h.b16 %v3660
    %v4218 = vunpack.c.l.b16 %v3661
    %v4219 = vunpack.c.h.b16 %v3661
    %v4220 = vunpack.c.l.b16 %v3662
    %v4221 = vunpack.c.l.b16 %v3663
    %v4222 = vunpack.c.h.b16 %v3663
    %v4223 = vunpack.c.l.b16 %v3664
    %v4224 = vunpack.c.h.b16 %v3664
    %v4225 = vunpack.c.l.b16 %v3665
    %v4226 = vunpack.c.h.b16 %v3665
    %v4227 = vunpack.c.l.b16 %v3666
    %v4228 = vunpack.c.l.b16 %v3667
    %v4229 = vunpack.c.h.b16 %v3667
    %v4230 = vunpack.c.l.b16 %v3668
    %v4231 = vunpack.c.h.b16 %v3668
    %v4232 = vunpack.c.l.b16 %v3669
    %v4233 = vunpack.c.h.b16 %v3669
    %v4234 = vunpack.c.l.b16 %v3670
    %v4235 = vunpack.c.l.b16 %v3671
    %v4236 = vunpack.c.h.b16 %v3671
    %v4237 = vunpack.c.l.b16 %v3672
    %v4238 = vunpack.c.h.b16 %v3672
    %v4239 = vunpack.c.l.b16 %v3673
    %v4240 = vunpack.c.h.b16 %v3673
    %v4241 = vunpack.c.l.b16 %v3674
    %v4242 = vunpack.c.l.b16 %v3675
    %v4243 = vunpack.c.h.b16 %v3675
    %v4244 = vunpack.c.l.b16 %v3676
    %v4245 = vunpack.c.h.b16 %v3676
    %v4246 = vunpack.c.l.b16 %v3677
    %v4247 = vunpack.c.h.b16 %v3677
    %v4248 = vunpack.c.l.b16 %v3678
    %v4249 = vunpack.c.l.b16 %v3679
    %v4250 = vunpack.c.h.b16 %v3679
    %v4251 = vunpack.c.l.b16 %v3680
    %v4252 = vunpack.c.h.b16 %v3680
    %v4253 = vunpack.c.l.b16 %v3681
    %v4254 = vunpack.c.h.b16 %v3681
    %v4255 = vunpack.c.l.b16 %v3682
    %v4256 = vunpack.c.l.b16 %v3683
    %v4257 = vunpack.c.h.b16 %v3683
    %v4258 = vunpack.c.l.b16 %v3684
    %v4259 = vunpack.c.h.b16 %v3684
    %v4260 = vunpack.c.l.b16 %v3685
    %v4261 = vunpack.c.h.b16 %v3685
    %v4262 = vunpack.c.l.b16 %v3686
    %v4263 = vunpack.c.l.b16 %v3687
    %v4264 = vunpack.c.h.b16 %v3687
    %v4265 = vunpack.c.l.b16 %v3688
    %v4266 = vunpack.c.h.b16 %v3688
    %v4267 = vunpack.c.l.b16 %v3689
    %v4268 = vunpack.c.h.b16 %v3689
    %v4269 = vunpack.c.l.b16 %v3690
    %v4270 = vunpack.c.l.b16 %v3691
    %v4271 = vunpack.c.h.b16 %v3691
    %v4272 = vunpack.c.l.b16 %v3692
    %v4273 = vunpack.c.h.b16 %v3692
    %v4274 = vunpack.c.l.b16 %v3693
    %v4275 = vunpack.c.h.b16 %v3693
    %v4276 = vunpack.c.l.b16 %v3694
    %v4277 = vunpack.c.l.b16 %v3695
    %v4278 = vunpack.c.h.b16 %v3695
    %v4279 = vunpack.c.l.b16 %v3696
    %v4280 = vunpack.c.h.b16 %v3696
    %v4281 = vunpack.c.l.b16 %v3697
    %v4282 = vunpack.c.h.b16 %v3697
    %v4283 = vunpack.c.l.b16 %v3698
    %v4284 = vunpack.c.l.b16 %v3699
    %v4285 = vunpack.c.h.b16 %v3699
    %v4286 = vunpack.c.l.b16 %v3700
    %v4287 = vunpack.c.h.b16 %v3700
    %v4288 = vunpack.c.l.b16 %v3701
    %v4289 = vunpack.c.h.b16 %v3701
    %v4290 = vunpack.c.l.b16 %v3702
    %v4291 = vunpack.c.l.b16 %v3703
    %v4292 = vunpack.c.h.b16 %v3703
    %v4293 = vunpack.c.l.b16 %v3704
    %v4294 = vunpack.c.h.b16 %v3704
    %v4295 = vunpack.c.l.b16 %v3705
    %v4296 = vunpack.c.h.b16 %v3705
    %v4297 = vunpack.c.l.b16 %v3706
    %v4298 = vunpack.c.l.b16 %v3707
    %v4299 = vunpack.c.h.b16 %v3707
    %v4300 = vunpack.c.l.b16 %v3708
    %v4301 = vunpack.c.h.b16 %v3708
    %v4302 = vunpack.c.l.b16 %v3709
    %v4303 = vunpack.c.h.b16 %v3709
    %v4304 = vunpack.c.l.b16 %v3710
    %v4305 = vunpack.c.l.b16 %v3711
    %v4306 = vunpack.c.h.b16 %v3711
    %v4307 = vunpack.c.l.b16 %v3712
    %v4308 = vunpack.c.h.b16 %v3712
    %v4309 = vunpack.c.l.b16 %v3713
    %v4310 = vunpack.c.h.b16 %v3713
    %v4311 = vunpack.c.l.b16 %v3714
    %v4312 = vunpack.c.l.b16 %v3715
    %v4313 = vunpack.c.h.b16 %v3715
    %v4314 = vunpack.c.l.b16 %v3716
    %v4315 = vunpack.c.h.b16 %v3716
    %v4316 = vunpack.c.l.b16 %v3717
    %v4317 = vunpack.c.h.b16 %v3717
    %v4318 = vunpack.c.l.b16 %v3718
    %v4319 = vunpack.c.l.b16 %v3719
    %v4320 = vunpack.c.h.b16 %v3719
    %v4321 = vunpack.c.l.b16 %v3720
    %v4322 = vunpack.c.h.b16 %v3720
    %v4323 = vunpack.c.l.b16 %v3721
    %v4324 = vunpack.c.h.b16 %v3721
    %v4325 = vunpack.c.l.b16 %v3722
    %v4326 = vunpack.c.l.b16 %v3723
    %v4327 = vunpack.c.h.b16 %v3723
    %v4328 = vunpack.c.l.b16 %v3724
    %v4329 = vunpack.c.h.b16 %v3724
    %v4330 = vunpack.c.l.b16 %v3725
    %v4331 = vunpack.c.h.b16 %v3725
    %v4332 = vunpack.c.l.b16 %v3726
    %v4333 = vunpack.c.l.b16 %v3727
    %v4334 = vunpack.c.h.b16 %v3727
    %v4335 = vunpack.c.l.b16 %v3728
    %v4336 = vunpack.c.h.b16 %v3728
    %v4337 = vunpack.c.l.b16 %v3729
    %v4338 = vunpack.c.h.b16 %v3729
    %v4339 = vunpack.c.l.b16 %v3730
    %v4340 = vunpack.c.l.b16 %v3731
    %v4341 = vunpack.c.h.b16 %v3731
    %v4342 = vunpack.c.l.b16 %v3732
    %v4343 = vunpack.c.h.b16 %v3732
    %v4344 = vunpack.c.l.b16 %v3733
    %v4345 = vunpack.c.h.b16 %v3733
    %v4346 = vunpack.c.l.b16 %v3734
    %v4347 = vunpack.c.l.b16 %v3735
    %v4348 = vunpack.c.h.b16 %v3735
    %v4349 = vunpack.c.l.b16 %v3736
    %v4350 = vunpack.c.h.b16 %v3736
    %v4351 = vunpack.c.l.b16 %v3737
    %v4352 = vunpack.c.h.b16 %v3737
    %v4353 = vunpack.c.l.b16 %v3738
    %v4354 = vunpack.c.l.b16 %v3739
    %v4355 = vunpack.c.h.b16 %v3739
    %v4356 = vunpack.c.l.b16 %v3740
    %v4357 = vunpack.c.h.b16 %v3740
    %v4358 = vunpack.c.l.b16 %v3741
    %v4359 = vunpack.c.h.b16 %v3741
    %v4360 = vunpack.c.l.b16 %v3742
    %v4361 = vunpack.c.l.b16 %v3743
    %v4362 = vunpack.c.h.b16 %v3743
    %v4363 = vunpack.c.l.b16 %v3744
    %v4364 = vunpack.c.h.b16 %v3744
    %v4365 = vunpack.c.l.b16 %v3745
    %v4366 = vunpack.c.h.b16 %v3745
    %v4367 = vunpack.c.l.b16 %v3746
    %v4368 = vunpack.c.l.b16 %v3747
    %v4369 = vunpack.c.h.b16 %v3747
    %v4370 = vunpack.c.l.b16 %v3748
    %v4371 = vunpack.c.h.b16 %v3748
    %v4372 = vunpack.c.l.b16 %v3749
    %v4373 = vunpack.c.h.b16 %v3749
    %v4374 = vunpack.c.l.b16 %v3750
    %v4375 = vunpack.c.l.b16 %v3751
    %v4376 = vunpack.c.h.b16 %v3751
    %v4377 = vunpack.c.l.b16 %v3752
    %v4378 = vunpack.c.h.b16 %v3752
    %v4379 = vunpack.c.l.b16 %v3753
    %v4380 = vunpack.c.h.b16 %v3753
    %v4381 = vunpack.c.l.b16 %v3754
    %v4382 = vunpack.c.l.b16 %v3755
    %v4383 = vunpack.c.h.b16 %v3755
    %v4384 = vunpack.c.l.b16 %v3756
    %v4385 = vunpack.c.h.b16 %v3756
    %v4386 = vunpack.c.l.b16 %v3757
    %v4387 = vunpack.c.h.b16 %v3757
    %v4388 = vunpack.c.l.b16 %v3758
    %v4389 = vunpack.c.l.b16 %v3759
    %v4390 = vunpack.c.h.b16 %v3759
    %v4391 = vunpack.c.l.b16 %v3760
    %v4392 = vunpack.c.h.b16 %v3760
    %v4393 = vunpack.c.l.b16 %v3761
    %v4394 = vunpack.c.h.b16 %v3761
    %v4395 = vunpack.c.l.b16 %v3762
    %v4396 = vunpack.c.l.b16 %v3763
    %v4397 = vunpack.c.h.b16 %v3763
    %v4398 = vunpack.c.l.b16 %v3764
    %v4399 = vunpack.c.h.b16 %v3764
    %v4400 = vunpack.c.l.b16 %v3765
    %v4401 = vunpack.c.h.b16 %v3765
    %v4402 = vunpack.c.l.b16 %v3766
    %v4403 = vunpack.c.l.b16 %v3767
    %v4404 = vunpack.c.h.b16 %v3767
    %v4405 = vunpack.c.l.b16 %v3768
    %v4406 = vunpack.c.h.b16 %v3768
    %v4407 = vunpack.c.l.b16 %v3769
    %v4408 = vunpack.c.h.b16 %v3769
    %v4409 = vunpack.c.l.b16 %v3770
    %v4410 = vunpack.c.l.b16 %v3771
    %v4411 = vunpack.c.h.b16 %v3771
    %v4412 = vunpack.c.l.b16 %v3772
    %v4413 = vunpack.c.h.b16 %v3772
    %v4414 = vunpack.c.l.b16 %v3773
    %v4415 = vunpack.c.h.b16 %v3773
    %v4416 = vunpack.c.l.b16 %v3774
    %v4417 = vunpack.c.l.b16 %v3775
    %v4418 = vunpack.c.h.b16 %v3775
    %v4419 = vunpack.c.l.b16 %v3776
    %v4420 = vunpack.c.h.b16 %v3776
    %v4421 = vunpack.c.l.b16 %v3777
    %v4422 = vunpack.c.h.b16 %v3777
    %v4423 = vunpack.c.l.b16 %v3778
    %v4424 = vunpack.c.l.b16 %v3779
    %v4425 = vunpack.c.h.b16 %v3779
    %v4426 = vunpack.c.l.b16 %v3780
    %v4427 = vunpack.c.h.b16 %v3780
    %v4428 = vunpack.c.l.b16 %v3781
    %v4429 = vunpack.c.h.b16 %v3781
    %v4430 = vunpack.c.l.b16 %v3782
    %v4431 = vunpack.c.l.b16 %v3783
    %v4432 = vunpack.c.h.b16 %v3783
    %v4433 = vunpack.c.l.b16 %v3784
    %v4434 = vunpack.c.h.b16 %v3784
    %v4435 = vunpack.c.l.b16 %v3785
    %v4436 = vunpack.c.h.b16 %v3785
    %v4437 = vunpack.c.l.b16 %v3786
    %v4438 = vunpack.c.l.b16 %v3787
    %v4439 = vunpack.c.h.b16 %v3787
    %v4440 = vunpack.c.l.b16 %v3788
    %v4441 = vunpack.c.h.b16 %v3788
    %v4442 = vunpack.c.l.b16 %v3789
    %v4443 = vunpack.c.h.b16 %v3789
    %v4444 = vunpack.c.l.b16 %v3790
    %v4445 = vunpack.c.l.b16 %v3791
    %v4446 = vunpack.c.h.b16 %v3791
    %v4447 = vunpack.c.l.b16 %v3792
    %v4448 = vunpack.c.h.b16 %v3792
    %v4449 = vunpack.c.l.b16 %v3793
    %v4450 = vunpack.c.h.b16 %v3793
    %v4451 = vunpack.c.l.b16 %v3794
    %v4452 = vunpack.c.l.b16 %v3795
    %v4453 = vunpack.c.h.b16 %v3795
    %v4454 = vunpack.c.l.b16 %v3796
    %v4455 = vunpack.c.h.b16 %v3796
    %v4456 = vunpack.c.l.b16 %v3797
    %v4457 = vunpack.c.h.b16 %v3797
    %v4458 = vunpack.c.l.b16 %v3798
    %v4459 = vunpack.c.l.b16 %v3799
    %v4460 = vunpack.c.h.b16 %v3799
    %v4461 = vunpack.c.l.b16 %v3800
    %v4462 = vunpack.c.h.b16 %v3800
    %v4463 = vunpack.c.l.b16 %v3801
    %v4464 = vunpack.c.h.b16 %v3801
    %v4465 = vunpack.c.l.b16 %v3802
    %v4466 = vunpack.c.l.b16 %v3803
    %v4467 = vunpack.c.h.b16 %v3803
    %v4468 = vunpack.c.l.b16 %v3804
    %v4469 = vunpack.c.h.b16 %v3804
    %v4470 = vunpack.c.l.b16 %v3805
    %v4471 = vunpack.c.h.b16 %v3805
    %v4472 = vunpack.c.l.b16 %v3806
    %v4473 = vunpack.c.l.b16 %v3807
    %v4474 = vunpack.c.h.b16 %v3807
    %v4475 = vunpack.c.l.b16 %v3808
    %v4476 = vunpack.c.h.b16 %v3808
    %v4477 = vunpack.c.l.b16 %v3809
    %v4478 = vunpack.c.h.b16 %v3809
    %v4479 = vunpack.c.l.b16 %v3810
    %v4480 = vunpack.c.l.b16 %v3811
    %v4481 = vunpack.c.h.b16 %v3811
    %v4482 = vunpack.c.l.b16 %v3812
    %v4483 = vunpack.c.h.b16 %v3812
    %v4484 = vunpack.c.l.b16 %v3813
    %v4485 = vunpack.c.h.b16 %v3813
    %v4486 = vunpack.c.l.b16 %v3814
    %v4487 = vunpack.c.l.b16 %v3815
    %v4488 = vunpack.c.h.b16 %v3815
    %v4489 = vunpack.c.l.b16 %v3816
    %v4490 = vunpack.c.h.b16 %v3816
    %v4491 = vunpack.c.l.b16 %v3817
    %v4492 = vunpack.c.h.b16 %v3817
    %v4493 = vunpack.c.l.b16 %v3818
    %v4494 = vunpack.c.l.b16 %v3819
    %v4495 = vunpack.c.h.b16 %v3819
    %v4496 = vunpack.c.l.b16 %v3820
    %v4497 = vunpack.c.h.b16 %v3820
    %v4498 = vunpack.c.l.b16 %v3821
    %v4499 = vunpack.c.h.b16 %v3821
    %v4500 = vunpack.c.l.b16 %v3822
    %v4501 = vunpack.c.l.b16 %v3823
    %v4502 = vunpack.c.h.b16 %v3823
    %v4503 = vunpack.c.l.b16 %v3824
    %v4504 = vunpack.c.h.b16 %v3824
    %v4505 = vunpack.c.l.b16 %v3825
    %v4506 = vunpack.c.h.b16 %v3825
    %v4507 = vunpack.c.l.b16 %v3826
    %v4508 = vunpack.c.l.b16 %v3827
    %v4509 = vunpack.c.h.b16 %v3827
    %v4510 = vunpack.c.l.b16 %v3828
    %v4511 = vunpack.c.h.b16 %v3828
    %v4512 = vunpack.c.l.b16 %v3829
    %v4513 = vunpack.c.h.b16 %v3829
    %v4514 = vunpack.c.l.b16 %v3830
    %v4515 = vunpack.c.l.b16 %v3831
    %v4516 = vunpack.c.h.b16 %v3831
    %v4517 = vunpack.c.l.b16 %v3832
    %v4518 = vunpack.c.h.b16 %v3832
    %v4519 = vunpack.c.l.b16 %v3833
    %v4520 = vunpack.c.h.b16 %v3833
    %v4521 = vunpack.c.l.b16 %v3834
    %v4522 = vunpack.c.l.b16 %v3835
    %v4523 = vunpack.c.h.b16 %v3835
    %v4524 = vunpack.c.l.b16 %v3836
    %v4525 = vunpack.c.h.b16 %v3836
    %v4526 = vunpack.c.l.b16 %v3837
    %v4527 = vunpack.c.h.b16 %v3837
    %v4528 = vunpack.c.l.b16 %v3838
    %v4529 = vunpack.c.l.b16 %v3839
    %v4530 = vunpack.c.h.b16 %v3839
    %v4531 = vunpack.c.l.b16 %v3840
    %v4532 = vunpack.c.h.b16 %v3840
    %v4533 = vunpack.c.l.b16 %v3841
    %v4534 = vunpack.c.h.b16 %v3841
    %v4535 = vunpack.c.l.b16 %v3842
    %v4536 = vunpack.c.l.b16 %v3843
    %v4537 = vunpack.c.h.b16 %v3843
    %v4538 = vunpack.c.l.b16 %v3844
    %v4539 = vunpack.c.h.b16 %v3844
    %v4540 = vunpack.c.l.b16 %v3845
    %v4541 = vunpack.c.h.b16 %v3845
    %v4542 = vunpack.c.l.b16 %v3846
    %v4543 = vunpack.c.l.b16 %v3847
    %v4544 = vunpack.c.h.b16 %v3847
    %v4545 = vunpack.c.l.b16 %v3848
    %v4546 = vunpack.c.h.b16 %v3848
    %v4547 = vunpack.c.l.b16 %v3849
    %v4548 = vunpack.c.h.b16 %v3849
    %v4549 = vunpack.c.l.b16 %v3850
    %v4550 = vunpack.c.l.b16 %v3851
    %v4551 = vunpack.c.h.b16 %v3851
    %v4552 = vunpack.c.l.b16 %v3852
    %v4553 = vunpack.c.h.b16 %v3852
    %v4554 = vunpack.c.l.b16 %v3853
    %v4555 = vunpack.c.h.b16 %v3853
    %v4556 = vunpack.c.l.b16 %v3854
    %v4557 = vunpack.c.l.b16 %v3855
    %v4558 = vunpack.c.h.b16 %v3855
    %v4559 = vunpack.c.l.b16 %v3856
    %v4560 = vunpack.c.h.b16 %v3856
    %v4561 = vunpack.c.l.b16 %v3857
    %v4562 = vunpack.c.h.b16 %v3857
    %v4563 = vunpack.c.l.b16 %v3858
    %v4564 = vunpack.c.l.b16 %v3859
    %v4565 = vunpack.c.h.b16 %v3859
    %v4566 = vunpack.c.l.b16 %v3860
    %v4567 = vunpack.c.h.b16 %v3860
    %v4568 = vunpack.c.l.b16 %v3861
    %v4569 = vunpack.c.h.b16 %v3861
    %v4570 = vunpack.c.l.b16 %v3862
    %v4571 = vunpack.c.l.b16 %v3863
    %v4572 = vunpack.c.h.b16 %v3863
    %v4573 = vunpack.c.l.b16 %v3864
    %v4574 = vunpack.c.h.b16 %v3864
    %v4575 = vunpack.c.l.b16 %v3865
    %v4576 = vunpack.c.h.b16 %v3865
    %v4577 = vunpack.c.l.b16 %v3866
    %v4578 = vunpack.c.l.b16 %v3867
    %v4579 = vunpack.c.h.b16 %v3867
    %v4580 = vunpack.c.l.b16 %v3868
    %v4581 = vunpack.c.h.b16 %v3868
    %v4582 = vunpack.c.l.b16 %v3869
    %v4583 = vunpack.c.h.b16 %v3869
    %v4584 = vunpack.c.l.b16 %v3870
    %v4585 = vunpack.c.l.b16 %v3871
    %v4586 = vunpack.c.h.b16 %v3871
    %v4587 = vunpack.c.l.b16 %v3872
    %v4588 = vunpack.c.h.b16 %v3872
    %v4589 = vunpack.c.l.b16 %v3873
    %v4590 = vunpack.c.h.b16 %v3873
    %v4591 = vunpack.c.l.b16 %v3874
    %v4592 = vunpack.c.l.b16 %v3875
    %v4593 = vunpack.c.h.b16 %v3875
    %v4594 = vunpack.c.l.b16 %v3876
    %v4595 = vunpack.c.h.b16 %v3876
    %v4596 = vunpack.c.l.b16 %v3877
    %v4597 = vunpack.c.h.b16 %v3877
    %v4598 = vunpack.c.l.b16 %v3878
    %v4599 = vpack.c.b16 %v4158, %v4151
    %v4600 = vpack.c.b16 %v4159, %v4152
    %v4601 = vpack.c.b16 %v4160, %v4153
    %v4602 = vpack.c.b16 %v4161, %v4154
    %v4603 = vpack.c.b16 %v4162, %v4155
    %v4604 = vpack.c.b16 %v4163, %v4156
    %v4605 = vpack.c.b16 %v4164, %v4157
    %v4606 = vpack.c.b16 %v4172, %v4165
    %v4607 = vpack.c.b16 %v4173, %v4166
    %v4608 = vpack.c.b16 %v4174, %v4167
    %v4609 = vpack.c.b16 %v4175, %v4168
    %v4610 = vpack.c.b16 %v4176, %v4169
    %v4611 = vpack.c.b16 %v4177, %v4170
    %v4612 = vpack.c.b16 %v4178, %v4171
    %v4613 = vpack.c.b16 %v4186, %v4179
    %v4614 = vpack.c.b16 %v4187, %v4180
    %v4615 = vpack.c.b16 %v4188, %v4181
    %v4616 = vpack.c.b16 %v4189, %v4182
    %v4617 = vpack.c.b16 %v4190, %v4183
    %v4618 = vpack.c.b16 %v4191, %v4184
    %v4619 = vpack.c.b16 %v4192, %v4185
    %v4620 = vpack.c.b16 %v4200, %v4193
    %v4621 = vpack.c.b16 %v4201, %v4194
    %v4622 = vpack.c.b16 %v4202, %v4195
    %v4623 = vpack.c.b16 %v4203, %v4196
    %v4624 = vpack.c.b16 %v4204, %v4197
    %v4625 = vpack.c.b16 %v4205, %v4198
    %v4626 = vpack.c.b16 %v4206, %v4199
    %v4627 = vpack.c.b16 %v4214, %v4207
    %v4628 = vpack.c.b16 %v4215, %v4208
    %v4629 = vpack.c.b16 %v4216, %v4209
    %v4630 = vpack.c.b16 %v4217, %v4210
    %v4631 = vpack.c.b16 %v4218, %v4211
    %v4632 = vpack.c.b16 %v4219, %v4212
    %v4633 = vpack.c.b16 %v4220, %v4213
    %v4634 = vpack.c.b16 %v4228, %v4221
    %v4635 = vpack.c.b16 %v4229, %v4222
    %v4636 = vpack.c.b16 %v4230, %v4223
    %v4637 = vpack.c.b16 %v4231, %v4224
    %v4638 = vpack.c.b16 %v4232, %v4225
    %v4639 = vpack.c.b16 %v4233, %v4226
    %v4640 = vpack.c.b16 %v4234, %v4227
    %v4641 = vpack.c.b16 %v4242, %v4235
    %v4642 = vpack.c.b16 %v4243, %v4236
    %v4643 = vpack.c.b16 %v4244, %v4237
    %v4644 = vpack.c.b16 %v4245, %v4238
    %v4645 = vpack.c.b16 %v4246, %v4239
    %v4646 = vpack.c.b16 %v4247, %v4240
    %v4647 = vpack.c.b16 %v4248, %v4241
    %v4648 = vpack.c.b16 %v4256, %v4249
    %v4649 = vpack.c.b16 %v4257, %v4250
    %v4650 = vpack.c.b16 %v4258, %v4251
    %v4651 = vpack.c.b16 %v4259, %v4252
    %v4652 = vpack.c.b16 %v4260, %v4253
    %v4653 = vpack.c.b16 %v4261, %v4254
    %v4654 = vpack.c.b16 %v4262, %v4255
    %v4655 = vpack.c.b16 %v4270, %v4263
    %v4656 = vpack.c.b16 %v4271, %v4264
    %v4657 = vpack.c.b16 %v4272, %v4265
    %v4658 = vpack.c.b16 %v4273, %v4266
    %v4659 = vpack.c.b16 %v4274, %v4267
    %v4660 = vpack.c.b16 %v4275, %v4268
    %v4661 = vpack.c.b16 %v4276, %v4269
    %v4662 = vpack.c.b16 %v4284, %v4277
    %v4663 = vpack.c.b16 %v4285, %v4278
    %v4664 = vpack.c.b16 %v4286, %v4279
    %v4665 = vpack.c.b16 %v4287, %v4280
    %v4666 = vpack.c.b16 %v4288, %v4281
    %v4667 = vpack.c.b16 %v4289, %v4282
    %v4668 = vpack.c.b16 %v4290, %v4283
    %v4669 = vpack.c.b16 %v4298, %v4291
    %v4670 = vpack.c.b16 %v4299, %v4292
    %v4671 = vpack.c.b16 %v4300, %v4293
    %v4672 = vpack.c.b16 %v4301, %v4294
    %v4673 = vpack.c.b16 %v4302, %v4295
    %v4674 = vpack.c.b16 %v4303, %v4296
    %v4675 = vpack.c.b16 %v4304, %v4297
    %v4676 = vpack.c.b16 %v4312, %v4305
    %v4677 = vpack.c.b16 %v4313, %v4306
    %v4678 = vpack.c.b16 %v4314, %v4307
    %v4679 = vpack.c.b16 %v4315, %v4308
    %v4680 = vpack.c.b16 %v4316, %v4309
    %v4681 = vpack.c.b16 %v4317, %v4310
    %v4682 = vpack.c.b16 %v4318, %v4311
    %v4683 = vpack.c.b16 %v4326, %v4319
    %v4684 = vpack.c.b16 %v4327, %v4320
    %v4685 = vpack.c.b16 %v4328, %v4321
    %v4686 = vpack.c.b16 %v4329, %v4322
    %v4687 = vpack.c.b16 %v4330, %v4323
    %v4688 = vpack.c.b16 %v4331, %v4324
    %v4689 = vpack.c.b16 %v4332, %v4325
    %v4690 = vpack.c.b16 %v4340, %v4333
    %v4691 = vpack.c.b16 %v4341, %v4334
    %v4692 = vpack.c.b16 %v4342, %v4335
    %v4693 = vpack.c.b16 %v4343, %v4336
    %v4694 = vpack.c.b16 %v4344, %v4337
    %v4695 = vpack.c.b16 %v4345, %v4338
    %v4696 = vpack.c.b16 %v4346, %v4339
    %v4697 = vpack.c.b16 %v4354, %v4347
    %v4698 = vpack.c.b16 %v4355, %v4348
    %v4699 = vpack.c.b16 %v4356, %v4349
    %v4700 = vpack.c.b16 %v4357, %v4350
    %v4701 = vpack.c.b16 %v4358, %v4351
    %v4702 = vpack.c.b16 %v4359, %v4352
    %v4703 = vpack.c.b16 %v4360, %v4353
    %v4704 = vpack.c.b16 %v4368, %v4361
    %v4705 = vpack.c.b16 %v4369, %v4362
    %v4706 = vpack.c.b16 %v4370, %v4363
    %v4707 = vpack.c.b16 %v4371, %v4364
    %v4708 = vpack.c.b16 %v4372, %v4365
    %v4709 = vpack.c.b16 %v4373, %v4366
    %v4710 = vpack.c.b16 %v4374, %v4367
    %v4711 = vpack.c.b16 %v4382, %v4375
    %v4712 = vpack.c.b16 %v4383, %v4376
    %v4713 = vpack.c.b16 %v4384, %v4377
    %v4714 = vpack.c.b16 %v4385, %v4378
    %v4715 = vpack.c.b16 %v4386, %v4379
    %v4716 = vpack.c.b16 %v4387, %v4380
    %v4717 = vpack.c.b16 %v4388, %v4381
    %v4718 = vpack.c.b16 %v4396, %v4389
    %v4719 = vpack.c.b16 %v4397, %v4390
    %v4720 = vpack.c.b16 %v4398, %v4391
    %v4721 = vpack.c.b16 %v4399, %v4392
    %v4722 = vpack.c.b16 %v4400, %v4393
    %v4723 = vpack.c.b16 %v4401, %v4394
    %v4724 = vpack.c.b16 %v4402, %v4395
    %v4725 = vpack.c.b16 %v4410, %v4403
    %v4726 = vpack.c.b16 %v4411, %v4404
    %v4727 = vpack.c.b16 %v4412, %v4405
    %v4728 = vpack.c.b16 %v4413, %v4406
    %v4729 = vpack.c.b16 %v4414, %v4407
    %v4730 = vpack.c.b16 %v4415, %v4408
    %v4731 = vpack.c.b16 %v4416, %v4409
    %v4732 = vpack.c.b16 %v4424, %v4417
    %v4733 = vpack.c.b16 %v4425, %v4418
    %v4734 = vpack.c.b16 %v4426, %v4419
    %v4735 = vpack.c.b16 %v4427, %v4420
    %v4736 = vpack.c.b16 %v4428, %v4421
    %v4737 = vpack.c.b16 %v4429, %v4422
    %v4738 = vpack.c.b16 %v4430, %v4423
    %v4739 = vpack.c.b16 %v4438, %v4431
    %v4740 = vpack.c.b16 %v4439, %v4432
    %v4741 = vpack.c.b16 %v4440, %v4433
    %v4742 = vpack.c.b16 %v4441, %v4434
    %v4743 = vpack.c.b16 %v4442, %v4435
    %v4744 = vpack.c.b16 %v4443, %v4436
    %v4745 = vpack.c.b16 %v4444, %v4437
    %v4746 = vpack.c.b16 %v4452, %v4445
    %v4747 = vpack.c.b16 %v4453, %v4446
    %v4748 = vpack.c.b16 %v4454, %v4447
    %v4749 = vpack.c.b16 %v4455, %v4448
    %v4750 = vpack.c.b16 %v4456, %v4449
    %v4751 = vpack.c.b16 %v4457, %v4450
    %v4752 = vpack.c.b16 %v4458, %v4451
    %v4753 = vpack.c.b16 %v4466, %v4459
    %v4754 = vpack.c.b16 %v4467, %v4460
    %v4755 = vpack.c.b16 %v4468, %v4461
    %v4756 = vpack.c.b16 %v4469, %v4462
    %v4757 = vpack.c.b16 %v4470, %v4463
    %v4758 = vpack.c.b16 %v4471, %v4464
    %v4759 = vpack.c.b16 %v4472, %v4465
    %v4760 = vpack.c.b16 %v4480, %v4473
    %v4761 = vpack.c.b16 %v4481, %v4474
    %v4762 = vpack.c.b16 %v4482, %v4475
    %v4763 = vpack.c.b16 %v4483, %v4476
    %v4764 = vpack.c.b16 %v4484, %v4477
    %v4765 = vpack.c.b16 %v4485, %v4478
    %v4766 = vpack.c.b16 %v4486, %v4479
    %v4767 = vpack.c.b16 %v4494, %v4487
    %v4768 = vpack.c.b16 %v4495, %v4488
    %v4769 = vpack.c.b16 %v4496, %v4489
    %v4770 = vpack.c.b16 %v4497, %v4490
    %v4771 = vpack.c.b16 %v4498, %v4491
    %v4772 = vpack.c.b16 %v4499, %v4492
    %v4773 = vpack.c.b16 %v4500, %v4493
    %v4774 = vpack.c.b16 %v4508, %v4501
    %v4775 = vpack.c.b16 %v4509, %v4502
    %v4776 = vpack.c.b16 %v4510, %v4503
    %v4777 = vpack.c.b16 %v4511, %v4504
    %v4778 = vpack.c.b16 %v4512, %v4505
    %v4779 = vpack.c.b16 %v4513, %v4506
    %v4780 = vpack.c.b16 %v4514, %v4507
    %v4781 = vpack.c.b16 %v4522, %v4515
    %v4782 = vpack.c.b16 %v4523, %v4516
    %v4783 = vpack.c.b16 %v4524, %v4517
    %v4784 = vpack.c.b16 %v4525, %v4518
    %v4785 = vpack.c.b16 %v4526, %v4519
    %v4786 = vpack.c.b16 %v4527, %v4520
    %v4787 = vpack.c.b16 %v4528, %v4521
    %v4788 = vpack.c.b16 %v4536, %v4529
    %v4789 = vpack.c.b16 %v4537, %v4530
    %v4790 = vpack.c.b16 %v4538, %v4531
    %v4791 = vpack.c.b16 %v4539, %v4532
    %v4792 = vpack.c.b16 %v4540, %v4533
    %v4793 = vpack.c.b16 %v4541, %v4534
    %v4794 = vpack.c.b16 %v4542, %v4535
    %v4795 = vpack.c.b16 %v4550, %v4543
    %v4796 = vpack.c.b16 %v4551, %v4544
    %v4797 = vpack.c.b16 %v4552, %v4545
    %v4798 = vpack.c.b16 %v4553, %v4546
    %v4799 = vpack.c.b16 %v4554, %v4547
    %v4800 = vpack.c.b16 %v4555, %v4548
    %v4801 = vpack.c.b16 %v4556, %v4549
    %v4802 = vpack.c.b16 %v4564, %v4557
    %v4803 = vpack.c.b16 %v4565, %v4558
    %v4804 = vpack.c.b16 %v4566, %v4559
    %v4805 = vpack.c.b16 %v4567, %v4560
    %v4806 = vpack.c.b16 %v4568, %v4561
    %v4807 = vpack.c.b16 %v4569, %v4562
    %v4808 = vpack.c.b16 %v4570, %v4563
    %v4809 = vpack.c.b16 %v4578, %v4571
    %v4810 = vpack.c.b16 %v4579, %v4572
    %v4811 = vpack.c.b16 %v4580, %v4573
    %v4812 = vpack.c.b16 %v4581, %v4574
    %v4813 = vpack.c.b16 %v4582, %v4575
    %v4814 = vpack.c.b16 %v4583, %v4576
    %v4815 = vpack.c.b16 %v4584, %v4577
    %v4816 = vpack.c.b16 %v4592, %v4585
    %v4817 = vpack.c.b16 %v4593, %v4586
    %v4818 = vpack.c.b16 %v4594, %v4587
    %v4819 = vpack.c.b16 %v4595, %v4588
    %v4820 = vpack.c.b16 %v4596, %v4589
    %v4821 = vpack.c.b16 %v4597, %v4590
    %v4822 = vpack.c.b16 %v4598, %v4591
    %5047 = vmatpush.bf16.msra.mxu0 %v4648
    %5048 = vmatpush.bf16.msra.mxu0 %v4641
    %5049 = vmatpush.bf16.msra.mxu0 %v4634
    %5050 = vmatpush.bf16.msra.mxu0 %v4627
    %5051 = vmatpush.bf16.msra.mxu0 %v4620
    %5052 = vmatpush.bf16.msra.mxu0 %v4613
    %5053 = vmatpush.bf16.msra.mxu0 %v4606
    %5054 = vmatpush.bf16.msra.mxu0 %v4599
    %5055 = vmatmul.bf16.gmra.mxu0 %v3619
    %v5056 = vpop.f32.mrf.mxu0
    %v5057 = vadd.f32 %v3881, %v5056
    %v5058 = vpop.f32.mrf.mxu0
    %5059 = vdwg.mxu0
    %5060 = vmatpush.bf16.msra.mxu0 %v4704
    %5061 = vmatpush.bf16.msra.mxu0 %v4697
    %5062 = vmatpush.bf16.msra.mxu0 %v4690
    %5063 = vmatpush.bf16.msra.mxu0 %v4683
    %5064 = vmatpush.bf16.msra.mxu0 %v4676
    %5065 = vmatpush.bf16.msra.mxu0 %v4669
    %5066 = vmatpush.bf16.msra.mxu0 %v4662
    %5067 = vmatpush.bf16.msra.mxu0 %v4655
    %5068 = vmatmul.bf16.gmra.mxu0 %v3620
    %v5069 = vpop.f32.mrf.mxu0
    %v5070 = vadd.f32 %v5057, %v5069
    %v5071 = vpop.f32.mrf.mxu0
    %5072 = vdwg.mxu0
    %5073 = vmatpush.bf16.msra.mxu0 %v4760
    %5074 = vmatpush.bf16.msra.mxu0 %v4753
    %5075 = vmatpush.bf16.msra.mxu0 %v4746
    %5076 = vmatpush.bf16.msra.mxu0 %v4739
    %5077 = vmatpush.bf16.msra.mxu0 %v4732
    %5078 = vmatpush.bf16.msra.mxu0 %v4725
    %5079 = vmatpush.bf16.msra.mxu0 %v4718
    %5080 = vmatpush.bf16.msra.mxu0 %v4711
    %5081 = vmatmul.bf16.gmra.mxu0 %v3621
    %v5082 = vpop.f32.mrf.mxu0
    %v5083 = vadd.f32 %v5070, %v5082
    %v5084 = vpop.f32.mrf.mxu0
    %5085 = vdwg.mxu0
    %5086 = vmatpush.bf16.msra.mxu0 %v4816
    %5087 = vmatpush.bf16.msra.mxu0 %v4809
    %5088 = vmatpush.bf16.msra.mxu0 %v4802
    %5089 = vmatpush.bf16.msra.mxu0 %v4795
    %5090 = vmatpush.bf16.msra.mxu0 %v4788
    %5091 = vmatpush.bf16.msra.mxu0 %v4781
    %5092 = vmatpush.bf16.msra.mxu0 %v4774
    %5093 = vmatpush.bf16.msra.mxu0 %v4767
    %5094 = vmatmul.bf16.gmra.mxu0 %v3622
    %v5095 = vpop.f32.mrf.mxu0
    %v5096 = vadd.f32 %v5083, %v5095
    %v5097 = vpop.f32.mrf.mxu0
    %5098 = vdwg.mxu0
    %5099 = vmatpush.bf16.msra.mxu0 %v4649
    %5100 = vmatpush.bf16.msra.mxu0 %v4642
    %5101 = vmatpush.bf16.msra.mxu0 %v4635
    %5102 = vmatpush.bf16.msra.mxu0 %v4628
    %5103 = vmatpush.bf16.msra.mxu0 %v4621
    %5104 = vmatpush.bf16.msra.mxu0 %v4614
    %5105 = vmatpush.bf16.msra.mxu0 %v4607
    %5106 = vmatpush.bf16.msra.mxu0 %v4600
    %5107 = vmatmul.bf16.gmra.mxu0 %v3619
    %v5108 = vpop.f32.mrf.mxu0
    %v5109 = vadd.f32 %v3882, %v5108
    %v5110 = vpop.f32.mrf.mxu0
    %5111 = vdwg.mxu0
    %5112 = vmatpush.bf16.msra.mxu0 %v4705
    %5113 = vmatpush.bf16.msra.mxu0 %v4698
    %5114 = vmatpush.bf16.msra.mxu0 %v4691
    %5115 = vmatpush.bf16.msra.mxu0 %v4684
    %5116 = vmatpush.bf16.msra.mxu0 %v4677
    %5117 = vmatpush.bf16.msra.mxu0 %v4670
    %5118 = vmatpush.bf16.msra.mxu0 %v4663
    %5119 = vmatpush.bf16.msra.mxu0 %v4656
    %5120 = vmatmul.bf16.gmra.mxu0 %v3620
    %v5121 = vpop.f32.mrf.mxu0
    %v5122 = vadd.f32 %v5109, %v5121
    %v5123 = vpop.f32.mrf.mxu0
    %5124 = vdwg.mxu0
    %5125 = vmatpush.bf16.msra.mxu0 %v4761
    %5126 = vmatpush.bf16.msra.mxu0 %v4754
    %5127 = vmatpush.bf16.msra.mxu0 %v4747
    %5128 = vmatpush.bf16.msra.mxu0 %v4740
    %5129 = vmatpush.bf16.msra.mxu0 %v4733
    %5130 = vmatpush.bf16.msra.mxu0 %v4726
    %5131 = vmatpush.bf16.msra.mxu0 %v4719
    %5132 = vmatpush.bf16.msra.mxu0 %v4712
    %5133 = vmatmul.bf16.gmra.mxu0 %v3621
    %v5134 = vpop.f32.mrf.mxu0
    %v5135 = vadd.f32 %v5122, %v5134
    %v5136 = vpop.f32.mrf.mxu0
    %5137 = vdwg.mxu0
    %5138 = vmatpush.bf16.msra.mxu0 %v4817
    %5139 = vmatpush.bf16.msra.mxu0 %v4810
    %5140 = vmatpush.bf16.msra.mxu0 %v4803
    %5141 = vmatpush.bf16.msra.mxu0 %v4796
    %5142 = vmatpush.bf16.msra.mxu0 %v4789
    %5143 = vmatpush.bf16.msra.mxu0 %v4782
    %5144 = vmatpush.bf16.msra.mxu0 %v4775
    %5145 = vmatpush.bf16.msra.mxu0 %v4768
    %5146 = vmatmul.bf16.gmra.mxu0 %v3622
    %v5147 = vpop.f32.mrf.mxu0
    %v5148 = vadd.f32 %v5135, %v5147
    %v5149 = vpop.f32.mrf.mxu0
    %5150 = vdwg.mxu0
    %5151 = vmatpush.bf16.msra.mxu0 %v4650
    %5152 = vmatpush.bf16.msra.mxu0 %v4643
    %5153 = vmatpush.bf16.msra.mxu0 %v4636
    %5154 = vmatpush.bf16.msra.mxu0 %v4629
    %5155 = vmatpush.bf16.msra.mxu0 %v4622
    %5156 = vmatpush.bf16.msra.mxu0 %v4615
    %5157 = vmatpush.bf16.msra.mxu0 %v4608
    %5158 = vmatpush.bf16.msra.mxu0 %v4601
    %5159 = vmatmul.bf16.gmra.mxu0 %v3619
    %v5160 = vpop.f32.mrf.mxu0
    %v5161 = vadd.f32 %v3883, %v5160
    %v5162 = vpop.f32.mrf.mxu0
    %5163 = vdwg.mxu0
    %5164 = vmatpush.bf16.msra.mxu0 %v4706
    %5165 = vmatpush.bf16.msra.mxu0 %v4699
    %5166 = vmatpush.bf16.msra.mxu0 %v4692
    %5167 = vmatpush.bf16.msra.mxu0 %v4685
    %5168 = vmatpush.bf16.msra.mxu0 %v4678
    %5169 = vmatpush.bf16.msra.mxu0 %v4671
    %5170 = vmatpush.bf16.msra.mxu0 %v4664
    %5171 = vmatpush.bf16.msra.mxu0 %v4657
    %5172 = vmatmul.bf16.gmra.mxu0 %v3620
    %v5173 = vpop.f32.mrf.mxu0
    %v5174 = vadd.f32 %v5161, %v5173
    %v5175 = vpop.f32.mrf.mxu0
    %5176 = vdwg.mxu0
    %5177 = vmatpush.bf16.msra.mxu0 %v4762
    %5178 = vmatpush.bf16.msra.mxu0 %v4755
    %5179 = vmatpush.bf16.msra.mxu0 %v4748
    %5180 = vmatpush.bf16.msra.mxu0 %v4741
    %5181 = vmatpush.bf16.msra.mxu0 %v4734
    %5182 = vmatpush.bf16.msra.mxu0 %v4727
    %5183 = vmatpush.bf16.msra.mxu0 %v4720
    %5184 = vmatpush.bf16.msra.mxu0 %v4713
    %5185 = vmatmul.bf16.gmra.mxu0 %v3621
    %v5186 = vpop.f32.mrf.mxu0
    %v5187 = vadd.f32 %v5174, %v5186
    %v5188 = vpop.f32.mrf.mxu0
    %5189 = vdwg.mxu0
    %5190 = vmatpush.bf16.msra.mxu0 %v4818
    %5191 = vmatpush.bf16.msra.mxu0 %v4811
    %5192 = vmatpush.bf16.msra.mxu0 %v4804
    %5193 = vmatpush.bf16.msra.mxu0 %v4797
    %5194 = vmatpush.bf16.msra.mxu0 %v4790
    %5195 = vmatpush.bf16.msra.mxu0 %v4783
    %5196 = vmatpush.bf16.msra.mxu0 %v4776
    %5197 = vmatpush.bf16.msra.mxu0 %v4769
    %5198 = vmatmul.bf16.gmra.mxu0 %v3622
    %v5199 = vpop.f32.mrf.mxu0
    %v5200 = vadd.f32 %v5187, %v5199
    %v5201 = vpop.f32.mrf.mxu0
    %5202 = vdwg.mxu0
    %5203 = vmatpush.bf16.msra.mxu0 %v4651
    %5204 = vmatpush.bf16.msra.mxu0 %v4644
    %5205 = vmatpush.bf16.msra.mxu0 %v4637
    %5206 = vmatpush.bf16.msra.mxu0 %v4630
    %5207 = vmatpush.bf16.msra.mxu0 %v4623
    %5208 = vmatpush.bf16.msra.mxu0 %v4616
    %5209 = vmatpush.bf16.msra.mxu0 %v4609
    %5210 = vmatpush.bf16.msra.mxu0 %v4602
    %5211 = vmatmul.bf16.gmra.mxu0 %v3619
    %v5212 = vpop.f32.mrf.mxu0
    %v5213 = vadd.f32 %v3884, %v5212
    %v5214 = vpop.f32.mrf.mxu0
    %5215 = vdwg.mxu0
    %5216 = vmatpush.bf16.msra.mxu0 %v4707
    %5217 = vmatpush.bf16.msra.mxu0 %v4700
    %5218 = vmatpush.bf16.msra.mxu0 %v4693
    %5219 = vmatpush.bf16.msra.mxu0 %v4686
    %5220 = vmatpush.bf16.msra.mxu0 %v4679
    %5221 = vmatpush.bf16.msra.mxu0 %v4672
    %5222 = vmatpush.bf16.msra.mxu0 %v4665
    %5223 = vmatpush.bf16.msra.mxu0 %v4658
    %5224 = vmatmul.bf16.gmra.mxu0 %v3620
    %v5225 = vpop.f32.mrf.mxu0
    %v5226 = vadd.f32 %v5213, %v5225
    %v5227 = vpop.f32.mrf.mxu0
    %5228 = vdwg.mxu0
    %5229 = vmatpush.bf16.msra.mxu0 %v4763
    %5230 = vmatpush.bf16.msra.mxu0 %v4756
    %5231 = vmatpush.bf16.msra.mxu0 %v4749
    %5232 = vmatpush.bf16.msra.mxu0 %v4742
    %5233 = vmatpush.bf16.msra.mxu0 %v4735
    %5234 = vmatpush.bf16.msra.mxu0 %v4728
    %5235 = vmatpush.bf16.msra.mxu0 %v4721
    %5236 = vmatpush.bf16.msra.mxu0 %v4714
    %5237 = vmatmul.bf16.gmra.mxu0 %v3621
    %v5238 = vpop.f32.mrf.mxu0
    %v5239 = vadd.f32 %v5226, %v5238
    %v5240 = vpop.f32.mrf.mxu0
    %5241 = vdwg.mxu0
    %5242 = vmatpush.bf16.msra.mxu0 %v4819
    %5243 = vmatpush.bf16.msra.mxu0 %v4812
    %5244 = vmatpush.bf16.msra.mxu0 %v4805
    %5245 = vmatpush.bf16.msra.mxu0 %v4798
    %5246 = vmatpush.bf16.msra.mxu0 %v4791
    %5247 = vmatpush.bf16.msra.mxu0 %v4784
    %5248 = vmatpush.bf16.msra.mxu0 %v4777
    %5249 = vmatpush.bf16.msra.mxu0 %v4770
    %5250 = vmatmul.bf16.gmra.mxu0 %v3622
    %v5251 = vpop.f32.mrf.mxu0
    %v5252 = vadd.f32 %v5239, %v5251
    %v5253 = vpop.f32.mrf.mxu0
    %5254 = vdwg.mxu0
    %5255 = vmatpush.bf16.msra.mxu0 %v4652
    %5256 = vmatpush.bf16.msra.mxu0 %v4645
    %5257 = vmatpush.bf16.msra.mxu0 %v4638
    %5258 = vmatpush.bf16.msra.mxu0 %v4631
    %5259 = vmatpush.bf16.msra.mxu0 %v4624
    %5260 = vmatpush.bf16.msra.mxu0 %v4617
    %5261 = vmatpush.bf16.msra.mxu0 %v4610
    %5262 = vmatpush.bf16.msra.mxu0 %v4603
    %5263 = vmatmul.bf16.gmra.mxu0 %v3619
    %v5264 = vpop.f32.mrf.mxu0
    %v5265 = vadd.f32 %v3885, %v5264
    %v5266 = vpop.f32.mrf.mxu0
    %5267 = vdwg.mxu0
    %5268 = vmatpush.bf16.msra.mxu0 %v4708
    %5269 = vmatpush.bf16.msra.mxu0 %v4701
    %5270 = vmatpush.bf16.msra.mxu0 %v4694
    %5271 = vmatpush.bf16.msra.mxu0 %v4687
    %5272 = vmatpush.bf16.msra.mxu0 %v4680
    %5273 = vmatpush.bf16.msra.mxu0 %v4673
    %5274 = vmatpush.bf16.msra.mxu0 %v4666
    %5275 = vmatpush.bf16.msra.mxu0 %v4659
    %5276 = vmatmul.bf16.gmra.mxu0 %v3620
    %v5277 = vpop.f32.mrf.mxu0
    %v5278 = vadd.f32 %v5265, %v5277
    %v5279 = vpop.f32.mrf.mxu0
    %5280 = vdwg.mxu0
    %5281 = vmatpush.bf16.msra.mxu0 %v4764
    %5282 = vmatpush.bf16.msra.mxu0 %v4757
    %5283 = vmatpush.bf16.msra.mxu0 %v4750
    %5284 = vmatpush.bf16.msra.mxu0 %v4743
    %5285 = vmatpush.bf16.msra.mxu0 %v4736
    %5286 = vmatpush.bf16.msra.mxu0 %v4729
    %5287 = vmatpush.bf16.msra.mxu0 %v4722
    %5288 = vmatpush.bf16.msra.mxu0 %v4715
    %5289 = vmatmul.bf16.gmra.mxu0 %v3621
    %v5290 = vpop.f32.mrf.mxu0
    %v5291 = vadd.f32 %v5278, %v5290
    %v5292 = vpop.f32.mrf.mxu0
    %5293 = vdwg.mxu0
    %5294 = vmatpush.bf16.msra.mxu0 %v4820
    %5295 = vmatpush.bf16.msra.mxu0 %v4813
    %5296 = vmatpush.bf16.msra.mxu0 %v4806
    %5297 = vmatpush.bf16.msra.mxu0 %v4799
    %5298 = vmatpush.bf16.msra.mxu0 %v4792
    %5299 = vmatpush.bf16.msra.mxu0 %v4785
    %5300 = vmatpush.bf16.msra.mxu0 %v4778
    %5301 = vmatpush.bf16.msra.mxu0 %v4771
    %5302 = vmatmul.bf16.gmra.mxu0 %v3622
    %v5303 = vpop.f32.mrf.mxu0
    %v5304 = vadd.f32 %v5291, %v5303
    %v5305 = vpop.f32.mrf.mxu0
    %5306 = vdwg.mxu0
    %5307 = vmatpush.bf16.msra.mxu0 %v4653
    %5308 = vmatpush.bf16.msra.mxu0 %v4646
    %5309 = vmatpush.bf16.msra.mxu0 %v4639
    %5310 = vmatpush.bf16.msra.mxu0 %v4632
    %5311 = vmatpush.bf16.msra.mxu0 %v4625
    %5312 = vmatpush.bf16.msra.mxu0 %v4618
    %5313 = vmatpush.bf16.msra.mxu0 %v4611
    %5314 = vmatpush.bf16.msra.mxu0 %v4604
    %5315 = vmatmul.bf16.gmra.mxu0 %v3619
    %v5316 = vpop.f32.mrf.mxu0
    %v5317 = vadd.f32 %v3886, %v5316
    %v5318 = vpop.f32.mrf.mxu0
    %5319 = vdwg.mxu0
    %5320 = vmatpush.bf16.msra.mxu0 %v4709
    %5321 = vmatpush.bf16.msra.mxu0 %v4702
    %5322 = vmatpush.bf16.msra.mxu0 %v4695
    %5323 = vmatpush.bf16.msra.mxu0 %v4688
    %5324 = vmatpush.bf16.msra.mxu0 %v4681
    %5325 = vmatpush.bf16.msra.mxu0 %v4674
    %5326 = vmatpush.bf16.msra.mxu0 %v4667
    %5327 = vmatpush.bf16.msra.mxu0 %v4660
    %5328 = vmatmul.bf16.gmra.mxu0 %v3620
    %v5329 = vpop.f32.mrf.mxu0
    %v5330 = vadd.f32 %v5317, %v5329
    %v5331 = vpop.f32.mrf.mxu0
    %5332 = vdwg.mxu0
    %5333 = vmatpush.bf16.msra.mxu0 %v4765
    %5334 = vmatpush.bf16.msra.mxu0 %v4758
    %5335 = vmatpush.bf16.msra.mxu0 %v4751
    %5336 = vmatpush.bf16.msra.mxu0 %v4744
    %5337 = vmatpush.bf16.msra.mxu0 %v4737
    %5338 = vmatpush.bf16.msra.mxu0 %v4730
    %5339 = vmatpush.bf16.msra.mxu0 %v4723
    %5340 = vmatpush.bf16.msra.mxu0 %v4716
    %5341 = vmatmul.bf16.gmra.mxu0 %v3621
    %v5342 = vpop.f32.mrf.mxu0
    %v5343 = vadd.f32 %v5330, %v5342
    %v5344 = vpop.f32.mrf.mxu0
    %5345 = vdwg.mxu0
    %5346 = vmatpush.bf16.msra.mxu0 %v4821
    %5347 = vmatpush.bf16.msra.mxu0 %v4814
    %5348 = vmatpush.bf16.msra.mxu0 %v4807
    %5349 = vmatpush.bf16.msra.mxu0 %v4800
    %5350 = vmatpush.bf16.msra.mxu0 %v4793
    %5351 = vmatpush.bf16.msra.mxu0 %v4786
    %5352 = vmatpush.bf16.msra.mxu0 %v4779
    %5353 = vmatpush.bf16.msra.mxu0 %v4772
    %5354 = vmatmul.bf16.gmra.mxu0 %v3622
    %v5355 = vpop.f32.mrf.mxu0
    %v5356 = vadd.f32 %v5343, %v5355
    %v5357 = vpop.f32.mrf.mxu0
    %5358 = vdwg.mxu0
    %5359 = vmatpush.bf16.msra.mxu0 %v4654
    %5360 = vmatpush.bf16.msra.mxu0 %v4647
    %5361 = vmatpush.bf16.msra.mxu0 %v4640
    %5362 = vmatpush.bf16.msra.mxu0 %v4633
    %5363 = vmatpush.bf16.msra.mxu0 %v4626
    %5364 = vmatpush.bf16.msra.mxu0 %v4619
    %5365 = vmatpush.bf16.msra.mxu0 %v4612
    %5366 = vmatpush.bf16.msra.mxu0 %v4605
    %5367 = vmatmul.bf16.gmra.mxu0 %v3619
    %v5368 = vpop.f32.mrf.mxu0
    %v5369 = vadd.f32 %v3887, %v5368
    %v5370 = vpop.f32.mrf.mxu0
    %5371 = vdwg.mxu0
    %5372 = vmatpush.bf16.msra.mxu0 %v4710
    %5373 = vmatpush.bf16.msra.mxu0 %v4703
    %5374 = vmatpush.bf16.msra.mxu0 %v4696
    %5375 = vmatpush.bf16.msra.mxu0 %v4689
    %5376 = vmatpush.bf16.msra.mxu0 %v4682
    %5377 = vmatpush.bf16.msra.mxu0 %v4675
    %5378 = vmatpush.bf16.msra.mxu0 %v4668
    %5379 = vmatpush.bf16.msra.mxu0 %v4661
    %5380 = vmatmul.bf16.gmra.mxu0 %v3620
    %v5381 = vpop.f32.mrf.mxu0
    %v5382 = vadd.f32 %v5369, %v5381
    %v5383 = vpop.f32.mrf.mxu0
    %5384 = vdwg.mxu0
    %5385 = vmatpush.bf16.msra.mxu0 %v4766
    %5386 = vmatpush.bf16.msra.mxu0 %v4759
    %5387 = vmatpush.bf16.msra.mxu0 %v4752
    %5388 = vmatpush.bf16.msra.mxu0 %v4745
    %5389 = vmatpush.bf16.msra.mxu0 %v4738
    %5390 = vmatpush.bf16.msra.mxu0 %v4731
    %5391 = vmatpush.bf16.msra.mxu0 %v4724
    %5392 = vmatpush.bf16.msra.mxu0 %v4717
    %5393 = vmatmul.bf16.gmra.mxu0 %v3621
    %v5394 = vpop.f32.mrf.mxu0
    %v5395 = vadd.f32 %v5382, %v5394
    %v5396 = vpop.f32.mrf.mxu0
    %5397 = vdwg.mxu0
    %5398 = vmatpush.bf16.msra.mxu0 %v4822
    %5399 = vmatpush.bf16.msra.mxu0 %v4815
    %5400 = vmatpush.bf16.msra.mxu0 %v4808
    %5401 = vmatpush.bf16.msra.mxu0 %v4801
    %5402 = vmatpush.bf16.msra.mxu0 %v4794
    %5403 = vmatpush.bf16.msra.mxu0 %v4787
    %5404 = vmatpush.bf16.msra.mxu0 %v4780
    %5405 = vmatpush.bf16.msra.mxu0 %v4773
    %5406 = vmatmul.bf16.gmra.mxu0 %v3622
    %v5407 = vpop.f32.mrf.mxu0
    %v5408 = vadd.f32 %v5395, %v5407
    %v5409 = vpop.f32.mrf.mxu0
    %5410 = vdwg.mxu0
    %v5411 = vxor.u32 %v5096, 2147483648
    %v5412 = vxor.u32 %v5148, 2147483648
    %v5413 = vxor.u32 %v5200, 2147483648
    %v5414 = vxor.u32 %v5252, 2147483648
    %v5415 = vxor.u32 %v5304, 2147483648
    %v5416 = vxor.u32 %v5356, 2147483648
    %v5417 = vxor.u32 %v5408, 2147483648
    %v5418 = vmul.f32 %v5411, 1.442695
    %v5419 = vpow.pop %v5418
    %v5420 = vmul.f32 %v5412, 1.442695
    %v5421 = vpow.pop %v5420
    %v5422 = vmul.f32 %v5413, 1.442695
    %v5423 = vpow.pop %v5422
    %v5424 = vmul.f32 %v5414, 1.442695
    %v5425 = vpow.pop %v5424
    %v5426 = vmul.f32 %v5415, 1.442695
    %v5427 = vpow.pop %v5426
    %v5428 = vmul.f32 %v5416, 1.442695
    %v5429 = vpow.pop %v5428
    %v5430 = vmul.f32 %v5417, 1.442695
    %v5431 = vpow.pop %v5430
    %v5432 = vadd.f32 %v5419, 1.0
    %v5433 = vadd.f32 %v5421, 1.0
    %v5434 = vadd.f32 %v5423, 1.0
    %v5435 = vadd.f32 %v5425, 1.0
    %v5436 = vadd.f32 %v5427, 1.0
    %v5437 = vadd.f32 %v5429, 1.0
    %v5438 = vadd.f32 %v5431, 1.0
    %v5439 = vrcp.pop %v5432
    %v5440 = vmul.f32 %v5432, %v5439
    %v5441 = vsub.f32 1.0, %v5440
    %v5442 = vmul.f32 %v5439, %v5441
    %v5443 = vadd.f32 %v5439, %v5442
    %vm5444 = vweird.f32 %v5432
    %vm5445 = vweird.f32 %v5439
    %vm5446 = vmor %vm5444, %vm5445
    %v5447 = vsel %vm5446, %v5439, %v5443
    %v5448 = vand.u32 2147483647, %v5432
    %vm5449 = vcmp.eq.f32.partialorder %v5448, 8.507059e+37
    %v5450 = vand.u32 %v5432, 2147483648
    %v5451 = vor.u32 1.1754944e-38, %v5450
    %v5452 = vsel %vm5449, %v5451, %v5447
    %v5453 = vmul.f32 1.0, %v5452
    %v5454 = vrcp.pop %v5433
    %v5455 = vmul.f32 %v5433, %v5454
    %v5456 = vsub.f32 1.0, %v5455
    %v5457 = vmul.f32 %v5454, %v5456
    %v5458 = vadd.f32 %v5454, %v5457
    %vm5459 = vweird.f32 %v5433
    %vm5460 = vweird.f32 %v5454
    %vm5461 = vmor %vm5459, %vm5460
    %v5462 = vsel %vm5461, %v5454, %v5458
    %v5463 = vand.u32 2147483647, %v5433
    %vm5464 = vcmp.eq.f32.partialorder %v5463, 8.507059e+37
    %v5465 = vand.u32 %v5433, 2147483648
    %v5466 = vor.u32 1.1754944e-38, %v5465
    %v5467 = vsel %vm5464, %v5466, %v5462
    %v5468 = vmul.f32 1.0, %v5467
    %v5469 = vrcp.pop %v5434
    %v5470 = vmul.f32 %v5434, %v5469
    %v5471 = vsub.f32 1.0, %v5470
    %v5472 = vmul.f32 %v5469, %v5471
    %v5473 = vadd.f32 %v5469, %v5472
    %vm5474 = vweird.f32 %v5434
    %vm5475 = vweird.f32 %v5469
    %vm5476 = vmor %vm5474, %vm5475
    %v5477 = vsel %vm5476, %v5469, %v5473
    %v5478 = vand.u32 2147483647, %v5434
    %vm5479 = vcmp.eq.f32.partialorder %v5478, 8.507059e+37
    %v5480 = vand.u32 %v5434, 2147483648
    %v5481 = vor.u32 1.1754944e-38, %v5480
    %v5482 = vsel %vm5479, %v5481, %v5477
    %v5483 = vmul.f32 1.0, %v5482
    %v5484 = vrcp.pop %v5435
    %v5485 = vmul.f32 %v5435, %v5484
    %v5486 = vsub.f32 1.0, %v5485
    %v5487 = vmul.f32 %v5484, %v5486
    %v5488 = vadd.f32 %v5484, %v5487
    %vm5489 = vweird.f32 %v5435
    %vm5490 = vweird.f32 %v5484
    %vm5491 = vmor %vm5489, %vm5490
    %v5492 = vsel %vm5491, %v5484, %v5488
    %v5493 = vand.u32 2147483647, %v5435
    %vm5494 = vcmp.eq.f32.partialorder %v5493, 8.507059e+37
    %v5495 = vand.u32 %v5435, 2147483648
    %v5496 = vor.u32 1.1754944e-38, %v5495
    %v5497 = vsel %vm5494, %v5496, %v5492
    %v5498 = vmul.f32 1.0, %v5497
    %v5499 = vrcp.pop %v5436
    %v5500 = vmul.f32 %v5436, %v5499
    %v5501 = vsub.f32 1.0, %v5500
    %v5502 = vmul.f32 %v5499, %v5501
    %v5503 = vadd.f32 %v5499, %v5502
    %vm5504 = vweird.f32 %v5436
    %vm5505 = vweird.f32 %v5499
    %vm5506 = vmor %vm5504, %vm5505
    %v5507 = vsel %vm5506, %v5499, %v5503
    %v5508 = vand.u32 2147483647, %v5436
    %vm5509 = vcmp.eq.f32.partialorder %v5508, 8.507059e+37
    %v5510 = vand.u32 %v5436, 2147483648
    %v5511 = vor.u32 1.1754944e-38, %v5510
    %v5512 = vsel %vm5509, %v5511, %v5507
    %v5513 = vmul.f32 1.0, %v5512
    %v5514 = vrcp.pop %v5437
    %v5515 = vmul.f32 %v5437, %v5514
    %v5516 = vsub.f32 1.0, %v5515
    %v5517 = vmul.f32 %v5514, %v5516
    %v5518 = vadd.f32 %v5514, %v5517
    %vm5519 = vweird.f32 %v5437
    %vm5520 = vweird.f32 %v5514
    %vm5521 = vmor %vm5519, %vm5520
    %v5522 = vsel %vm5521, %v5514, %v5518
    %v5523 = vand.u32 2147483647, %v5437
    %vm5524 = vcmp.eq.f32.partialorder %v5523, 8.507059e+37
    %v5525 = vand.u32 %v5437, 2147483648
    %v5526 = vor.u32 1.1754944e-38, %v5525
    %v5527 = vsel %vm5524, %v5526, %v5522
    %v5528 = vmul.f32 1.0, %v5527
    %v5529 = vrcp.pop %v5438
    %v5530 = vmul.f32 %v5438, %v5529
    %v5531 = vsub.f32 1.0, %v5530
    %v5532 = vmul.f32 %v5529, %v5531
    %v5533 = vadd.f32 %v5529, %v5532
    %vm5534 = vweird.f32 %v5438
    %vm5535 = vweird.f32 %v5529
    %vm5536 = vmor %vm5534, %vm5535
    %v5537 = vsel %vm5536, %v5529, %v5533
    %v5538 = vand.u32 2147483647, %v5438
    %vm5539 = vcmp.eq.f32.partialorder %v5538, 8.507059e+37
    %v5540 = vand.u32 %v5438, 2147483648
    %v5541 = vor.u32 1.1754944e-38, %v5540
    %v5542 = vsel %vm5539, %v5541, %v5537
    %v5543 = vmul.f32 1.0, %v5542
    %5544 = vst [vmem:[%s18] sm:$0xff] %v5453
    %5545 = vst [vmem:[%s18 + $0x8] sm:$0xff] %v5468
    %5546 = vst [vmem:[%s18 + $0x10] sm:$0xff] %v5483
    %5547 = vst [vmem:[%s18 + $0x18] sm:$0xff] %v5498
    %5548 = vst [vmem:[%s18 + $0x20] sm:$0xff] %v5513
    %5549 = vst [vmem:[%s18 + $0x28] sm:$0xff] %v5528
    %5550 = vst [vmem:[%s18 + $0x30] sm:$0xff] %v5543
    // Predicated region
    $region114: #{vae_forward.1} parent=1 // pred_check
      _
    $region115: #{vae_forward.1} parent=1 // pred_check_branch
      %5552 = sbr.rel (0) target = $region117
    $region116: #{vae_forward.1} parent=1 // pred_region
      _
    $region117: #{vae_forward.1} parent=1 // pred_fallthru
      _
    // Predicated region
    $region118: #{vae_forward.1} parent=1 // pred_check
      _
    $region119: #{vae_forward.1} parent=1 // pred_check_branch
      %5554 = sbr.rel (0) target = $region121
    $region120: #{vae_forward.1} parent=1 // pred_region
      %5556 = vsyncadd [#allocation4], 0
      %s5558 = sshll.u32 [#allocation19], 4
      %s5559 = int_to_ptr.vmem [resolvable:$true] %s5558
      %s5560 = sshll.u32 %s19, 4
      %s5561 = int_to_ptr.hbm [resolvable:$true] %s5560
      %5563 = dma.vmem_to_hbm [thread:$0]  %s5559, 128, %s5561, [#allocation4]
    $region121: #{vae_forward.1} parent=1 // pred_fallthru
      _
    // Predicated region
    $region122: #{vae_forward.1} parent=1 // pred_check
      _
    $region123: #{vae_forward.1} parent=1 // pred_check_branch
      %5565 = sbr.rel (0) target = $region125
    $region124: #{vae_forward.1} parent=1 // pred_region
      %5567 = vsyncadd [#allocation21], 0
      %s5569 = sshll.u32 [#allocation20], 4
      %s5570 = int_to_ptr.vmem [resolvable:$true] %s5569
      %s5571 = sshll.u32 %s20, 4
      %s5572 = int_to_ptr.hbm [resolvable:$true] %s5571
      %5574 = dma.vmem_to_hbm [thread:$0]  %s5570, 128, %s5572, [#allocation21]
    $region125: #{vae_forward.1} parent=1 // pred_fallthru
      _
    // Predicated region
    $region126: #{vae_forward.1} parent=1 // pred_check
      _
    $region127: #{vae_forward.1} parent=1 // pred_check_branch
      %5576 = sbr.rel (0) target = $region129
    $region128: #{vae_forward.1} parent=1 // pred_region
      _
    $region129: #{vae_forward.1} parent=1 // pred_fallthru
      _
    // Predicated region
    $region130: #{vae_forward.1} parent=1 // pred_check
      _
    $region131: #{vae_forward.1} parent=1 // pred_check_branch
      %5578 = sbr.rel (0) target = $region133
    $region132: #{vae_forward.1} parent=1 // pred_region
      %5580 = dma.done [#allocation4], 128
    $region133: #{vae_forward.1} parent=1 // pred_fallthru
      _
    // Predicated region
    $region134: #{vae_forward.1} parent=1 // pred_check
      _
    $region135: #{vae_forward.1} parent=1 // pred_check_branch
      %5582 = sbr.rel (0) target = $region137
    $region136: #{vae_forward.1} parent=1 // pred_region
      %5584 = dma.done [#allocation21], 128
    $region137: #{vae_forward.1} parent=1 // pred_fallthru
      _
    %5585 = vsyncpa [#allocation3], 1
    %5586 = vsyncpa [#allocation6], 1
    %5587 = vsyncpa [#allocation9], 1
    %5588 = vsyncpa [#allocation12], 1
    %5589 = vsyncpa [#allocation15], 1
    %5590 = vsyncpa [#allocation18], 1
    %5591 = vsyncpa [#allocation4], 1
    %5592 = vsyncpa [#allocation21], 1

</llo_original>
